<compile_context>
chip_gen: v7x
topology: tpu7x:2x2x1
jax: 0.10.0
libtpu: 0.0.40
codegen_flags: <defaults>
</compile_context>

<pallas_src>
import functools

import numpy as np
import jax
import jax.numpy as jnp
from jax.experimental import pallas as pl
from jax.experimental.pallas import tpu as pltpu

BN_EPS = 1e-5
MATMUL_DTYPE = jnp.bfloat16   # MXU inputs; accumulation stays f32 inside the kernel


# ----------------------------------------------------------------------------
# Single fused Pallas kernel: the whole VAE forward pass
# ----------------------------------------------------------------------------
def _vae_forward_kernel(*refs, n_enc, n_dec):
    it = iter(refs)

    def take(k):
        return [next(it) for _ in range(k)]

    x_ref, eps_ref = take(2)
    enc = [take(6) for _ in range(n_enc)]                    # w, b, gamma, beta, sel, bc
    wmu_ref, bmu_ref, wlv_ref, blv_ref, wd_ref, bd_ref = take(6)
    dec = [take(6) for _ in range(n_dec)]                    # w, b, gamma, beta, sel, bc
    wf_ref, bf_ref = take(2)
    recon_ref, mu_ref, lv_ref = take(3)

    def dense(a, w_ref, b_ref):
        # bf16 MXU inputs, f32 accumulation, f32 bias add.
        w = w_ref[...]
        return jnp.dot(a.astype(w.dtype), w,
                       preferred_element_type=jnp.float32) + b_ref[...]

    def relu_bn(a, g_ref, be_ref, sel_ref, bc_ref):
        # Matches nn.Sequential(Conv*, ReLU, BatchNorm2d): ReLU FIRST, then
        # training-mode BatchNorm (per-channel batch stats, biased variance).
        a = jnp.maximum(a, 0.0)
        sel = sel_ref[...]            # (OH*OW*C, C) 0/1 per-channel gather  (MXU)
        bc = bc_ref[...]              # (C, OH*OW*C) per-channel broadcast   (MXU)
        inv = 1.0 / (a.shape[0] * (a.shape[1] // sel.shape[1]))   # 1 / (N*OH*OW)
        mean_c = jnp.dot(jnp.sum(a, axis=0, keepdims=True), sel,
                         preferred_element_type=jnp.float32) * inv
        cen = a - jnp.dot(mean_c, bc, preferred_element_type=jnp.float32)
        var_c = jnp.dot(jnp.sum(cen * cen, axis=0, keepdims=True), sel,
                        preferred_element_type=jnp.float32) * inv
        scale_c = g_ref[...] * jax.lax.rsqrt(var_c + BN_EPS)
        return (cen * jnp.dot(scale_c, bc, preferred_element_type=jnp.float32)
                + jnp.dot(be_ref[...], bc, preferred_element_type=jnp.float32))
        # TODO(synk): running_mean / running_var buffer updates (training-mode
        # side effect of nn.BatchNorm2d) are not materialized here.

    # ---- encode ----
    h = x_ref[...]
    for w_r, b_r, g_r, be_r, sel_r, bc_r in enc:
        h = relu_bn(dense(h, w_r, b_r), g_r, be_r, sel_r, bc_r)

    mu = dense(h, wmu_ref, bmu_ref)
    log_var = dense(h, wlv_ref, blv_ref)

    # ---- reparameterize (epsilon supplied as a deterministic input) ----
    z = eps_ref[...] * jnp.exp(0.5 * log_var) + mu

    # ---- decode ----
    d = dense(z, wd_ref, bd_ref)
    for w_r, b_r, g_r, be_r, sel_r, bc_r in dec:
        d = relu_bn(dense(d, w_r, b_r), g_r, be_r, sel_r, bc_r)
    recon = dense(d, wf_ref, bf_ref)                # final ConvTranspose: no ReLU/BN

    recon_ref[...] = recon
    mu_ref[...] = mu
    lv_ref[...] = log_var


def _full_spec(shape):
    # Full-array VMEM block (block_shape == array shape, so the (8,128)
    # divisibility rule is satisfied trivially).
    return pl.BlockSpec(shape, lambda *_: (0,) * len(shape))


def mel_spec_vae_forward(packed, x, eps):
    arrays, meta = packed["arrays"], packed["meta"]
    n = x.shape[0]
    H, W = meta["input_hw"]
    latent = meta["latent_dim"]

    # Cin == 1, so NCHW flatten == (h, w, c) flatten.
    x_flat = x.reshape(n, H * W).astype(jnp.float32)
    inputs = [x_flat, eps.astype(jnp.float32)] + list(arrays)

    out_shape = (
        jax.ShapeDtypeStruct((n, H * W), jnp.float32),   # reconstruction, lane-dense
        jax.ShapeDtypeStruct((n, latent), jnp.float32),  # mu
        jax.ShapeDtypeStruct((n, latent), jnp.float32),  # log_var
    )

    kernel = functools.partial(_vae_forward_kernel,
                               n_enc=meta["n_enc"], n_dec=meta["n_dec"])

    recon_flat, mu, log_var = pl.pallas_call(
        kernel,
        out_shape=out_shape,
        grid=(1,),   # whole model in one program; tile batch/spatial only at scale
        in_specs=[_full_spec(a.shape) for a in inputs],
        out_specs=tuple(_full_spec(s.shape) for s in out_shape),
        compiler_params=pltpu.CompilerParams(dimension_semantics=("arbitrary",)),
    )(*inputs)

    recon = recon_flat.reshape(n, 1, H, W)           # Cout == 1
    return recon, x, mu, log_var
    # TODO(synk): loss_function (MSE + KLD) is not part of forward(); omitted.


# ----------------------------------------------------------------------------
# Host-side lowering of conv / deconv / linear layers to dense matrices
# ----------------------------------------------------------------------------
def _dense_conv2d(w, in_hw, stride, padding):
    """nn.Conv2d as a dense (H*W*Cin, OH*OW*Cout) matrix on (h,w,c)-flattened data."""
    w = np.asarray(w, np.float32)
    cout, cin, kh, kw = w.shape
    H, W = in_hw
    OH = (H + 2 * padding - kh) // stride + 1
    OW = (W + 2 * padding - kw) // stride + 1
    m = np.zeros((H * W * cin, OH * OW * cout), np.float32)
    for oy in range(OH):
        for ox in range(OW):
            o = (oy * OW + ox) * cout
            for ky in range(kh):
                iy = oy * stride + ky - padding
                if not (0 <= iy < H):
                    continue
                for kx in range(kw):
                    ix = ox * stride + kx - padding
                    if not (0 <= ix < W):
                        continue
                    i = (iy * W + ix) * cin
                    m[i:i + cin, o:o + cout] += w[:, :, ky, kx].T
    return m, (OH, OW)


def _dense_conv_transpose2d(w, in_hw, stride, padding, output_padding):
    """nn.ConvTranspose2d as a dense (H*W*Cin, OH*OW*Cout) matrix."""
    w = np.asarray(w, np.float32)
    cin, cout, kh, kw = w.shape
    H, W = in_hw
    OH = (H - 1) * stride - 2 * padding + kh + output_padding
    OW = (W - 1) * stride - 2 * padding + kw + output_padding
    m = np.zeros((H * W * cin, OH * OW * cout), np.float32)
    for iy in range(H):
        for ix in range(W):
            i = (iy * W + ix) * cin
            for ky in range(kh):
                oy = iy * stride + ky - padding
                if not (0 <= oy < OH):
                    continue
                for kx in range(kw):
                    ox = ix * stride + kx - padding
                    if not (0 <= ox < OW):
                        continue
                    o = (oy * OW + ox) * cout
                    m[i:i + cin, o:o + cout] += w[:, :, ky, kx]
    return m, (OH, OW)


def _chw_to_hwc_perm(C, H, W):
    p = np.empty(H * W * C, np.int64)
    j = 0
    for h in range(H):
        for w in range(W):
            for c in range(C):
                p[j] = c * H * W + h * W + w
                j += 1
    return p


def _tile_channels(v, n_pos):
    return np.tile(np.asarray(v, np.float32), n_pos).reshape(1, -1)


# ----------------------------------------------------------------------------
# Parameter construction (PyTorch conventions) + packing for the fused kernel
# ----------------------------------------------------------------------------
HPARAMS = dict(
    input_shape=(16, 16),
    conv_filters=[8, 16],
    conv_kernels=[3, 3],
    conv_strides=[2, 2],
    conv_padding=[1, 1],
    deconv_padding=[1, 1],
    deconv_out_padding=[1, 1],
    latent_dim=8,
)


def _rand(key, shape, scale=0.1):
    return scale * jax.random.normal(key, shape, jnp.float32)


def init_params(key, hp):
    """Synthetic parameters laid out exactly like the PyTorch module's."""
    filters, kernels = hp["conv_filters"], hp["conv_kernels"]
    strides, paddings = hp["conv_strides"], hp["conv_padding"]
    d_pad, d_opad = hp["deconv_padding"], hp["deconv_out_padding"]
    latent = hp["latent_dim"]

    pool = int(np.prod(strides))
    before = (hp["input_shape"][0] // pool, hp["input_shape"][1] // pool)
    last_filter = filters[-1]
    flat_dim = last_filter * before[0] * before[1]

    keys = iter(jax.random.split(key, 64))
    p = {"before_latent": before, "last_filter": last_filter}

    enc = []
    cin = 1
    for f, k, s, pd in zip(filters, kernels, strides, paddings):
        enc.append(dict(w=_rand(next(keys), (f, cin, k, k)),        # Conv2d weight
                        b=_rand(next(keys), (f,)),
                        gamma=1.0 + _rand(next(keys), (f,), 0.05),
                        beta=_rand(next(keys), (f,), 0.05),
                        stride=s, padding=pd))
        cin = f
    p["encoder"] = enc

    # Linear weights stored transposed as (in, out); their flat index follows
    # torch.flatten's (c, h, w) ordering of the conv feature map.
    p["fc_mu"] = (_rand(next(keys), (flat_dim, latent)), _rand(next(keys), (latent,)))
    p["fc_var"] = (_rand(next(keys), (flat_dim, latent)), _rand(next(keys), (latent,)))
    p["dec_in"] = (_rand(next(keys), (latent, flat_dim)), _rand(next(keys), (flat_dim,)))

    dec = []
    for i in reversed(range(1, len(filters))):
        dec.append(dict(w=_rand(next(keys), (filters[i], filters[i - 1],
                                             kernels[i], kernels[i])),  # ConvT weight
                        b=_rand(next(keys), (filters[i - 1],)),
                        gamma=1.0 + _rand(next(keys), (filters[i - 1],), 0.05),
                        beta=_rand(next(keys), (filters[i - 1],), 0.05),
                        stride=strides[i], padding=d_pad[i], out_padding=d_opad[i]))
    p["decoder"] = dec

    p["final"] = dict(w=_rand(next(keys), (filters[0], 1, kernels[0], kernels[0])),
                      b=_rand(next(keys), (1,)),
                      stride=strides[0], padding=d_pad[0], out_padding=d_opad[0])
    return p


def pack_params(p, hp):
    """Lower torch-convention params into the fused kernel's dense operands."""
    H, W = hp["input_shape"]
    arrays = []

    def add_block(dense_m, bias, n_pos, cout, gamma=None, beta=None, with_bn=True):
        arrays.append(jnp.asarray(dense_m, MATMUL_DTYPE))
        arrays.append(jnp.asarray(_tile_channels(bias, n_pos)))       # (1, n_pos*C) f32
        if with_bn:
            sel = np.tile(np.eye(cout, dtype=np.float32), (n_pos, 1))  # (n_pos*C, C)
            arrays.append(jnp.asarray(np.asarray(gamma, np.float32).reshape(1, cout)))
            arrays.append(jnp.asarray(np.asarray(beta, np.float32).reshape(1, cout)))
            arrays.append(jnp.asarray(sel))
            arrays.append(jnp.asarray(np.ascontiguousarray(sel.T)))

    # encoder conv blocks
    hw = (H, W)
    for layer in p["encoder"]:
        m, hw = _dense_conv2d(layer["w"], hw, layer["stride"], layer["padding"])
        add_block(m, layer["b"], hw[0] * hw[1], int(layer["w"].shape[0]),
                  layer["gamma"], layer["beta"])

    # fold torch's (c,h,w) flatten order into fc_mu / fc_var / decoder_input
    c_last = int(p["last_filter"])
    perm = _chw_to_hwc_perm(c_last, hw[0], hw[1])

    wmu, bmu = p["fc_mu"]
    wlv, blv = p["fc_var"]
    arrays.append(jnp.asarray(np.asarray(wmu, np.float32)[perm], MATMUL_DTYPE))
    arrays.append(jnp.asarray(np.asarray(bmu, np.float32).reshape(1, -1)))
    arrays.append(jnp.asarray(np.asarray(wlv, np.float32)[perm], MATMUL_DTYPE))
    arrays.append(jnp.asarray(np.asarray(blv, np.float32).reshape(1, -1)))

    wd, bd = p["dec_in"]
    arrays.append(jnp.asarray(np.asarray(wd, np.float32)[:, perm], MATMUL_DTYPE))
    arrays.append(jnp.asarray(np.asarray(bd, np.float32)[perm].reshape(1, -1)))

    # decoder conv-transpose blocks
    for layer in p["decoder"]:
        m, hw = _dense_conv_transpose2d(layer["w"], hw, layer["stride"],
                                        layer["padding"], layer["out_padding"])
        add_block(m, layer["b"], hw[0] * hw[1], int(layer["w"].shape[1]),
                  layer["gamma"], layer["beta"])

    # final conv-transpose (no ReLU / BN)
    fin = p["final"]
    m, hw = _dense_conv_transpose2d(fin["w"], hw, fin["stride"],
                                    fin["padding"], fin["out_padding"])
    add_block(m, fin["b"], hw[0] * hw[1], int(fin["w"].shape[1]), with_bn=False)

    assert hw == (H, W), hw   # decoder must reconstruct the input resolution

    meta = dict(n_enc=len(p["encoder"]), n_dec=len(p["decoder"]),
                input_hw=(H, W), latent_dim=hp["latent_dim"])
    return dict(arrays=arrays, meta=meta)


if __name__ == "__main__":
    key = jax.random.PRNGKey(0)
    k_param, k_x, k_eps = jax.random.split(key, 3)

    raw_params = init_params(k_param, HPARAMS)
    packed = pack_params(raw_params, HPARAMS)

    x = jax.random.normal(k_x, (2, 1, 16, 16), jnp.float32)              # NCHW mel
    # TODO(synk): torch uses randn_like inside reparameterize; epsilon is a
    # deterministic explicit input here.
    eps = jax.random.normal(k_eps, (2, HPARAMS["latent_dim"]), jnp.float32)

    recon, x_out, mu, log_var = mel_spec_vae_forward(packed, x, eps)
    jax.block_until_ready((recon, x_out, mu, log_var))

    assert recon.shape == (2, 1, 16, 16), recon.shape
    assert x_out.shape == x.shape
    assert mu.shape == (2, HPARAMS["latent_dim"]), mu.shape
    assert log_var.shape == (2, HPARAMS["latent_dim"]), log_var.shape
    assert bool(jnp.all(jnp.isfinite(recon)))
    assert bool(jnp.all(jnp.isfinite(mu))) and bool(jnp.all(jnp.isfinite(log_var)))
    print("KERNEL_OK")
</pallas_src>

<mosaic_0001>
module attributes {stable_mosaic.version = 11 : i64} {
  func.func @_vae_forward_kernel(%arg0: i32, %arg1: memref<2x256xf32, #tpu.memory_space<vmem>>, %arg2: memref<2x8xf32, #tpu.memory_space<vmem>>, %arg3: memref<256x512xbf16, #tpu.memory_space<vmem>>, %arg4: memref<1x512xf32, #tpu.memory_space<vmem>>, %arg5: memref<1x8xf32, #tpu.memory_space<vmem>>, %arg6: memref<1x8xf32, #tpu.memory_space<vmem>>, %arg7: memref<512x8xf32, #tpu.memory_space<vmem>>, %arg8: memref<8x512xf32, #tpu.memory_space<vmem>>, %arg9: memref<512x256xbf16, #tpu.memory_space<vmem>>, %arg10: memref<1x256xf32, #tpu.memory_space<vmem>>, %arg11: memref<1x16xf32, #tpu.memory_space<vmem>>, %arg12: memref<1x16xf32, #tpu.memory_space<vmem>>, %arg13: memref<256x16xf32, #tpu.memory_space<vmem>>, %arg14: memref<16x256xf32, #tpu.memory_space<vmem>>, %arg15: memref<256x8xbf16, #tpu.memory_space<vmem>>, %arg16: memref<1x8xf32, #tpu.memory_space<vmem>>, %arg17: memref<256x8xbf16, #tpu.memory_space<vmem>>, %arg18: memref<1x8xf32, #tpu.memory_space<vmem>>, %arg19: memref<8x256xbf16, #tpu.memory_space<vmem>>, %arg20: memref<1x256xf32, #tpu.memory_space<vmem>>, %arg21: memref<256x512xbf16, #tpu.memory_space<vmem>>, %arg22: memref<1x512xf32, #tpu.memory_space<vmem>>, %arg23: memref<1x8xf32, #tpu.memory_space<vmem>>, %arg24: memref<1x8xf32, #tpu.memory_space<vmem>>, %arg25: memref<512x8xf32, #tpu.memory_space<vmem>>, %arg26: memref<8x512xf32, #tpu.memory_space<vmem>>, %arg27: memref<512x256xbf16, #tpu.memory_space<vmem>>, %arg28: memref<1x256xf32, #tpu.memory_space<vmem>>, %arg29: memref<2x256xf32, #tpu.memory_space<vmem>>, %arg30: memref<2x8xf32, #tpu.memory_space<vmem>>, %arg31: memref<2x8xf32, #tpu.memory_space<vmem>>) attributes {dimension_semantics = [#tpu.dimension_semantics<arbitrary>], iteration_bounds = array<i64: 1>, scalar_prefetch = 0 : i64, scratch_operands = 0 : i64, tpu.core_type = #tpu.core_type<tc>, window_params = [{pipeline_mode = #tpu.pipeline_mode<synchronous>, transform_indices = @transform_0, window_bounds = array<i64: 2, 256>}, {pipeline_mode = #tpu.pipeline_mode<synchronous>, transform_indices = @transform_1, window_bounds = array<i64: 2, 8>}, {pipeline_mode = #tpu.pipeline_mode<synchronous>, transform_indices = @transform_2, window_bounds = array<i64: 256, 512>}, {pipeline_mode = #tpu.pipeline_mode<synchronous>, transform_indices = @transform_3, window_bounds = array<i64: 1, 512>}, {pipeline_mode = #tpu.pipeline_mode<synchronous>, transform_indices = @transform_4, window_bounds = array<i64: 1, 8>}, {pipeline_mode = #tpu.pipeline_mode<synchronous>, transform_indices = @transform_5, window_bounds = array<i64: 1, 8>}, {pipeline_mode = #tpu.pipeline_mode<synchronous>, transform_indices = @transform_6, window_bounds = array<i64: 512, 8>}, {pipeline_mode = #tpu.pipeline_mode<synchronous>, transform_indices = @transform_7, window_bounds = array<i64: 8, 512>}, {pipeline_mode = #tpu.pipeline_mode<synchronous>, transform_indices = @transform_8, window_bounds = array<i64: 512, 256>}, {pipeline_mode = #tpu.pipeline_mode<synchronous>, transform_indices = @transform_9, window_bounds = array<i64: 1, 256>}, {pipeline_mode = #tpu.pipeline_mode<synchronous>, transform_indices = @transform_10, window_bounds = array<i64: 1, 16>}, {pipeline_mode = #tpu.pipeline_mode<synchronous>, transform_indices = @transform_11, window_bounds = array<i64: 1, 16>}, {pipeline_mode = #tpu.pipeline_mode<synchronous>, transform_indices = @transform_12, window_bounds = array<i64: 256, 16>}, {pipeline_mode = #tpu.pipeline_mode<synchronous>, transform_indices = @transform_13, window_bounds = array<i64: 16, 256>}, {pipeline_mode = #tpu.pipeline_mode<synchronous>, transform_indices = @transform_14, window_bounds = array<i64: 256, 8>}, {pipeline_mode = #tpu.pipeline_mode<synchronous>, transform_indices = @transform_15, window_bounds = array<i64: 1, 8>}, {pipeline_mode = #tpu.pipeline_mode<synchronous>, transform_indices = @transform_16, window_bounds = array<i64: 256, 8>}, {pipeline_mode = #tpu.pipeline_mode<synchronous>, transform_indices = @transform_17, window_bounds = array<i64: 1, 8>}, {pipeline_mode = #tpu.pipeline_mode<synchronous>, transform_indices = @transform_18, window_bounds = array<i64: 8, 256>}, {pipeline_mode = #tpu.pipeline_mode<synchronous>, transform_indices = @transform_19, window_bounds = array<i64: 1, 256>}, {pipeline_mode = #tpu.pipeline_mode<synchronous>, transform_indices = @transform_20, window_bounds = array<i64: 256, 512>}, {pipeline_mode = #tpu.pipeline_mode<synchronous>, transform_indices = @transform_21, window_bounds = array<i64: 1, 512>}, {pipeline_mode = #tpu.pipeline_mode<synchronous>, transform_indices = @transform_22, window_bounds = array<i64: 1, 8>}, {pipeline_mode = #tpu.pipeline_mode<synchronous>, transform_indices = @transform_23, window_bounds = array<i64: 1, 8>}, {pipeline_mode = #tpu.pipeline_mode<synchronous>, transform_indices = @transform_24, window_bounds = array<i64: 512, 8>}, {pipeline_mode = #tpu.pipeline_mode<synchronous>, transform_indices = @transform_25, window_bounds = array<i64: 8, 512>}, {pipeline_mode = #tpu.pipeline_mode<synchronous>, transform_indices = @transform_26, window_bounds = array<i64: 512, 256>}, {pipeline_mode = #tpu.pipeline_mode<synchronous>, transform_indices = @transform_27, window_bounds = array<i64: 1, 256>}, {pipeline_mode = #tpu.pipeline_mode<synchronous>, transform_indices = @transform_28, window_bounds = array<i64: 2, 256>}, {pipeline_mode = #tpu.pipeline_mode<synchronous>, transform_indices = @transform_29, window_bounds = array<i64: 2, 8>}, {pipeline_mode = #tpu.pipeline_mode<synchronous>, transform_indices = @transform_30, window_bounds = array<i64: 2, 8>}]} {
    %c0 = arith.constant 0 : index
    %c0_0 = arith.constant 0 : index
    %0 = vector.load %arg1[%c0, %c0_0] : memref<2x256xf32, #tpu.memory_space<vmem>>, vector<2x256xf32>
    %c0_1 = arith.constant 0 : index
    %c0_2 = arith.constant 0 : index
    %1 = vector.load %arg3[%c0_1, %c0_2] : memref<256x512xbf16, #tpu.memory_space<vmem>>, vector<256x512xbf16>
    %2 = arith.truncf %0 : vector<2x256xf32> to vector<2x256xbf16>
    %cst = arith.constant dense<0.000000e+00> : vector<2x512xf32>
    %3 = tpu.matmul %2, %1, %cst {dimension_numbers = #tpu.dot_dimension_numbers<[1], [0], [0], [1], [0, 0, 1, 1], [], []>} : vector<2x256xbf16>, vector<256x512xbf16>, vector<2x512xf32> -> vector<2x512xf32>
    %c0_3 = arith.constant 0 : index
    %c0_4 = arith.constant 0 : index
    %4 = vector.load %arg4[%c0_3, %c0_4] : memref<1x512xf32, #tpu.memory_space<vmem>>, vector<1x512xf32>
    %5 = vector.broadcast %4 : vector<1x512xf32> to vector<2x512xf32>
    %6 = arith.addf %3, %5 : vector<2x512xf32>
    %cst_5 = arith.constant 0.000000e+00 : f32
    %7 = vector.broadcast %cst_5 : f32 to vector<2x512xf32>
    %8 = arith.maximumf %6, %7 : vector<2x512xf32>
    %c0_6 = arith.constant 0 : index
    %c0_7 = arith.constant 0 : index
    %9 = vector.load %arg7[%c0_6, %c0_7] : memref<512x8xf32, #tpu.memory_space<vmem>>, vector<512x8xf32>
    %c0_8 = arith.constant 0 : index
    %c0_9 = arith.constant 0 : index
    %10 = vector.load %arg8[%c0_8, %c0_9] : memref<8x512xf32, #tpu.memory_space<vmem>>, vector<8x512xf32>
    %cst_10 = arith.constant dense<0.000000e+00> : vector<512xf32>
    %11 = vector.multi_reduction <add>, %8, %cst_10 [0] : vector<2x512xf32> to vector<512xf32>
    %12 = vector.shape_cast %11 : vector<512xf32> to vector<1x512xf32>
    %cst_11 = arith.constant dense<0.000000e+00> : vector<1x8xf32>
    %13 = tpu.matmul %12, %9, %cst_11 {dimension_numbers = #tpu.dot_dimension_numbers<[1], [0], [0], [1], [0, 0, 1, 1], [], []>} : vector<1x512xf32>, vector<512x8xf32>, vector<1x8xf32> -> vector<1x8xf32>
    %cst_12 = arith.constant 7.812500e-03 : f32
    %14 = vector.broadcast %cst_12 : f32 to vector<1x8xf32>
    %15 = arith.mulf %13, %14 : vector<1x8xf32>
    %cst_13 = arith.constant dense<0.000000e+00> : vector<1x512xf32>
    %16 = tpu.matmul %15, %10, %cst_13 {dimension_numbers = #tpu.dot_dimension_numbers<[1], [0], [0], [1], [0, 0, 1, 1], [], []>} : vector<1x8xf32>, vector<8x512xf32>, vector<1x512xf32> -> vector<1x512xf32>
    %17 = vector.broadcast %16 : vector<1x512xf32> to vector<2x512xf32>
    %18 = arith.subf %8, %17 : vector<2x512xf32>
    %19 = arith.mulf %18, %18 : vector<2x512xf32>
    %cst_14 = arith.constant dense<0.000000e+00> : vector<512xf32>
    %20 = vector.multi_reduction <add>, %19, %cst_14 [0] : vector<2x512xf32> to vector<512xf32>
    %21 = vector.shape_cast %20 : vector<512xf32> to vector<1x512xf32>
    %cst_15 = arith.constant dense<0.000000e+00> : vector<1x8xf32>
    %22 = tpu.matmul %21, %9, %cst_15 {dimension_numbers = #tpu.dot_dimension_numbers<[1], [0], [0], [1], [0, 0, 1, 1], [], []>} : vector<1x512xf32>, vector<512x8xf32>, vector<1x8xf32> -> vector<1x8xf32>
    %cst_16 = arith.constant 7.812500e-03 : f32
    %23 = vector.broadcast %cst_16 : f32 to vector<1x8xf32>
    %24 = arith.mulf %22, %23 : vector<1x8xf32>
    %c0_17 = arith.constant 0 : index
    %c0_18 = arith.constant 0 : index
    %25 = vector.load %arg5[%c0_17, %c0_18] : memref<1x8xf32, #tpu.memory_space<vmem>>, vector<1x8xf32>
    %cst_19 = arith.constant 9.99999974E-6 : f32
    %26 = vector.broadcast %cst_19 : f32 to vector<1x8xf32>
    %27 = arith.addf %24, %26 : vector<1x8xf32>
    %28 = math.rsqrt %27 : vector<1x8xf32>
    %29 = arith.mulf %25, %28 : vector<1x8xf32>
    %cst_20 = arith.constant dense<0.000000e+00> : vector<1x512xf32>
    %30 = tpu.matmul %29, %10, %cst_20 {dimension_numbers = #tpu.dot_dimension_numbers<[1], [0], [0], [1], [0, 0, 1, 1], [], []>} : vector<1x8xf32>, vector<8x512xf32>, vector<1x512xf32> -> vector<1x512xf32>
    %31 = vector.broadcast %30 : vector<1x512xf32> to vector<2x512xf32>
    %32 = arith.mulf %18, %31 : vector<2x512xf32>
    %c0_21 = arith.constant 0 : index
    %c0_22 = arith.constant 0 : index
    %33 = vector.load %arg6[%c0_21, %c0_22] : memref<1x8xf32, #tpu.memory_space<vmem>>, vector<1x8xf32>
    %cst_23 = arith.constant dense<0.000000e+00> : vector<1x512xf32>
    %34 = tpu.matmul %33, %10, %cst_23 {dimension_numbers = #tpu.dot_dimension_numbers<[1], [0], [0], [1], [0, 0, 1, 1], [], []>} : vector<1x8xf32>, vector<8x512xf32>, vector<1x512xf32> -> vector<1x512xf32>
    %35 = vector.broadcast %34 : vector<1x512xf32> to vector<2x512xf32>
    %36 = arith.addf %32, %35 : vector<2x512xf32>
    %c0_24 = arith.constant 0 : index
    %c0_25 = arith.constant 0 : index
    %37 = vector.load %arg9[%c0_24, %c0_25] : memref<512x256xbf16, #tpu.memory_space<vmem>>, vector<512x256xbf16>
    %38 = arith.truncf %36 : vector<2x512xf32> to vector<2x512xbf16>
    %cst_26 = arith.constant dense<0.000000e+00> : vector<2x256xf32>
    %39 = tpu.matmul %38, %37, %cst_26 {dimension_numbers = #tpu.dot_dimension_numbers<[1], [0], [0], [1], [0, 0, 1, 1], [], []>} : vector<2x512xbf16>, vector<512x256xbf16>, vector<2x256xf32> -> vector<2x256xf32>
    %c0_27 = arith.constant 0 : index
    %c0_28 = arith.constant 0 : index
    %40 = vector.load %arg10[%c0_27, %c0_28] : memref<1x256xf32, #tpu.memory_space<vmem>>, vector<1x256xf32>
    %41 = vector.broadcast %40 : vector<1x256xf32> to vector<2x256xf32>
    %42 = arith.addf %39, %41 : vector<2x256xf32>
    %cst_29 = arith.constant 0.000000e+00 : f32
    %43 = vector.broadcast %cst_29 : f32 to vector<2x256xf32>
    %44 = arith.maximumf %42, %43 : vector<2x256xf32>
    %c0_30 = arith.constant 0 : index
    %c0_31 = arith.constant 0 : index
    %45 = vector.load %arg13[%c0_30, %c0_31] : memref<256x16xf32, #tpu.memory_space<vmem>>, vector<256x16xf32>
    %c0_32 = arith.constant 0 : index
    %c0_33 = arith.constant 0 : index
    %46 = vector.load %arg14[%c0_32, %c0_33] : memref<16x256xf32, #tpu.memory_space<vmem>>, vector<16x256xf32>
    %cst_34 = arith.constant dense<0.000000e+00> : vector<256xf32>
    %47 = vector.multi_reduction <add>, %44, %cst_34 [0] : vector<2x256xf32> to vector<256xf32>
    %48 = vector.shape_cast %47 : vector<256xf32> to vector<1x256xf32>
    %cst_35 = arith.constant dense<0.000000e+00> : vector<1x16xf32>
    %49 = tpu.matmul %48, %45, %cst_35 {dimension_numbers = #tpu.dot_dimension_numbers<[1], [0], [0], [1], [0, 0, 1, 1], [], []>} : vector<1x256xf32>, vector<256x16xf32>, vector<1x16xf32> -> vector<1x16xf32>
    %cst_36 = arith.constant 3.125000e-02 : f32
    %50 = vector.broadcast %cst_36 : f32 to vector<1x16xf32>
    %51 = arith.mulf %49, %50 : vector<1x16xf32>
    %cst_37 = arith.constant dense<0.000000e+00> : vector<1x256xf32>
    %52 = tpu.matmul %51, %46, %cst_37 {dimension_numbers = #tpu.dot_dimension_numbers<[1], [0], [0], [1], [0, 0, 1, 1], [], []>} : vector<1x16xf32>, vector<16x256xf32>, vector<1x256xf32> -> vector<1x256xf32>
    %53 = vector.broadcast %52 : vector<1x256xf32> to vector<2x256xf32>
    %54 = arith.subf %44, %53 : vector<2x256xf32>
    %55 = arith.mulf %54, %54 : vector<2x256xf32>
    %cst_38 = arith.constant dense<0.000000e+00> : vector<256xf32>
    %56 = vector.multi_reduction <add>, %55, %cst_38 [0] : vector<2x256xf32> to vector<256xf32>
    %57 = vector.shape_cast %56 : vector<256xf32> to vector<1x256xf32>
    %cst_39 = arith.constant dense<0.000000e+00> : vector<1x16xf32>
    %58 = tpu.matmul %57, %45, %cst_39 {dimension_numbers = #tpu.dot_dimension_numbers<[1], [0], [0], [1], [0, 0, 1, 1], [], []>} : vector<1x256xf32>, vector<256x16xf32>, vector<1x16xf32> -> vector<1x16xf32>
    %cst_40 = arith.constant 3.125000e-02 : f32
    %59 = vector.broadcast %cst_40 : f32 to vector<1x16xf32>
    %60 = arith.mulf %58, %59 : vector<1x16xf32>
    %c0_41 = arith.constant 0 : index
    %c0_42 = arith.constant 0 : index
    %61 = vector.load %arg11[%c0_41, %c0_42] : memref<1x16xf32, #tpu.memory_space<vmem>>, vector<1x16xf32>
    %cst_43 = arith.constant 9.99999974E-6 : f32
    %62 = vector.broadcast %cst_43 : f32 to vector<1x16xf32>
    %63 = arith.addf %60, %62 : vector<1x16xf32>
    %64 = math.rsqrt %63 : vector<1x16xf32>
    %65 = arith.mulf %61, %64 : vector<1x16xf32>
    %cst_44 = arith.constant dense<0.000000e+00> : vector<1x256xf32>
    %66 = tpu.matmul %65, %46, %cst_44 {dimension_numbers = #tpu.dot_dimension_numbers<[1], [0], [0], [1], [0, 0, 1, 1], [], []>} : vector<1x16xf32>, vector<16x256xf32>, vector<1x256xf32> -> vector<1x256xf32>
    %67 = vector.broadcast %66 : vector<1x256xf32> to vector<2x256xf32>
    %68 = arith.mulf %54, %67 : vector<2x256xf32>
    %c0_45 = arith.constant 0 : index
    %c0_46 = arith.constant 0 : index
    %69 = vector.load %arg12[%c0_45, %c0_46] : memref<1x16xf32, #tpu.memory_space<vmem>>, vector<1x16xf32>
    %cst_47 = arith.constant dense<0.000000e+00> : vector<1x256xf32>
    %70 = tpu.matmul %69, %46, %cst_47 {dimension_numbers = #tpu.dot_dimension_numbers<[1], [0], [0], [1], [0, 0, 1, 1], [], []>} : vector<1x16xf32>, vector<16x256xf32>, vector<1x256xf32> -> vector<1x256xf32>
    %71 = vector.broadcast %70 : vector<1x256xf32> to vector<2x256xf32>
    %72 = arith.addf %68, %71 : vector<2x256xf32>
    %c0_48 = arith.constant 0 : index
    %c0_49 = arith.constant 0 : index
    %73 = vector.load %arg15[%c0_48, %c0_49] : memref<256x8xbf16, #tpu.memory_space<vmem>>, vector<256x8xbf16>
    %74 = arith.truncf %72 : vector<2x256xf32> to vector<2x256xbf16>
    %cst_50 = arith.constant dense<0.000000e+00> : vector<2x8xf32>
    %75 = tpu.matmul %74, %73, %cst_50 {dimension_numbers = #tpu.dot_dimension_numbers<[1], [0], [0], [1], [0, 0, 1, 1], [], []>} : vector<2x256xbf16>, vector<256x8xbf16>, vector<2x8xf32> -> vector<2x8xf32>
    %c0_51 = arith.constant 0 : index
    %c0_52 = arith.constant 0 : index
    %76 = vector.load %arg16[%c0_51, %c0_52] : memref<1x8xf32, #tpu.memory_space<vmem>>, vector<1x8xf32>
    %77 = vector.broadcast %76 : vector<1x8xf32> to vector<2x8xf32>
    %78 = arith.addf %75, %77 : vector<2x8xf32>
    %c0_53 = arith.constant 0 : index
    %c0_54 = arith.constant 0 : index
    %79 = vector.load %arg17[%c0_53, %c0_54] : memref<256x8xbf16, #tpu.memory_space<vmem>>, vector<256x8xbf16>
    %80 = arith.truncf %72 : vector<2x256xf32> to vector<2x256xbf16>
    %cst_55 = arith.constant dense<0.000000e+00> : vector<2x8xf32>
    %81 = tpu.matmul %80, %79, %cst_55 {dimension_numbers = #tpu.dot_dimension_numbers<[1], [0], [0], [1], [0, 0, 1, 1], [], []>} : vector<2x256xbf16>, vector<256x8xbf16>, vector<2x8xf32> -> vector<2x8xf32>
    %c0_56 = arith.constant 0 : index
    %c0_57 = arith.constant 0 : index
    %82 = vector.load %arg18[%c0_56, %c0_57] : memref<1x8xf32, #tpu.memory_space<vmem>>, vector<1x8xf32>
    %83 = vector.broadcast %82 : vector<1x8xf32> to vector<2x8xf32>
    %84 = arith.addf %81, %83 : vector<2x8xf32>
    %c0_58 = arith.constant 0 : index
    %c0_59 = arith.constant 0 : index
    %85 = vector.load %arg2[%c0_58, %c0_59] : memref<2x8xf32, #tpu.memory_space<vmem>>, vector<2x8xf32>
    %cst_60 = arith.constant 5.000000e-01 : f32
    %86 = vector.broadcast %cst_60 : f32 to vector<2x8xf32>
    %87 = arith.mulf %86, %84 : vector<2x8xf32>
    %88 = math.exp %87 : vector<2x8xf32>
    %89 = arith.mulf %85, %88 : vector<2x8xf32>
    %90 = arith.addf %89, %78 : vector<2x8xf32>
    %c0_61 = arith.constant 0 : index
    %c0_62 = arith.constant 0 : index
    %91 = vector.load %arg19[%c0_61, %c0_62] : memref<8x256xbf16, #tpu.memory_space<vmem>>, vector<8x256xbf16>
    %92 = arith.truncf %90 : vector<2x8xf32> to vector<2x8xbf16>
    %cst_63 = arith.constant dense<0.000000e+00> : vector<2x256xf32>
    %93 = tpu.matmul %92, %91, %cst_63 {dimension_numbers = #tpu.dot_dimension_numbers<[1], [0], [0], [1], [0, 0, 1, 1], [], []>} : vector<2x8xbf16>, vector<8x256xbf16>, vector<2x256xf32> -> vector<2x256xf32>
    %c0_64 = arith.constant 0 : index
    %c0_65 = arith.constant 0 : index
    %94 = vector.load %arg20[%c0_64, %c0_65] : memref<1x256xf32, #tpu.memory_space<vmem>>, vector<1x256xf32>
    %95 = vector.broadcast %94 : vector<1x256xf32> to vector<2x256xf32>
    %96 = arith.addf %93, %95 : vector<2x256xf32>
    %c0_66 = arith.constant 0 : index
    %c0_67 = arith.constant 0 : index
    %97 = vector.load %arg21[%c0_66, %c0_67] : memref<256x512xbf16, #tpu.memory_space<vmem>>, vector<256x512xbf16>
    %98 = arith.truncf %96 : vector<2x256xf32> to vector<2x256xbf16>
    %cst_68 = arith.constant dense<0.000000e+00> : vector<2x512xf32>
    %99 = tpu.matmul %98, %97, %cst_68 {dimension_numbers = #tpu.dot_dimension_numbers<[1], [0], [0], [1], [0, 0, 1, 1], [], []>} : vector<2x256xbf16>, vector<256x512xbf16>, vector<2x512xf32> -> vector<2x512xf32>
    %c0_69 = arith.constant 0 : index
    %c0_70 = arith.constant 0 : index
    %100 = vector.load %arg22[%c0_69, %c0_70] : memref<1x512xf32, #tpu.memory_space<vmem>>, vector<1x512xf32>
    %101 = vector.broadcast %100 : vector<1x512xf32> to vector<2x512xf32>
    %102 = arith.addf %99, %101 : vector<2x512xf32>
    %cst_71 = arith.constant 0.000000e+00 : f32
    %103 = vector.broadcast %cst_71 : f32 to vector<2x512xf32>
    %104 = arith.maximumf %102, %103 : vector<2x512xf32>
    %c0_72 = arith.constant 0 : index
    %c0_73 = arith.constant 0 : index
    %105 = vector.load %arg25[%c0_72, %c0_73] : memref<512x8xf32, #tpu.memory_space<vmem>>, vector<512x8xf32>
    %c0_74 = arith.constant 0 : index
    %c0_75 = arith.constant 0 : index
    %106 = vector.load %arg26[%c0_74, %c0_75] : memref<8x512xf32, #tpu.memory_space<vmem>>, vector<8x512xf32>
    %cst_76 = arith.constant dense<0.000000e+00> : vector<512xf32>
    %107 = vector.multi_reduction <add>, %104, %cst_76 [0] : vector<2x512xf32> to vector<512xf32>
    %108 = vector.shape_cast %107 : vector<512xf32> to vector<1x512xf32>
    %cst_77 = arith.constant dense<0.000000e+00> : vector<1x8xf32>
    %109 = tpu.matmul %108, %105, %cst_77 {dimension_numbers = #tpu.dot_dimension_numbers<[1], [0], [0], [1], [0, 0, 1, 1], [], []>} : vector<1x512xf32>, vector<512x8xf32>, vector<1x8xf32> -> vector<1x8xf32>
    %cst_78 = arith.constant 7.812500e-03 : f32
    %110 = vector.broadcast %cst_78 : f32 to vector<1x8xf32>
    %111 = arith.mulf %109, %110 : vector<1x8xf32>
    %cst_79 = arith.constant dense<0.000000e+00> : vector<1x512xf32>
    %112 = tpu.matmul %111, %106, %cst_79 {dimension_numbers = #tpu.dot_dimension_numbers<[1], [0], [0], [1], [0, 0, 1, 1], [], []>} : vector<1x8xf32>, vector<8x512xf32>, vector<1x512xf32> -> vector<1x512xf32>
    %113 = vector.broadcast %112 : vector<1x512xf32> to vector<2x512xf32>
    %114 = arith.subf %104, %113 : vector<2x512xf32>
    %115 = arith.mulf %114, %114 : vector<2x512xf32>
    %cst_80 = arith.constant dense<0.000000e+00> : vector<512xf32>
    %116 = vector.multi_reduction <add>, %115, %cst_80 [0] : vector<2x512xf32> to vector<512xf32>
    %117 = vector.shape_cast %116 : vector<512xf32> to vector<1x512xf32>
    %cst_81 = arith.constant dense<0.000000e+00> : vector<1x8xf32>
    %118 = tpu.matmul %117, %105, %cst_81 {dimension_numbers = #tpu.dot_dimension_numbers<[1], [0], [0], [1], [0, 0, 1, 1], [], []>} : vector<1x512xf32>, vector<512x8xf32>, vector<1x8xf32> -> vector<1x8xf32>
    %cst_82 = arith.constant 7.812500e-03 : f32
    %119 = vector.broadcast %cst_82 : f32 to vector<1x8xf32>
    %120 = arith.mulf %118, %119 : vector<1x8xf32>
    %c0_83 = arith.constant 0 : index
    %c0_84 = arith.constant 0 : index
    %121 = vector.load %arg23[%c0_83, %c0_84] : memref<1x8xf32, #tpu.memory_space<vmem>>, vector<1x8xf32>
    %cst_85 = arith.constant 9.99999974E-6 : f32
    %122 = vector.broadcast %cst_85 : f32 to vector<1x8xf32>
    %123 = arith.addf %120, %122 : vector<1x8xf32>
    %124 = math.rsqrt %123 : vector<1x8xf32>
    %125 = arith.mulf %121, %124 : vector<1x8xf32>
    %cst_86 = arith.constant dense<0.000000e+00> : vector<1x512xf32>
    %126 = tpu.matmul %125, %106, %cst_86 {dimension_numbers = #tpu.dot_dimension_numbers<[1], [0], [0], [1], [0, 0, 1, 1], [], []>} : vector<1x8xf32>, vector<8x512xf32>, vector<1x512xf32> -> vector<1x512xf32>
    %127 = vector.broadcast %126 : vector<1x512xf32> to vector<2x512xf32>
    %128 = arith.mulf %114, %127 : vector<2x512xf32>
    %c0_87 = arith.constant 0 : index
    %c0_88 = arith.constant 0 : index
    %129 = vector.load %arg24[%c0_87, %c0_88] : memref<1x8xf32, #tpu.memory_space<vmem>>, vector<1x8xf32>
    %cst_89 = arith.constant dense<0.000000e+00> : vector<1x512xf32>
    %130 = tpu.matmul %129, %106, %cst_89 {dimension_numbers = #tpu.dot_dimension_numbers<[1], [0], [0], [1], [0, 0, 1, 1], [], []>} : vector<1x8xf32>, vector<8x512xf32>, vector<1x512xf32> -> vector<1x512xf32>
    %131 = vector.broadcast %130 : vector<1x512xf32> to vector<2x512xf32>
    %132 = arith.addf %128, %131 : vector<2x512xf32>
    %c0_90 = arith.constant 0 : index
    %c0_91 = arith.constant 0 : index
    %133 = vector.load %arg27[%c0_90, %c0_91] : memref<512x256xbf16, #tpu.memory_space<vmem>>, vector<512x256xbf16>
    %134 = arith.truncf %132 : vector<2x512xf32> to vector<2x512xbf16>
    %cst_92 = arith.constant dense<0.000000e+00> : vector<2x256xf32>
    %135 = tpu.matmul %134, %133, %cst_92 {dimension_numbers = #tpu.dot_dimension_numbers<[1], [0], [0], [1], [0, 0, 1, 1], [], []>} : vector<2x512xbf16>, vector<512x256xbf16>, vector<2x256xf32> -> vector<2x256xf32>
    %c0_93 = arith.constant 0 : index
    %c0_94 = arith.constant 0 : index
    %136 = vector.load %arg28[%c0_93, %c0_94] : memref<1x256xf32, #tpu.memory_space<vmem>>, vector<1x256xf32>
    %137 = vector.broadcast %136 : vector<1x256xf32> to vector<2x256xf32>
    %138 = arith.addf %135, %137 : vector<2x256xf32>
    %c0_95 = arith.constant 0 : index
    %c0_96 = arith.constant 0 : index
    %139 = vector.load %arg29[%c0_95, %c0_96] : memref<2x256xf32, #tpu.memory_space<vmem>>, vector<2x256xf32>
    tpu.vector_store %arg29[%c0_95, %c0_96], %138 {strides = array<i32>} : memref<2x256xf32, #tpu.memory_space<vmem>>, vector<2x256xf32>,
    %c0_97 = arith.constant 0 : index
    %c0_98 = arith.constant 0 : index
    %140 = vector.load %arg30[%c0_97, %c0_98] : memref<2x8xf32, #tpu.memory_space<vmem>>, vector<2x8xf32>
    tpu.vector_store %arg30[%c0_97, %c0_98], %78 {strides = array<i32>} : memref<2x8xf32, #tpu.memory_space<vmem>>, vector<2x8xf32>,
    %c0_99 = arith.constant 0 : index
    %c0_100 = arith.constant 0 : index
    %141 = vector.load %arg31[%c0_99, %c0_100] : memref<2x8xf32, #tpu.memory_space<vmem>>, vector<2x8xf32>
    tpu.vector_store %arg31[%c0_99, %c0_100], %84 {strides = array<i32>} : memref<2x8xf32, #tpu.memory_space<vmem>>, vector<2x8xf32>,
    return
  }
  func.func @transform_0(%arg0: i32) -> (i32, i32) {
    %c0_i32 = arith.constant 0 : i32
    %c0_i32_0 = arith.constant 0 : i32
    %c0_i32_1 = arith.constant 0 : i32
    return %c0_i32, %c0_i32_0 : i32, i32
  }
  func.func @transform_1(%arg0: i32) -> (i32, i32) {
    %c0_i32 = arith.constant 0 : i32
    %c0_i32_0 = arith.constant 0 : i32
    %c0_i32_1 = arith.constant 0 : i32
    return %c0_i32, %c0_i32_0 : i32, i32
  }
  func.func @transform_2(%arg0: i32) -> (i32, i32) {
    %c0_i32 = arith.constant 0 : i32
    %c0_i32_0 = arith.constant 0 : i32
    %c0_i32_1 = arith.constant 0 : i32
    return %c0_i32, %c0_i32_0 : i32, i32
  }
  func.func @transform_3(%arg0: i32) -> (i32, i32) {
    %c0_i32 = arith.constant 0 : i32
    %c0_i32_0 = arith.constant 0 : i32
    %c0_i32_1 = arith.constant 0 : i32
    return %c0_i32, %c0_i32_0 : i32, i32
  }
  func.func @transform_4(%arg0: i32) -> (i32, i32) {
    %c0_i32 = arith.constant 0 : i32
    %c0_i32_0 = arith.constant 0 : i32
    %c0_i32_1 = arith.constant 0 : i32
    return %c0_i32, %c0_i32_0 : i32, i32
  }
  func.func @transform_5(%arg0: i32) -> (i32, i32) {
    %c0_i32 = arith.constant 0 : i32
    %c0_i32_0 = arith.constant 0 : i32
    %c0_i32_1 = arith.constant 0 : i32
    return %c0_i32, %c0_i32_0 : i32, i32
  }
  func.func @transform_6(%arg0: i32) -> (i32, i32) {
    %c0_i32 = arith.constant 0 : i32
    %c0_i32_0 = arith.constant 0 : i32
    %c0_i32_1 = arith.constant 0 : i32
    return %c0_i32, %c0_i32_0 : i32, i32
  }
  func.func @transform_7(%arg0: i32) -> (i32, i32) {
    %c0_i32 = arith.constant 0 : i32
    %c0_i32_0 = arith.constant 0 : i32
    %c0_i32_1 = arith.constant 0 : i32
    return %c0_i32, %c0_i32_0 : i32, i32
  }
  func.func @transform_8(%arg0: i32) -> (i32, i32) {
    %c0_i32 = arith.constant 0 : i32
    %c0_i32_0 = arith.constant 0 : i32
    %c0_i32_1 = arith.constant 0 : i32
    return %c0_i32, %c0_i32_0 : i32, i32
  }
  func.func @transform_9(%arg0: i32) -> (i32, i32) {
    %c0_i32 = arith.constant 0 : i32
    %c0_i32_0 = arith.constant 0 : i32
    %c0_i32_1 = arith.constant 0 : i32
    return %c0_i32, %c0_i32_0 : i32, i32
  }
  func.func @transform_10(%arg0: i32) -> (i32, i32) {
    %c0_i32 = arith.constant 0 : i32
    %c0_i32_0 = arith.constant 0 : i32
    %c0_i32_1 = arith.constant 0 : i32
    return %c0_i32, %c0_i32_0 : i32, i32
  }
  func.func @transform_11(%arg0: i32) -> (i32, i32) {
    %c0_i32 = arith.constant 0 : i32
    %c0_i32_0 = arith.constant 0 : i32
    %c0_i32_1 = arith.constant 0 : i32
    return %c0_i32, %c0_i32_0 : i32, i32
  }
  func.func @transform_12(%arg0: i32) -> (i32, i32) {
    %c0_i32 = arith.constant 0 : i32
    %c0_i32_0 = arith.constant 0 : i32
    %c0_i32_1 = arith.constant 0 : i32
    return %c0_i32, %c0_i32_0 : i32, i32
  }
  func.func @transform_13(%arg0: i32) -> (i32, i32) {
    %c0_i32 = arith.constant 0 : i32
    %c0_i32_0 = arith.constant 0 : i32
    %c0_i32_1 = arith.constant 0 : i32
    return %c0_i32, %c0_i32_0 : i32, i32
  }
  func.func @transform_14(%arg0: i32) -> (i32, i32) {
    %c0_i32 = arith.constant 0 : i32
    %c0_i32_0 = arith.constant 0 : i32
    %c0_i32_1 = arith.constant 0 : i32
    return %c0_i32, %c0_i32_0 : i32, i32
  }
  func.func @transform_15(%arg0: i32) -> (i32, i32) {
    %c0_i32 = arith.constant 0 : i32
    %c0_i32_0 = arith.constant 0 : i32
    %c0_i32_1 = arith.constant 0 : i32
    return %c0_i32, %c0_i32_0 : i32, i32
  }
  func.func @transform_16(%arg0: i32) -> (i32, i32) {
    %c0_i32 = arith.constant 0 : i32
    %c0_i32_0 = arith.constant 0 : i32
    %c0_i32_1 = arith.constant 0 : i32
    return %c0_i32, %c0_i32_0 : i32, i32
  }
  func.func @transform_17(%arg0: i32) -> (i32, i32) {
    %c0_i32 = arith.constant 0 : i32
    %c0_i32_0 = arith.constant 0 : i32
    %c0_i32_1 = arith.constant 0 : i32
    return %c0_i32, %c0_i32_0 : i32, i32
  }
  func.func @transform_18(%arg0: i32) -> (i32, i32) {
    %c0_i32 = arith.constant 0 : i32
    %c0_i32_0 = arith.constant 0 : i32
    %c0_i32_1 = arith.constant 0 : i32
    return %c0_i32, %c0_i32_0 : i32, i32
  }
  func.func @transform_19(%arg0: i32) -> (i32, i32) {
    %c0_i32 = arith.constant 0 : i32
    %c0_i32_0 = arith.constant 0 : i32
    %c0_i32_1 = arith.constant 0 : i32
    return %c0_i32, %c0_i32_0 : i32, i32
  }
  func.func @transform_20(%arg0: i32) -> (i32, i32) {
    %c0_i32 = arith.constant 0 : i32
    %c0_i32_0 = arith.constant 0 : i32
    %c0_i32_1 = arith.constant 0 : i32
    return %c0_i32, %c0_i32_0 : i32, i32
  }
  func.func @transform_21(%arg0: i32) -> (i32, i32) {
    %c0_i32 = arith.constant 0 : i32
    %c0_i32_0 = arith.constant 0 : i32
    %c0_i32_1 = arith.constant 0 : i32
    return %c0_i32, %c0_i32_0 : i32, i32
  }
  func.func @transform_22(%arg0: i32) -> (i32, i32) {
    %c0_i32 = arith.constant 0 : i32
    %c0_i32_0 = arith.constant 0 : i32
    %c0_i32_1 = arith.constant 0 : i32
    return %c0_i32, %c0_i32_0 : i32, i32
  }
  func.func @transform_23(%arg0: i32) -> (i32, i32) {
    %c0_i32 = arith.constant 0 : i32
    %c0_i32_0 = arith.constant 0 : i32
    %c0_i32_1 = arith.constant 0 : i32
    return %c0_i32, %c0_i32_0 : i32, i32
  }
  func.func @transform_24(%arg0: i32) -> (i32, i32) {
    %c0_i32 = arith.constant 0 : i32
    %c0_i32_0 = arith.constant 0 : i32
    %c0_i32_1 = arith.constant 0 : i32
    return %c0_i32, %c0_i32_0 : i32, i32
  }
  func.func @transform_25(%arg0: i32) -> (i32, i32) {
    %c0_i32 = arith.constant 0 : i32
    %c0_i32_0 = arith.constant 0 : i32
    %c0_i32_1 = arith.constant 0 : i32
    return %c0_i32, %c0_i32_0 : i32, i32
  }
  func.func @transform_26(%arg0: i32) -> (i32, i32) {
    %c0_i32 = arith.constant 0 : i32
    %c0_i32_0 = arith.constant 0 : i32
    %c0_i32_1 = arith.constant 0 : i32
    return %c0_i32, %c0_i32_0 : i32, i32
  }
  func.func @transform_27(%arg0: i32) -> (i32, i32) {
    %c0_i32 = arith.constant 0 : i32
    %c0_i32_0 = arith.constant 0 : i32
    %c0_i32_1 = arith.constant 0 : i32
    return %c0_i32, %c0_i32_0 : i32, i32
  }
  func.func @transform_28(%arg0: i32) -> (i32, i32) {
    %c0_i32 = arith.constant 0 : i32
    %c0_i32_0 = arith.constant 0 : i32
    %c0_i32_1 = arith.constant 0 : i32
    return %c0_i32, %c0_i32_0 : i32, i32
  }
  func.func @transform_29(%arg0: i32) -> (i32, i32) {
    %c0_i32 = arith.constant 0 : i32
    %c0_i32_0 = arith.constant 0 : i32
    %c0_i32_1 = arith.constant 0 : i32
    return %c0_i32, %c0_i32_0 : i32, i32
  }
  func.func @transform_30(%arg0: i32) -> (i32, i32) {
    %c0_i32 = arith.constant 0 : i32
    %c0_i32_0 = arith.constant 0 : i32
    %c0_i32_1 = arith.constant 0 : i32
    return %c0_i32, %c0_i32_0 : i32, i32
  }
}

</mosaic_0001>

<llo_original>
// kernel: tpu_custom_call.1
$region0: #{tpu_custom_call.1}
  #allocation0 [shape = 'u32[]', space=smem, size = 0x4, offset = 0x4, fixed_abs, tag = 'smem constant byte address 0x4 - core index']
  #allocation1 [shape = 'u32[144,128]{1,0:T(1,128)}', space=vmem, size = 0x12000, scoped, tag = 'internal scratch']
  %s0 = inlined_call_operand.smem [shape: u32[31], index: -1, kind: input, shape index: {}]
  %s1 = sld [smem:[%s0]]
  %s2 = scalar_lea.smem %s0, 1
  %s3 = sld [smem:[%s2]]
  %s4 = scalar_lea.smem %s0, 2
  %s5 = sld [smem:[%s4]]
  %s6 = scalar_lea.smem %s0, 3
  %s7 = sld [smem:[%s6]]
  %s8 = scalar_lea.smem %s0, 4
  %s9 = sld [smem:[%s8]]
  %s10 = scalar_lea.smem %s0, 5
  %s11 = sld [smem:[%s10]]
  %s12 = scalar_lea.smem %s0, 6
  %s13 = sld [smem:[%s12]]
  %s14 = scalar_lea.smem %s0, 7
  %s15 = sld [smem:[%s14]]
  %s16 = scalar_lea.smem %s0, 8
  %s17 = sld [smem:[%s16]]
  %s18 = scalar_lea.smem %s0, 9
  %s19 = sld [smem:[%s18]]
  %s20 = scalar_lea.smem %s0, 10
  %s21 = sld [smem:[%s20]]
  %s22 = scalar_lea.smem %s0, 11
  %s23 = sld [smem:[%s22]]
  %s24 = scalar_lea.smem %s0, 12
  %s25 = sld [smem:[%s24]]
  %s26 = scalar_lea.smem %s0, 13
  %s27 = sld [smem:[%s26]]
  %s28 = scalar_lea.smem %s0, 14
  %s29 = sld [smem:[%s28]]
  %s30 = scalar_lea.smem %s0, 15
  %s31 = sld [smem:[%s30]]
  %s32 = scalar_lea.smem %s0, 16
  %s33 = sld [smem:[%s32]]
  %s34 = scalar_lea.smem %s0, 17
  %s35 = sld [smem:[%s34]]
  %s36 = scalar_lea.smem %s0, 18
  %s37 = sld [smem:[%s36]]
  %s38 = scalar_lea.smem %s0, 19
  %s39 = sld [smem:[%s38]]
  %s40 = scalar_lea.smem %s0, 20
  %s41 = sld [smem:[%s40]]
  %s42 = scalar_lea.smem %s0, 21
  %s43 = sld [smem:[%s42]]
  %s44 = scalar_lea.smem %s0, 22
  %s45 = sld [smem:[%s44]]
  %s46 = scalar_lea.smem %s0, 23
  %s47 = sld [smem:[%s46]]
  %s48 = scalar_lea.smem %s0, 24
  %s49 = sld [smem:[%s48]]
  %s50 = scalar_lea.smem %s0, 25
  %s51 = sld [smem:[%s50]]
  %s52 = scalar_lea.smem %s0, 26
  %s53 = sld [smem:[%s52]]
  %s54 = scalar_lea.smem %s0, 27
  %s55 = sld [smem:[%s54]]
  %s56 = scalar_lea.smem %s0, 28
  %s57 = sld [smem:[%s56]]
  %s58 = scalar_lea.smem %s0, 29
  %s59 = sld [smem:[%s58]]
  %s60 = scalar_lea.smem %s0, 30
  %s61 = sld [smem:[%s60]]
  %62 = xla_tuple %s57, %s59, %s61
  %s63 = sld [smem:[#allocation0]]
  $region186: #{tpu_custom_call.1} parent=0
    _
  %s65 = ssub.s32 1, %s63
  %s66 = scalar_select 0, %s65, %s63
  $region1: #{tpu_custom_call.1} parent=0
    #allocation2 [shape = 'u8[2048]{0}', space=vmem, size = 0x800, scoped, tag = 'input window, operand 0, single buffered']
    #allocation3 [shape = 's32[1]{0}', space=sflag, size = 0x4, scoped, tag = 'scoped memory for tpu_custom_call.1']
    #allocation4 [shape = 's32[1]{0}', space=sflag, size = 0x4, scoped, tag = 'scoped memory for tpu_custom_call.1']
    #allocation5 [shape = 'u8[1024]{0}', space=vmem, size = 0x400, scoped, tag = 'input window, operand 1, single buffered']
    #allocation6 [shape = 's32[1]{0}', space=sflag, size = 0x4, scoped, tag = 'scoped memory for tpu_custom_call.1']
    #allocation7 [shape = 'u8[2048]{0}', space=vmem, size = 0x800, scoped, tag = 'input window, operand 3, single buffered']
    #allocation8 [shape = 'u8[512]{0}', space=vmem, size = 0x400, scoped, tag = 'input window, operand 4, single buffered']
    #allocation9 [shape = 's32[1]{0}', space=sflag, size = 0x4, scoped, tag = 'scoped memory for tpu_custom_call.1']
    #allocation10 [shape = 'u8[512]{0}', space=vmem, size = 0x400, scoped, tag = 'input window, operand 5, single buffered']
    #allocation11 [shape = 'u8[1024]{0}', space=vmem, size = 0x400, scoped, tag = 'input window, operand 9, single buffered']
    #allocation12 [shape = 's32[1]{0}', space=sflag, size = 0x4, scoped, tag = 'scoped memory for tpu_custom_call.1']
    #allocation13 [shape = 'u8[512]{0}', space=vmem, size = 0x400, scoped, tag = 'input window, operand 10, single buffered']
    #allocation14 [shape = 'u8[512]{0}', space=vmem, size = 0x400, scoped, tag = 'input window, operand 11, single buffered']
    #allocation15 [shape = 's32[1]{0}', space=sflag, size = 0x4, scoped, tag = 'scoped memory for tpu_custom_call.1']
    #allocation16 [shape = 'u8[512]{0}', space=vmem, size = 0x400, scoped, tag = 'input window, operand 15, single buffered']
    #allocation17 [shape = 'u8[512]{0}', space=vmem, size = 0x400, scoped, tag = 'input window, operand 17, single buffered']
    #allocation18 [shape = 's32[1]{0}', space=sflag, size = 0x4, scoped, tag = 'scoped memory for tpu_custom_call.1']
    #allocation19 [shape = 'u8[1024]{0}', space=vmem, size = 0x400, scoped, tag = 'input window, operand 19, single buffered']
    #allocation20 [shape = 'u8[262144]{0}', space=vmem, size = 0x40000, scoped, tag = 'input window, operand 26, single buffered']
    #allocation21 [shape = 's32[1]{0}', space=sflag, size = 0x4, scoped, tag = 'scoped memory for tpu_custom_call.1']
    #allocation22 [shape = 'u8[2048]{0}', space=vmem, size = 0x800, scoped, tag = 'output window, operand 0, single buffered']
    #allocation23 [shape = 'u8[1024]{0}', space=vmem, size = 0x400, scoped, tag = 'output window, operand 1, single buffered']
    #allocation24 [shape = 's32[1]{0}', space=sflag, size = 0x4, scoped, tag = 'scoped memory for tpu_custom_call.1']
    #allocation25 [shape = 'u8[1024]{0}', space=vmem, size = 0x400, scoped, tag = 'output window, operand 2, single buffered']
    %67 = vsyncpa [#allocation3], 0
    %68 = vsyncpa [#allocation6], 0
    %69 = vsyncpa [#allocation9], 0
    %70 = vsyncpa [#allocation12], 0
    %71 = vsyncpa [#allocation15], 0
    %72 = vsyncpa [#allocation18], 0
    %73 = vsyncpa [#allocation21], 0
    %74 = vsyncpa [#allocation4], 0
    %75 = vsyncpa [#allocation24], 0
    // Predicated region
    $region2: #{tpu_custom_call.1} parent=1 // pred_check
      _
    $region3: #{tpu_custom_call.1} parent=1 // pred_check_branch
      %77 = sbr.rel (0) target = $region5
    $region4: #{tpu_custom_call.1} parent=1 // pred_region
      %s79 = ssub.s32 64, 64
      %80 = vsyncadd [#allocation3], %s79
      %s82 = sshll.u32 [#allocation2], 4
      %s83 = int_to_ptr.vmem [resolvable:$true] %s82
      %85 = dma.hbm_to_vmem [thread:$0]  %s1, 64, %s83, [#allocation3]
    $region5: #{tpu_custom_call.1} parent=1 // pred_fallthru
      _
    // Predicated region
    $region6: #{tpu_custom_call.1} parent=1 // pred_check
      _
    $region7: #{tpu_custom_call.1} parent=1 // pred_check_branch
      %87 = sbr.rel (0) target = $region9
    $region8: #{tpu_custom_call.1} parent=1 // pred_region
      %s89 = ssub.s32 32, 32
      %90 = vsyncadd [#allocation6], %s89
      %s92 = sshll.u32 [#allocation5], 4
      %s93 = int_to_ptr.vmem [resolvable:$true] %s92
      %95 = dma.hbm_to_vmem [thread:$0]  %s3, 32, %s93, [#allocation6]
    $region9: #{tpu_custom_call.1} parent=1 // pred_fallthru
      _
    // Predicated region
    $region10: #{tpu_custom_call.1} parent=1 // pred_check
      _
    $region11: #{tpu_custom_call.1} parent=1 // pred_check_branch
      %97 = sbr.rel (0) target = $region13
    $region12: #{tpu_custom_call.1} parent=1 // pred_region
      _
    $region13: #{tpu_custom_call.1} parent=1 // pred_fallthru
      _
    // Predicated region
    $region14: #{tpu_custom_call.1} parent=1 // pred_check
      _
    $region15: #{tpu_custom_call.1} parent=1 // pred_check_branch
      %99 = sbr.rel (0) target = $region17
    $region16: #{tpu_custom_call.1} parent=1 // pred_region
      %s101 = ssub.s32 64, 64
      %102 = vsyncadd [#allocation6], %s101
      %s104 = sshll.u32 [#allocation7], 4
      %s105 = int_to_ptr.vmem [resolvable:$true] %s104
      %107 = dma.hbm_to_vmem [thread:$0]  %s7, 64, %s105, [#allocation6]
    $region17: #{tpu_custom_call.1} parent=1 // pred_fallthru
      _
    // Predicated region
    $region18: #{tpu_custom_call.1} parent=1 // pred_check
      _
    $region19: #{tpu_custom_call.1} parent=1 // pred_check_branch
      %109 = sbr.rel (0) target = $region21
    $region20: #{tpu_custom_call.1} parent=1 // pred_region
      %s111 = ssub.s32 16, 16
      %112 = vsyncadd [#allocation9], %s111
      %s114 = sshll.u32 [#allocation8], 4
      %s115 = int_to_ptr.vmem [resolvable:$true] %s114
      %117 = dma.hbm_to_vmem [thread:$0]  %s9, 16, %s115, [#allocation9]
    $region21: #{tpu_custom_call.1} parent=1 // pred_fallthru
      _
    // Predicated region
    $region22: #{tpu_custom_call.1} parent=1 // pred_check
      _
    $region23: #{tpu_custom_call.1} parent=1 // pred_check_branch
      %119 = sbr.rel (0) target = $region25
    $region24: #{tpu_custom_call.1} parent=1 // pred_region
      %s121 = ssub.s32 16, 16
      %122 = vsyncadd [#allocation9], %s121
      %s124 = sshll.u32 [#allocation10], 4
      %s125 = int_to_ptr.vmem [resolvable:$true] %s124
      %127 = dma.hbm_to_vmem [thread:$0]  %s11, 16, %s125, [#allocation9]
    $region25: #{tpu_custom_call.1} parent=1 // pred_fallthru
      _
    // Predicated region
    $region26: #{tpu_custom_call.1} parent=1 // pred_check
      _
    $region27: #{tpu_custom_call.1} parent=1 // pred_check_branch
      %129 = sbr.rel (0) target = $region29
    $region28: #{tpu_custom_call.1} parent=1 // pred_region
      _
    $region29: #{tpu_custom_call.1} parent=1 // pred_fallthru
      _
    // Predicated region
    $region30: #{tpu_custom_call.1} parent=1 // pred_check
      _
    $region31: #{tpu_custom_call.1} parent=1 // pred_check_branch
      %131 = sbr.rel (0) target = $region33
    $region32: #{tpu_custom_call.1} parent=1 // pred_region
      _
    $region33: #{tpu_custom_call.1} parent=1 // pred_fallthru
      _
    // Predicated region
    $region34: #{tpu_custom_call.1} parent=1 // pred_check
      _
    $region35: #{tpu_custom_call.1} parent=1 // pred_check_branch
      %133 = sbr.rel (0) target = $region37
    $region36: #{tpu_custom_call.1} parent=1 // pred_region
      _
    $region37: #{tpu_custom_call.1} parent=1 // pred_fallthru
      _
    // Predicated region
    $region38: #{tpu_custom_call.1} parent=1 // pred_check
      _
    $region39: #{tpu_custom_call.1} parent=1 // pred_check_branch
      %135 = sbr.rel (0) target = $region41
    $region40: #{tpu_custom_call.1} parent=1 // pred_region
      %s137 = ssub.s32 32, 32
      %138 = vsyncadd [#allocation12], %s137
      %s140 = sshll.u32 [#allocation11], 4
      %s141 = int_to_ptr.vmem [resolvable:$true] %s140
      %143 = dma.hbm_to_vmem [thread:$0]  %s19, 32, %s141, [#allocation12]
    $region41: #{tpu_custom_call.1} parent=1 // pred_fallthru
      _
    // Predicated region
    $region42: #{tpu_custom_call.1} parent=1 // pred_check
      _
    $region43: #{tpu_custom_call.1} parent=1 // pred_check_branch
      %145 = sbr.rel (0) target = $region45
    $region44: #{tpu_custom_call.1} parent=1 // pred_region
      %s147 = ssub.s32 16, 16
      %148 = vsyncadd [#allocation12], %s147
      %s150 = sshll.u32 [#allocation13], 4
      %s151 = int_to_ptr.vmem [resolvable:$true] %s150
      %153 = dma.hbm_to_vmem [thread:$0]  %s21, 16, %s151, [#allocation12]
    $region45: #{tpu_custom_call.1} parent=1 // pred_fallthru
      _
    // Predicated region
    $region46: #{tpu_custom_call.1} parent=1 // pred_check
      _
    $region47: #{tpu_custom_call.1} parent=1 // pred_check_branch
      %155 = sbr.rel (0) target = $region49
    $region48: #{tpu_custom_call.1} parent=1 // pred_region
      %s157 = ssub.s32 16, 16
      %158 = vsyncadd [#allocation15], %s157
      %s160 = sshll.u32 [#allocation14], 4
      %s161 = int_to_ptr.vmem [resolvable:$true] %s160
      %163 = dma.hbm_to_vmem [thread:$0]  %s23, 16, %s161, [#allocation15]
    $region49: #{tpu_custom_call.1} parent=1 // pred_fallthru
      _
    // Predicated region
    $region50: #{tpu_custom_call.1} parent=1 // pred_check
      _
    $region51: #{tpu_custom_call.1} parent=1 // pred_check_branch
      %165 = sbr.rel (0) target = $region53
    $region52: #{tpu_custom_call.1} parent=1 // pred_region
      _
    $region53: #{tpu_custom_call.1} parent=1 // pred_fallthru
      _
    // Predicated region
    $region54: #{tpu_custom_call.1} parent=1 // pred_check
      _
    $region55: #{tpu_custom_call.1} parent=1 // pred_check_branch
      %167 = sbr.rel (0) target = $region57
    $region56: #{tpu_custom_call.1} parent=1 // pred_region
      _
    $region57: #{tpu_custom_call.1} parent=1 // pred_fallthru
      _
    // Predicated region
    $region58: #{tpu_custom_call.1} parent=1 // pred_check
      _
    $region59: #{tpu_custom_call.1} parent=1 // pred_check_branch
      %169 = sbr.rel (0) target = $region61
    $region60: #{tpu_custom_call.1} parent=1 // pred_region
      _
    $region61: #{tpu_custom_call.1} parent=1 // pred_fallthru
      _
    // Predicated region
    $region62: #{tpu_custom_call.1} parent=1 // pred_check
      _
    $region63: #{tpu_custom_call.1} parent=1 // pred_check_branch
      %171 = sbr.rel (0) target = $region65
    $region64: #{tpu_custom_call.1} parent=1 // pred_region
      %s173 = ssub.s32 16, 16
      %174 = vsyncadd [#allocation15], %s173
      %s176 = sshll.u32 [#allocation16], 4
      %s177 = int_to_ptr.vmem [resolvable:$true] %s176
      %179 = dma.hbm_to_vmem [thread:$0]  %s31, 16, %s177, [#allocation15]
    $region65: #{tpu_custom_call.1} parent=1 // pred_fallthru
      _
    // Predicated region
    $region66: #{tpu_custom_call.1} parent=1 // pred_check
      _
    $region67: #{tpu_custom_call.1} parent=1 // pred_check_branch
      %181 = sbr.rel (0) target = $region69
    $region68: #{tpu_custom_call.1} parent=1 // pred_region
      _
    $region69: #{tpu_custom_call.1} parent=1 // pred_fallthru
      _
    // Predicated region
    $region70: #{tpu_custom_call.1} parent=1 // pred_check
      _
    $region71: #{tpu_custom_call.1} parent=1 // pred_check_branch
      %183 = sbr.rel (0) target = $region73
    $region72: #{tpu_custom_call.1} parent=1 // pred_region
      %s185 = ssub.s32 16, 16
      %186 = vsyncadd [#allocation18], %s185
      %s188 = sshll.u32 [#allocation17], 4
      %s189 = int_to_ptr.vmem [resolvable:$true] %s188
      %191 = dma.hbm_to_vmem [thread:$0]  %s35, 16, %s189, [#allocation18]
    $region73: #{tpu_custom_call.1} parent=1 // pred_fallthru
      _
    // Predicated region
    $region74: #{tpu_custom_call.1} parent=1 // pred_check
      _
    $region75: #{tpu_custom_call.1} parent=1 // pred_check_branch
      %193 = sbr.rel (0) target = $region77
    $region76: #{tpu_custom_call.1} parent=1 // pred_region
      _
    $region77: #{tpu_custom_call.1} parent=1 // pred_fallthru
      _
    // Predicated region
    $region78: #{tpu_custom_call.1} parent=1 // pred_check
      _
    $region79: #{tpu_custom_call.1} parent=1 // pred_check_branch
      %195 = sbr.rel (0) target = $region81
    $region80: #{tpu_custom_call.1} parent=1 // pred_region
      %s197 = ssub.s32 32, 32
      %198 = vsyncadd [#allocation18], %s197
      %s200 = sshll.u32 [#allocation19], 4
      %s201 = int_to_ptr.vmem [resolvable:$true] %s200
      %203 = dma.hbm_to_vmem [thread:$0]  %s39, 32, %s201, [#allocation18]
    $region81: #{tpu_custom_call.1} parent=1 // pred_fallthru
      _
    // Predicated region
    $region82: #{tpu_custom_call.1} parent=1 // pred_check
      _
    $region83: #{tpu_custom_call.1} parent=1 // pred_check_branch
      %205 = sbr.rel (0) target = $region85
    $region84: #{tpu_custom_call.1} parent=1 // pred_region
      _
    $region85: #{tpu_custom_call.1} parent=1 // pred_fallthru
      _
    // Predicated region
    $region86: #{tpu_custom_call.1} parent=1 // pred_check
      _
    $region87: #{tpu_custom_call.1} parent=1 // pred_check_branch
      %207 = sbr.rel (0) target = $region89
    $region88: #{tpu_custom_call.1} parent=1 // pred_region
      _
    $region89: #{tpu_custom_call.1} parent=1 // pred_fallthru
      _
    // Predicated region
    $region90: #{tpu_custom_call.1} parent=1 // pred_check
      _
    $region91: #{tpu_custom_call.1} parent=1 // pred_check_branch
      %209 = sbr.rel (0) target = $region93
    $region92: #{tpu_custom_call.1} parent=1 // pred_region
      _
    $region93: #{tpu_custom_call.1} parent=1 // pred_fallthru
      _
    // Predicated region
    $region94: #{tpu_custom_call.1} parent=1 // pred_check
      _
    $region95: #{tpu_custom_call.1} parent=1 // pred_check_branch
      %211 = sbr.rel (0) target = $region97
    $region96: #{tpu_custom_call.1} parent=1 // pred_region
      _
    $region97: #{tpu_custom_call.1} parent=1 // pred_fallthru
      _
    // Predicated region
    $region98: #{tpu_custom_call.1} parent=1 // pred_check
      _
    $region99: #{tpu_custom_call.1} parent=1 // pred_check_branch
      %213 = sbr.rel (0) target = $region101
    $region100: #{tpu_custom_call.1} parent=1 // pred_region
      _
    $region101: #{tpu_custom_call.1} parent=1 // pred_fallthru
      _
    // Predicated region
    $region102: #{tpu_custom_call.1} parent=1 // pred_check
      _
    $region103: #{tpu_custom_call.1} parent=1 // pred_check_branch
      %215 = sbr.rel (0) target = $region105
    $region104: #{tpu_custom_call.1} parent=1 // pred_region
      _
    $region105: #{tpu_custom_call.1} parent=1 // pred_fallthru
      _
    // Predicated region
    $region106: #{tpu_custom_call.1} parent=1 // pred_check
      _
    $region107: #{tpu_custom_call.1} parent=1 // pred_check_branch
      %217 = sbr.rel (0) target = $region109
    $region108: #{tpu_custom_call.1} parent=1 // pred_region
      %s219 = ssub.s32 8192, 8192
      %220 = vsyncadd [#allocation21], %s219
      %s221 = sshll.u32 [#allocation20], 4
      %s222 = int_to_ptr.vmem [resolvable:$true] %s221
      %227 = dma.hbm_to_vmem [thread:$0]  %s53, 8192, %s222, [#allocation21], 128, 128, 8
    $region109: #{tpu_custom_call.1} parent=1 // pred_fallthru
      _
    // Predicated region
    $region110: #{tpu_custom_call.1} parent=1 // pred_check
      _
    $region111: #{tpu_custom_call.1} parent=1 // pred_check_branch
      %229 = sbr.rel (0) target = $region113
    $region112: #{tpu_custom_call.1} parent=1 // pred_region
      _
    $region113: #{tpu_custom_call.1} parent=1 // pred_fallthru
      _
    // Predicated region
    $region114: #{tpu_custom_call.1} parent=1 // pred_check
      _
    $region115: #{tpu_custom_call.1} parent=1 // pred_check_branch
      %231 = sbr.rel (0) target = $region117
    $region116: #{tpu_custom_call.1} parent=1 // pred_region
      %232 = dma.done [#allocation3], 64
    $region117: #{tpu_custom_call.1} parent=1 // pred_fallthru
      _
    // Predicated region
    $region118: #{tpu_custom_call.1} parent=1 // pred_check
      _
    $region119: #{tpu_custom_call.1} parent=1 // pred_check_branch
      %234 = sbr.rel (0) target = $region121
    $region120: #{tpu_custom_call.1} parent=1 // pred_region
      %235 = dma.done [#allocation6], 32
    $region121: #{tpu_custom_call.1} parent=1 // pred_fallthru
      _
    // Predicated region
    $region122: #{tpu_custom_call.1} parent=1 // pred_check
      _
    $region123: #{tpu_custom_call.1} parent=1 // pred_check_branch
      %237 = sbr.rel (0) target = $region125
    $region124: #{tpu_custom_call.1} parent=1 // pred_region
      %238 = dma.done [#allocation6], 64
    $region125: #{tpu_custom_call.1} parent=1 // pred_fallthru
      _
    // Predicated region
    $region126: #{tpu_custom_call.1} parent=1 // pred_check
      _
    $region127: #{tpu_custom_call.1} parent=1 // pred_check_branch
      %240 = sbr.rel (0) target = $region129
    $region128: #{tpu_custom_call.1} parent=1 // pred_region
      %241 = dma.done [#allocation9], 16
    $region129: #{tpu_custom_call.1} parent=1 // pred_fallthru
      _
    // Predicated region
    $region130: #{tpu_custom_call.1} parent=1 // pred_check
      _
    $region131: #{tpu_custom_call.1} parent=1 // pred_check_branch
      %243 = sbr.rel (0) target = $region133
    $region132: #{tpu_custom_call.1} parent=1 // pred_region
      %244 = dma.done [#allocation9], 16
    $region133: #{tpu_custom_call.1} parent=1 // pred_fallthru
      _
    // Predicated region
    $region134: #{tpu_custom_call.1} parent=1 // pred_check
      _
    $region135: #{tpu_custom_call.1} parent=1 // pred_check_branch
      %246 = sbr.rel (0) target = $region137
    $region136: #{tpu_custom_call.1} parent=1 // pred_region
      %247 = dma.done [#allocation12], 32
    $region137: #{tpu_custom_call.1} parent=1 // pred_fallthru
      _
    // Predicated region
    $region138: #{tpu_custom_call.1} parent=1 // pred_check
      _
    $region139: #{tpu_custom_call.1} parent=1 // pred_check_branch
      %249 = sbr.rel (0) target = $region141
    $region140: #{tpu_custom_call.1} parent=1 // pred_region
      %250 = dma.done [#allocation12], 16
    $region141: #{tpu_custom_call.1} parent=1 // pred_fallthru
      _
    // Predicated region
    $region142: #{tpu_custom_call.1} parent=1 // pred_check
      _
    $region143: #{tpu_custom_call.1} parent=1 // pred_check_branch
      %252 = sbr.rel (0) target = $region145
    $region144: #{tpu_custom_call.1} parent=1 // pred_region
      %253 = dma.done [#allocation15], 16
    $region145: #{tpu_custom_call.1} parent=1 // pred_fallthru
      _
    // Predicated region
    $region146: #{tpu_custom_call.1} parent=1 // pred_check
      _
    $region147: #{tpu_custom_call.1} parent=1 // pred_check_branch
      %255 = sbr.rel (0) target = $region149
    $region148: #{tpu_custom_call.1} parent=1 // pred_region
      %256 = dma.done [#allocation15], 16
    $region149: #{tpu_custom_call.1} parent=1 // pred_fallthru
      _
    // Predicated region
    $region150: #{tpu_custom_call.1} parent=1 // pred_check
      _
    $region151: #{tpu_custom_call.1} parent=1 // pred_check_branch
      %258 = sbr.rel (0) target = $region153
    $region152: #{tpu_custom_call.1} parent=1 // pred_region
      %259 = dma.done [#allocation18], 16
    $region153: #{tpu_custom_call.1} parent=1 // pred_fallthru
      _
    // Predicated region
    $region154: #{tpu_custom_call.1} parent=1 // pred_check
      _
    $region155: #{tpu_custom_call.1} parent=1 // pred_check_branch
      %261 = sbr.rel (0) target = $region157
    $region156: #{tpu_custom_call.1} parent=1 // pred_region
      %262 = dma.done [#allocation18], 32
    $region157: #{tpu_custom_call.1} parent=1 // pred_fallthru
      _
    // Predicated region
    $region158: #{tpu_custom_call.1} parent=1 // pred_check
      _
    $region159: #{tpu_custom_call.1} parent=1 // pred_check_branch
      %264 = sbr.rel (0) target = $region161
    $region160: #{tpu_custom_call.1} parent=1 // pred_region
      %265 = dma.done [#allocation21], 8192
    $region161: #{tpu_custom_call.1} parent=1 // pred_fallthru
      _
    %v267 = vld [vmem:[#allocation2] sm:$0xf]
    %v268 = vld [vmem:[%s5] sm:$0xff]
    %v269 = vld [vmem:[%s5 + $0x8] sm:$0xff]
    %v270 = vld [vmem:[%s5 + $0x10] sm:$0xff]
    %v271 = vld [vmem:[%s5 + $0x18] sm:$0xff]
    %v272 = vld [vmem:[%s5 + $0x20] sm:$0xff]
    %v273 = vld [vmem:[%s5 + $0x28] sm:$0xff]
    %v274 = vld [vmem:[%s5 + $0x30] sm:$0xff]
    %v275 = vld [vmem:[%s5 + $0x38] sm:$0xff]
    %v276 = vld [vmem:[%s5 + $0x40] sm:$0xff]
    %v277 = vld [vmem:[%s5 + $0x48] sm:$0xff]
    %v278 = vld [vmem:[%s5 + $0x50] sm:$0xff]
    %v279 = vld [vmem:[%s5 + $0x58] sm:$0xff]
    %v280 = vld [vmem:[%s5 + $0x60] sm:$0xff]
    %v281 = vld [vmem:[%s5 + $0x68] sm:$0xff]
    %v282 = vld [vmem:[%s5 + $0x70] sm:$0xff]
    %v283 = vld [vmem:[%s5 + $0x78] sm:$0xff]
    %v284 = vld [vmem:[%s5 + $0x80] sm:$0xff]
    %v285 = vld [vmem:[%s5 + $0x88] sm:$0xff]
    %v286 = vld [vmem:[%s5 + $0x90] sm:$0xff]
    %v287 = vld [vmem:[%s5 + $0x98] sm:$0xff]
    %v288 = vld [vmem:[%s5 + $0xa0] sm:$0xff]
    %v289 = vld [vmem:[%s5 + $0xa8] sm:$0xff]
    %v290 = vld [vmem:[%s5 + $0xb0] sm:$0xff]
    %v291 = vld [vmem:[%s5 + $0xb8] sm:$0xff]
    %v292 = vld [vmem:[%s5 + $0xc0] sm:$0xff]
    %v293 = vld [vmem:[%s5 + $0xc8] sm:$0xff]
    %v294 = vld [vmem:[%s5 + $0xd0] sm:$0xff]
    %v295 = vld [vmem:[%s5 + $0xd8] sm:$0xff]
    %v296 = vld [vmem:[%s5 + $0xe0] sm:$0xff]
    %v297 = vld [vmem:[%s5 + $0xe8] sm:$0xff]
    %v298 = vld [vmem:[%s5 + $0xf0] sm:$0xff]
    %v299 = vld [vmem:[%s5 + $0xf8] sm:$0xff]
    %v300 = vld [vmem:[%s5 + $0x100] sm:$0xff]
    %v301 = vld [vmem:[%s5 + $0x108] sm:$0xff]
    %v302 = vld [vmem:[%s5 + $0x110] sm:$0xff]
    %v303 = vld [vmem:[%s5 + $0x118] sm:$0xff]
    %v304 = vld [vmem:[%s5 + $0x120] sm:$0xff]
    %v305 = vld [vmem:[%s5 + $0x128] sm:$0xff]
    %v306 = vld [vmem:[%s5 + $0x130] sm:$0xff]
    %v307 = vld [vmem:[%s5 + $0x138] sm:$0xff]
    %v308 = vld [vmem:[%s5 + $0x140] sm:$0xff]
    %v309 = vld [vmem:[%s5 + $0x148] sm:$0xff]
    %v310 = vld [vmem:[%s5 + $0x150] sm:$0xff]
    %v311 = vld [vmem:[%s5 + $0x158] sm:$0xff]
    %v312 = vld [vmem:[%s5 + $0x160] sm:$0xff]
    %v313 = vld [vmem:[%s5 + $0x168] sm:$0xff]
    %v314 = vld [vmem:[%s5 + $0x170] sm:$0xff]
    %v315 = vld [vmem:[%s5 + $0x178] sm:$0xff]
    %v316 = vld [vmem:[%s5 + $0x180] sm:$0xff]
    %v317 = vld [vmem:[%s5 + $0x188] sm:$0xff]
    %v318 = vld [vmem:[%s5 + $0x190] sm:$0xff]
    %v319 = vld [vmem:[%s5 + $0x198] sm:$0xff]
    %v320 = vld [vmem:[%s5 + $0x1a0] sm:$0xff]
    %v321 = vld [vmem:[%s5 + $0x1a8] sm:$0xff]
    %v322 = vld [vmem:[%s5 + $0x1b0] sm:$0xff]
    %v323 = vld [vmem:[%s5 + $0x1b8] sm:$0xff]
    %v324 = vld [vmem:[%s5 + $0x1c0] sm:$0xff]
    %v325 = vld [vmem:[%s5 + $0x1c8] sm:$0xff]
    %v326 = vld [vmem:[%s5 + $0x1d0] sm:$0xff]
    %v327 = vld [vmem:[%s5 + $0x1d8] sm:$0xff]
    %v328 = vld [vmem:[%s5 + $0x1e0] sm:$0xff]
    %v329 = vld [vmem:[%s5 + $0x1e8] sm:$0xff]
    %v330 = vld [vmem:[%s5 + $0x1f0] sm:$0xff]
    %v331 = vld [vmem:[%s5 + $0x1f8] sm:$0xff]
    %v334 = vunpack.c.l.s4 1983009808
    %v335 = vunpack.c.0.s8 %v334
    %v336 = vlaneseq
    %v337 = vshrl.u32 %v336, 7
    %v338 = vsub.s32 %v335, %v337
    %v339 = vrot.slane %v267, %v338
    %v340 = vcombine.high %v339, %v339
    %v343 = vpack.c.bf16 %v339, %v339
    %v344 = vpack.c.bf16 %v340, %v340
    %v345 = vld [vmem:[#allocation7] sm:$0xf]
    %v347 = vlaneseq
    %v348 = vshrl.u32 %v347, 7
    %v349 = vsub.s32 0, %v348
    %v350 = vrot.slane %v345, %v349
    %v351 = vlaneseq
    %v352 = vshrl.u32 %v351, 7
    %v353 = vsub.s32 1, %v352
    %v354 = vrot.slane %v345, %v353
    %v355 = vlaneseq
    %v356 = vshrl.u32 %v355, 7
    %v357 = vsub.s32 2, %v356
    %v358 = vrot.slane %v345, %v357
    %v359 = vlaneseq
    %v360 = vshrl.u32 %v359, 7
    %v361 = vsub.s32 3, %v360
    %v362 = vrot.slane %v345, %v361
    %v431 = vunpack.c.l.b16 %v268
    %v432 = vunpack.c.h.b16 %v268
    %v433 = vunpack.c.l.b16 %v269
    %v434 = vunpack.c.h.b16 %v269
    %v435 = vunpack.c.l.b16 %v270
    %v436 = vunpack.c.h.b16 %v270
    %v437 = vunpack.c.l.b16 %v271
    %v438 = vunpack.c.h.b16 %v271
    %v439 = vunpack.c.l.b16 %v272
    %v440 = vunpack.c.h.b16 %v272
    %v441 = vunpack.c.l.b16 %v273
    %v442 = vunpack.c.h.b16 %v273
    %v443 = vunpack.c.l.b16 %v274
    %v444 = vunpack.c.h.b16 %v274
    %v445 = vunpack.c.l.b16 %v275
    %v446 = vunpack.c.h.b16 %v275
    %v447 = vunpack.c.l.b16 %v276
    %v448 = vunpack.c.h.b16 %v276
    %v449 = vunpack.c.l.b16 %v277
    %v450 = vunpack.c.h.b16 %v277
    %v451 = vunpack.c.l.b16 %v278
    %v452 = vunpack.c.h.b16 %v278
    %v453 = vunpack.c.l.b16 %v279
    %v454 = vunpack.c.h.b16 %v279
    %v455 = vunpack.c.l.b16 %v280
    %v456 = vunpack.c.h.b16 %v280
    %v457 = vunpack.c.l.b16 %v281
    %v458 = vunpack.c.h.b16 %v281
    %v459 = vunpack.c.l.b16 %v282
    %v460 = vunpack.c.h.b16 %v282
    %v461 = vunpack.c.l.b16 %v283
    %v462 = vunpack.c.h.b16 %v283
    %v463 = vunpack.c.l.b16 %v284
    %v464 = vunpack.c.h.b16 %v284
    %v465 = vunpack.c.l.b16 %v285
    %v466 = vunpack.c.h.b16 %v285
    %v467 = vunpack.c.l.b16 %v286
    %v468 = vunpack.c.h.b16 %v286
    %v469 = vunpack.c.l.b16 %v287
    %v470 = vunpack.c.h.b16 %v287
    %v471 = vunpack.c.l.b16 %v288
    %v472 = vunpack.c.h.b16 %v288
    %v473 = vunpack.c.l.b16 %v289
    %v474 = vunpack.c.h.b16 %v289
    %v475 = vunpack.c.l.b16 %v290
    %v476 = vunpack.c.h.b16 %v290
    %v477 = vunpack.c.l.b16 %v291
    %v478 = vunpack.c.h.b16 %v291
    %v479 = vunpack.c.l.b16 %v292
    %v480 = vunpack.c.h.b16 %v292
    %v481 = vunpack.c.l.b16 %v293
    %v482 = vunpack.c.h.b16 %v293
    %v483 = vunpack.c.l.b16 %v294
    %v484 = vunpack.c.h.b16 %v294
    %v485 = vunpack.c.l.b16 %v295
    %v486 = vunpack.c.h.b16 %v295
    %v487 = vunpack.c.l.b16 %v296
    %v488 = vunpack.c.h.b16 %v296
    %v489 = vunpack.c.l.b16 %v297
    %v490 = vunpack.c.h.b16 %v297
    %v491 = vunpack.c.l.b16 %v298
    %v492 = vunpack.c.h.b16 %v298
    %v493 = vunpack.c.l.b16 %v299
    %v494 = vunpack.c.h.b16 %v299
    %v495 = vunpack.c.l.b16 %v300
    %v496 = vunpack.c.h.b16 %v300
    %v497 = vunpack.c.l.b16 %v301
    %v498 = vunpack.c.h.b16 %v301
    %v499 = vunpack.c.l.b16 %v302
    %v500 = vunpack.c.h.b16 %v302
    %v501 = vunpack.c.l.b16 %v303
    %v502 = vunpack.c.h.b16 %v303
    %v503 = vunpack.c.l.b16 %v304
    %v504 = vunpack.c.h.b16 %v304
    %v505 = vunpack.c.l.b16 %v305
    %v506 = vunpack.c.h.b16 %v305
    %v507 = vunpack.c.l.b16 %v306
    %v508 = vunpack.c.h.b16 %v306
    %v509 = vunpack.c.l.b16 %v307
    %v510 = vunpack.c.h.b16 %v307
    %v511 = vunpack.c.l.b16 %v308
    %v512 = vunpack.c.h.b16 %v308
    %v513 = vunpack.c.l.b16 %v309
    %v514 = vunpack.c.h.b16 %v309
    %v515 = vunpack.c.l.b16 %v310
    %v516 = vunpack.c.h.b16 %v310
    %v517 = vunpack.c.l.b16 %v311
    %v518 = vunpack.c.h.b16 %v311
    %v519 = vunpack.c.l.b16 %v312
    %v520 = vunpack.c.h.b16 %v312
    %v521 = vunpack.c.l.b16 %v313
    %v522 = vunpack.c.h.b16 %v313
    %v523 = vunpack.c.l.b16 %v314
    %v524 = vunpack.c.h.b16 %v314
    %v525 = vunpack.c.l.b16 %v315
    %v526 = vunpack.c.h.b16 %v315
    %v527 = vunpack.c.l.b16 %v316
    %v528 = vunpack.c.h.b16 %v316
    %v529 = vunpack.c.l.b16 %v317
    %v530 = vunpack.c.h.b16 %v317
    %v531 = vunpack.c.l.b16 %v318
    %v532 = vunpack.c.h.b16 %v318
    %v533 = vunpack.c.l.b16 %v319
    %v534 = vunpack.c.h.b16 %v319
    %v535 = vunpack.c.l.b16 %v320
    %v536 = vunpack.c.h.b16 %v320
    %v537 = vunpack.c.l.b16 %v321
    %v538 = vunpack.c.h.b16 %v321
    %v539 = vunpack.c.l.b16 %v322
    %v540 = vunpack.c.h.b16 %v322
    %v541 = vunpack.c.l.b16 %v323
    %v542 = vunpack.c.h.b16 %v323
    %v543 = vunpack.c.l.b16 %v324
    %v544 = vunpack.c.h.b16 %v324
    %v545 = vunpack.c.l.b16 %v325
    %v546 = vunpack.c.h.b16 %v325
    %v547 = vunpack.c.l.b16 %v326
    %v548 = vunpack.c.h.b16 %v326
    %v549 = vunpack.c.l.b16 %v327
    %v550 = vunpack.c.h.b16 %v327
    %v551 = vunpack.c.l.b16 %v328
    %v552 = vunpack.c.h.b16 %v328
    %v553 = vunpack.c.l.b16 %v329
    %v554 = vunpack.c.h.b16 %v329
    %v555 = vunpack.c.l.b16 %v330
    %v556 = vunpack.c.h.b16 %v330
    %v557 = vunpack.c.l.b16 %v331
    %v558 = vunpack.c.h.b16 %v331
    %v559 = vpack.c.b16 %v435, %v431
    %v560 = vpack.c.b16 %v436, %v432
    %v561 = vpack.c.b16 %v437, %v433
    %v562 = vpack.c.b16 %v438, %v434
    %v563 = vpack.c.b16 %v443, %v439
    %v564 = vpack.c.b16 %v444, %v440
    %v565 = vpack.c.b16 %v445, %v441
    %v566 = vpack.c.b16 %v446, %v442
    %v567 = vpack.c.b16 %v451, %v447
    %v568 = vpack.c.b16 %v452, %v448
    %v569 = vpack.c.b16 %v453, %v449
    %v570 = vpack.c.b16 %v454, %v450
    %v571 = vpack.c.b16 %v459, %v455
    %v572 = vpack.c.b16 %v460, %v456
    %v573 = vpack.c.b16 %v461, %v457
    %v574 = vpack.c.b16 %v462, %v458
    %v575 = vpack.c.b16 %v467, %v463
    %v576 = vpack.c.b16 %v468, %v464
    %v577 = vpack.c.b16 %v469, %v465
    %v578 = vpack.c.b16 %v470, %v466
    %v579 = vpack.c.b16 %v475, %v471
    %v580 = vpack.c.b16 %v476, %v472
    %v581 = vpack.c.b16 %v477, %v473
    %v582 = vpack.c.b16 %v478, %v474
    %v583 = vpack.c.b16 %v483, %v479
    %v584 = vpack.c.b16 %v484, %v480
    %v585 = vpack.c.b16 %v485, %v481
    %v586 = vpack.c.b16 %v486, %v482
    %v587 = vpack.c.b16 %v491, %v487
    %v588 = vpack.c.b16 %v492, %v488
    %v589 = vpack.c.b16 %v493, %v489
    %v590 = vpack.c.b16 %v494, %v490
    %v591 = vpack.c.b16 %v499, %v495
    %v592 = vpack.c.b16 %v500, %v496
    %v593 = vpack.c.b16 %v501, %v497
    %v594 = vpack.c.b16 %v502, %v498
    %v595 = vpack.c.b16 %v507, %v503
    %v596 = vpack.c.b16 %v508, %v504
    %v597 = vpack.c.b16 %v509, %v505
    %v598 = vpack.c.b16 %v510, %v506
    %v599 = vpack.c.b16 %v515, %v511
    %v600 = vpack.c.b16 %v516, %v512
    %v601 = vpack.c.b16 %v517, %v513
    %v602 = vpack.c.b16 %v518, %v514
    %v603 = vpack.c.b16 %v523, %v519
    %v604 = vpack.c.b16 %v524, %v520
    %v605 = vpack.c.b16 %v525, %v521
    %v606 = vpack.c.b16 %v526, %v522
    %v607 = vpack.c.b16 %v531, %v527
    %v608 = vpack.c.b16 %v532, %v528
    %v609 = vpack.c.b16 %v533, %v529
    %v610 = vpack.c.b16 %v534, %v530
    %v611 = vpack.c.b16 %v539, %v535
    %v612 = vpack.c.b16 %v540, %v536
    %v613 = vpack.c.b16 %v541, %v537
    %v614 = vpack.c.b16 %v542, %v538
    %v615 = vpack.c.b16 %v547, %v543
    %v616 = vpack.c.b16 %v548, %v544
    %v617 = vpack.c.b16 %v549, %v545
    %v618 = vpack.c.b16 %v550, %v546
    %v619 = vpack.c.b16 %v555, %v551
    %v620 = vpack.c.b16 %v556, %v552
    %v621 = vpack.c.b16 %v557, %v553
    %v622 = vpack.c.b16 %v558, %v554
    %687 = vmatprep.subr.bf16.mxu0 %v560
    %688 = vmatpush1.bf16.msra.mxu0 %v559
    %689 = vmatprep.subr.bf16.mxu0 %v564
    %690 = vmatpush1.bf16.msra.mxu0 %v563
    %691 = vmatprep.subr.bf16.mxu0 %v568
    %692 = vmatpush1.bf16.msra.mxu0 %v567
    %693 = vmatprep.subr.bf16.mxu0 %v572
    %694 = vmatpush1.bf16.msra.mxu0 %v571
    %695 = vmatprep.subr.bf16.mxu0 %v576
    %696 = vmatpush1.bf16.msra.mxu0 %v575
    %697 = vmatprep.subr.bf16.mxu0 %v580
    %698 = vmatpush1.bf16.msra.mxu0 %v579
    %699 = vmatprep.subr.bf16.mxu0 %v584
    %700 = vmatpush1.bf16.msra.mxu0 %v583
    %701 = vmatprep.subr.bf16.mxu0 %v588
    %702 = vmatpush1.bf16.msra.mxu0 %v587
    %703 = vmatprep.subr.bf16.mxu0 %v592
    %704 = vmatpush1.bf16.msra.mxu0 %v591
    %705 = vmatprep.subr.bf16.mxu0 %v596
    %706 = vmatpush1.bf16.msra.mxu0 %v595
    %707 = vmatprep.subr.bf16.mxu0 %v600
    %708 = vmatpush1.bf16.msra.mxu0 %v599
    %709 = vmatprep.subr.bf16.mxu0 %v604
    %710 = vmatpush1.bf16.msra.mxu0 %v603
    %711 = vmatprep.subr.bf16.mxu0 %v608
    %712 = vmatpush1.bf16.msra.mxu0 %v607
    %713 = vmatprep.subr.bf16.mxu0 %v612
    %714 = vmatpush1.bf16.msra.mxu0 %v611
    %715 = vmatprep.subr.bf16.mxu0 %v616
    %716 = vmatpush1.bf16.msra.mxu0 %v615
    %717 = vmatprep.subr.bf16.mxu0 %v620
    %718 = vmatpush1.bf16.msra.mxu0 %v619
    %719 = vmatprep.mubr.bf16.mxu0 %v344
    %720 = vmatmul.mubr.bf16.gmra.mrb[0].mxu0 %v343
    %v721 = vpop.f32.mrb[0].mxu0
    %v722 = vadd.f32 %v350, %v721
    %v723 = vpop.f32.mrb[0].mxu0
    %v724 = vadd.f32 %v354, %v723
    %v725 = vpop.f32.mrb[0].mxu0
    %v726 = vpop.f32.mrb[0].mxu0
    %727 = vdwg.mxu0
    %728 = vmatprep.subr.bf16.mxu0 %v562
    %729 = vmatpush1.bf16.msra.mxu0 %v561
    %730 = vmatprep.subr.bf16.mxu0 %v566
    %731 = vmatpush1.bf16.msra.mxu0 %v565
    %732 = vmatprep.subr.bf16.mxu0 %v570
    %733 = vmatpush1.bf16.msra.mxu0 %v569
    %734 = vmatprep.subr.bf16.mxu0 %v574
    %735 = vmatpush1.bf16.msra.mxu0 %v573
    %736 = vmatprep.subr.bf16.mxu0 %v578
    %737 = vmatpush1.bf16.msra.mxu0 %v577
    %738 = vmatprep.subr.bf16.mxu0 %v582
    %739 = vmatpush1.bf16.msra.mxu0 %v581
    %740 = vmatprep.subr.bf16.mxu0 %v586
    %741 = vmatpush1.bf16.msra.mxu0 %v585
    %742 = vmatprep.subr.bf16.mxu0 %v590
    %743 = vmatpush1.bf16.msra.mxu0 %v589
    %744 = vmatprep.subr.bf16.mxu0 %v594
    %745 = vmatpush1.bf16.msra.mxu0 %v593
    %746 = vmatprep.subr.bf16.mxu0 %v598
    %747 = vmatpush1.bf16.msra.mxu0 %v597
    %748 = vmatprep.subr.bf16.mxu0 %v602
    %749 = vmatpush1.bf16.msra.mxu0 %v601
    %750 = vmatprep.subr.bf16.mxu0 %v606
    %751 = vmatpush1.bf16.msra.mxu0 %v605
    %752 = vmatprep.subr.bf16.mxu0 %v610
    %753 = vmatpush1.bf16.msra.mxu0 %v609
    %754 = vmatprep.subr.bf16.mxu0 %v614
    %755 = vmatpush1.bf16.msra.mxu0 %v613
    %756 = vmatprep.subr.bf16.mxu0 %v618
    %757 = vmatpush1.bf16.msra.mxu0 %v617
    %758 = vmatprep.subr.bf16.mxu0 %v622
    %759 = vmatpush1.bf16.msra.mxu0 %v621
    %760 = vmatprep.mubr.bf16.mxu0 %v344
    %761 = vmatmul.mubr.bf16.gmra.mrb[0].mxu0 %v343
    %v762 = vpop.f32.mrb[0].mxu0
    %v763 = vadd.f32 %v358, %v762
    %v764 = vpop.f32.mrb[0].mxu0
    %v765 = vadd.f32 %v362, %v764
    %v766 = vpop.f32.mrb[0].mxu0
    %v767 = vpop.f32.mrb[0].mxu0
    %768 = vdwg.mxu0
    %v769 = vmax.f32 %v722, 0.0
    %v770 = vmax.f32 %v724, 0.0
    %v771 = vmax.f32 %v763, 0.0
    %v772 = vmax.f32 %v765, 0.0
    %v773 = vld [vmem:[%s13] sm:$0xff]
    %v774 = vld [vmem:[%s13 + $0x8] sm:$0xff]
    %v775 = vld [vmem:[%s13 + $0x10] sm:$0xff]
    %v776 = vld [vmem:[%s13 + $0x18] sm:$0xff]
    %v777 = vld [vmem:[%s13 + $0x20] sm:$0xff]
    %v778 = vld [vmem:[%s13 + $0x28] sm:$0xff]
    %v779 = vld [vmem:[%s13 + $0x30] sm:$0xff]
    %v780 = vld [vmem:[%s13 + $0x38] sm:$0xff]
    %v781 = vld [vmem:[%s13 + $0x40] sm:$0xff]
    %v782 = vld [vmem:[%s13 + $0x48] sm:$0xff]
    %v783 = vld [vmem:[%s13 + $0x50] sm:$0xff]
    %v784 = vld [vmem:[%s13 + $0x58] sm:$0xff]
    %v785 = vld [vmem:[%s13 + $0x60] sm:$0xff]
    %v786 = vld [vmem:[%s13 + $0x68] sm:$0xff]
    %v787 = vld [vmem:[%s13 + $0x70] sm:$0xff]
    %v788 = vld [vmem:[%s13 + $0x78] sm:$0xff]
    %v789 = vld [vmem:[%s13 + $0x80] sm:$0xff]
    %v790 = vld [vmem:[%s13 + $0x88] sm:$0xff]
    %v791 = vld [vmem:[%s13 + $0x90] sm:$0xff]
    %v792 = vld [vmem:[%s13 + $0x98] sm:$0xff]
    %v793 = vld [vmem:[%s13 + $0xa0] sm:$0xff]
    %v794 = vld [vmem:[%s13 + $0xa8] sm:$0xff]
    %v795 = vld [vmem:[%s13 + $0xb0] sm:$0xff]
    %v796 = vld [vmem:[%s13 + $0xb8] sm:$0xff]
    %v797 = vld [vmem:[%s13 + $0xc0] sm:$0xff]
    %v798 = vld [vmem:[%s13 + $0xc8] sm:$0xff]
    %v799 = vld [vmem:[%s13 + $0xd0] sm:$0xff]
    %v800 = vld [vmem:[%s13 + $0xd8] sm:$0xff]
    %v801 = vld [vmem:[%s13 + $0xe0] sm:$0xff]
    %v802 = vld [vmem:[%s13 + $0xe8] sm:$0xff]
    %v803 = vld [vmem:[%s13 + $0xf0] sm:$0xff]
    %v804 = vld [vmem:[%s13 + $0xf8] sm:$0xff]
    %v805 = vld [vmem:[%s13 + $0x100] sm:$0xff]
    %v806 = vld [vmem:[%s13 + $0x108] sm:$0xff]
    %v807 = vld [vmem:[%s13 + $0x110] sm:$0xff]
    %v808 = vld [vmem:[%s13 + $0x118] sm:$0xff]
    %v809 = vld [vmem:[%s13 + $0x120] sm:$0xff]
    %v810 = vld [vmem:[%s13 + $0x128] sm:$0xff]
    %v811 = vld [vmem:[%s13 + $0x130] sm:$0xff]
    %v812 = vld [vmem:[%s13 + $0x138] sm:$0xff]
    %v813 = vld [vmem:[%s13 + $0x140] sm:$0xff]
    %v814 = vld [vmem:[%s13 + $0x148] sm:$0xff]
    %v815 = vld [vmem:[%s13 + $0x150] sm:$0xff]
    %v816 = vld [vmem:[%s13 + $0x158] sm:$0xff]
    %v817 = vld [vmem:[%s13 + $0x160] sm:$0xff]
    %v818 = vld [vmem:[%s13 + $0x168] sm:$0xff]
    %v819 = vld [vmem:[%s13 + $0x170] sm:$0xff]
    %v820 = vld [vmem:[%s13 + $0x178] sm:$0xff]
    %v821 = vld [vmem:[%s13 + $0x180] sm:$0xff]
    %v822 = vld [vmem:[%s13 + $0x188] sm:$0xff]
    %v823 = vld [vmem:[%s13 + $0x190] sm:$0xff]
    %v824 = vld [vmem:[%s13 + $0x198] sm:$0xff]
    %v825 = vld [vmem:[%s13 + $0x1a0] sm:$0xff]
    %v826 = vld [vmem:[%s13 + $0x1a8] sm:$0xff]
    %v827 = vld [vmem:[%s13 + $0x1b0] sm:$0xff]
    %v828 = vld [vmem:[%s13 + $0x1b8] sm:$0xff]
    %v829 = vld [vmem:[%s13 + $0x1c0] sm:$0xff]
    %v830 = vld [vmem:[%s13 + $0x1c8] sm:$0xff]
    %v831 = vld [vmem:[%s13 + $0x1d0] sm:$0xff]
    %v832 = vld [vmem:[%s13 + $0x1d8] sm:$0xff]
    %v833 = vld [vmem:[%s13 + $0x1e0] sm:$0xff]
    %v834 = vld [vmem:[%s13 + $0x1e8] sm:$0xff]
    %v835 = vld [vmem:[%s13 + $0x1f0] sm:$0xff]
    %v836 = vld [vmem:[%s13 + $0x1f8] sm:$0xff]
    %v837 = vld [vmem:[%s15] sm:$0xff]
    %v838 = vld [vmem:[%s15 + $0x8] sm:$0xff]
    %v839 = vld [vmem:[%s15 + $0x10] sm:$0xff]
    %v840 = vld [vmem:[%s15 + $0x18] sm:$0xff]
    %vm841 = vcmask 1041408
    %v842 = vsel %vm841, %v769, 0.0
    %v843 = vrot.slane %v842, 4
    %v844 = vadd.f32 %v842, %v843
    %v845 = vrot.slane %v844, 2
    %v846 = vadd.f32 %v844, %v845
    %v847 = vrot.slane %v846, 1
    %v848 = vadd.f32 %v846, %v847
    %v849 = vsel %vm841, %v770, 0.0
    %v850 = vrot.slane %v849, 4
    %v851 = vadd.f32 %v849, %v850
    %v852 = vrot.slane %v851, 2
    %v853 = vadd.f32 %v851, %v852
    %v854 = vrot.slane %v853, 1
    %v855 = vadd.f32 %v853, %v854
    %v856 = vsel %vm841, %v771, 0.0
    %v857 = vrot.slane %v856, 4
    %v858 = vadd.f32 %v856, %v857
    %v859 = vrot.slane %v858, 2
    %v860 = vadd.f32 %v858, %v859
    %v861 = vrot.slane %v860, 1
    %v862 = vadd.f32 %v860, %v861
    %v863 = vsel %vm841, %v772, 0.0
    %v864 = vrot.slane %v863, 4
    %v865 = vadd.f32 %v863, %v864
    %v866 = vrot.slane %v865, 2
    %v867 = vadd.f32 %v865, %v866
    %v868 = vrot.slane %v867, 1
    %v869 = vadd.f32 %v867, %v868
    %870 = vmatprep.subr.mxu0 0.0
    %871 = vmatpush1.msra.mxu0 %v773
    %872 = vmatprep.subr.mxu0 0.0
    %873 = vmatpush1.msra.mxu0 %v774
    %874 = vmatprep.subr.mxu0 0.0
    %875 = vmatpush1.msra.mxu0 %v775
    %876 = vmatprep.subr.mxu0 0.0
    %877 = vmatpush1.msra.mxu0 %v776
    %878 = vmatprep.subr.mxu0 0.0
    %879 = vmatpush1.msra.mxu0 %v777
    %880 = vmatprep.subr.mxu0 0.0
    %881 = vmatpush1.msra.mxu0 %v778
    %882 = vmatprep.subr.mxu0 0.0
    %883 = vmatpush1.msra.mxu0 %v779
    %884 = vmatprep.subr.mxu0 0.0
    %885 = vmatpush1.msra.mxu0 %v780
    %886 = vmatprep.subr.mxu0 0.0
    %887 = vmatpush1.msra.mxu0 %v781
    %888 = vmatprep.subr.mxu0 0.0
    %889 = vmatpush1.msra.mxu0 %v782
    %890 = vmatprep.subr.mxu0 0.0
    %891 = vmatpush1.msra.mxu0 %v783
    %892 = vmatprep.subr.mxu0 0.0
    %893 = vmatpush1.msra.mxu0 %v784
    %894 = vmatprep.subr.mxu0 0.0
    %895 = vmatpush1.msra.mxu0 %v785
    %896 = vmatprep.subr.mxu0 0.0
    %897 = vmatpush1.msra.mxu0 %v786
    %898 = vmatprep.subr.mxu0 0.0
    %899 = vmatpush1.msra.mxu0 %v787
    %900 = vmatprep.subr.mxu0 0.0
    %901 = vmatpush1.msra.mxu0 %v788
    %902 = vmatprep.subr.mxu0 0.0
    %903 = vmatpush1.msra.mxu0 %v789
    %904 = vmatprep.subr.mxu0 0.0
    %905 = vmatpush1.msra.mxu0 %v790
    %906 = vmatprep.subr.mxu0 0.0
    %907 = vmatpush1.msra.mxu0 %v791
    %908 = vmatprep.subr.mxu0 0.0
    %909 = vmatpush1.msra.mxu0 %v792
    %910 = vmatprep.subr.mxu0 0.0
    %911 = vmatpush1.msra.mxu0 %v793
    %912 = vmatprep.subr.mxu0 0.0
    %913 = vmatpush1.msra.mxu0 %v794
    %914 = vmatprep.subr.mxu0 0.0
    %915 = vmatpush1.msra.mxu0 %v795
    %916 = vmatprep.subr.mxu0 0.0
    %917 = vmatpush1.msra.mxu0 %v796
    %918 = vmatprep.subr.mxu0 0.0
    %919 = vmatpush1.msra.mxu0 %v797
    %920 = vmatprep.subr.mxu0 0.0
    %921 = vmatpush1.msra.mxu0 %v798
    %922 = vmatprep.subr.mxu0 0.0
    %923 = vmatpush1.msra.mxu0 %v799
    %924 = vmatprep.subr.mxu0 0.0
    %925 = vmatpush1.msra.mxu0 %v800
    %926 = vmatprep.subr.mxu0 0.0
    %927 = vmatpush1.msra.mxu0 %v801
    %928 = vmatprep.subr.mxu0 0.0
    %929 = vmatpush1.msra.mxu0 %v802
    %930 = vmatprep.subr.mxu0 0.0
    %931 = vmatpush1.msra.mxu0 %v803
    %932 = vmatprep.subr.mxu0 0.0
    %933 = vmatpush1.msra.mxu0 %v804
    %934 = vmatprep.mubr.f32.mxu0 %v855
    %935 = vmatmul.mubr.f32.gmra.mrb[0].mxu0 %v848
    %v936 = vpop.f32.mrb[0].mxu0
    %v937 = vadd.f32 0.0, %v936
    %v938 = vpop.f32.mrb[0].mxu0
    %939 = vdwg.mxu0
    %940 = vmatprep.subr.mxu0 0.0
    %941 = vmatpush1.msra.mxu0 %v805
    %942 = vmatprep.subr.mxu0 0.0
    %943 = vmatpush1.msra.mxu0 %v806
    %944 = vmatprep.subr.mxu0 0.0
    %945 = vmatpush1.msra.mxu0 %v807
    %946 = vmatprep.subr.mxu0 0.0
    %947 = vmatpush1.msra.mxu0 %v808
    %948 = vmatprep.subr.mxu0 0.0
    %949 = vmatpush1.msra.mxu0 %v809
    %950 = vmatprep.subr.mxu0 0.0
    %951 = vmatpush1.msra.mxu0 %v810
    %952 = vmatprep.subr.mxu0 0.0
    %953 = vmatpush1.msra.mxu0 %v811
    %954 = vmatprep.subr.mxu0 0.0
    %955 = vmatpush1.msra.mxu0 %v812
    %956 = vmatprep.subr.mxu0 0.0
    %957 = vmatpush1.msra.mxu0 %v813
    %958 = vmatprep.subr.mxu0 0.0
    %959 = vmatpush1.msra.mxu0 %v814
    %960 = vmatprep.subr.mxu0 0.0
    %961 = vmatpush1.msra.mxu0 %v815
    %962 = vmatprep.subr.mxu0 0.0
    %963 = vmatpush1.msra.mxu0 %v816
    %964 = vmatprep.subr.mxu0 0.0
    %965 = vmatpush1.msra.mxu0 %v817
    %966 = vmatprep.subr.mxu0 0.0
    %967 = vmatpush1.msra.mxu0 %v818
    %968 = vmatprep.subr.mxu0 0.0
    %969 = vmatpush1.msra.mxu0 %v819
    %970 = vmatprep.subr.mxu0 0.0
    %971 = vmatpush1.msra.mxu0 %v820
    %972 = vmatprep.subr.mxu0 0.0
    %973 = vmatpush1.msra.mxu0 %v821
    %974 = vmatprep.subr.mxu0 0.0
    %975 = vmatpush1.msra.mxu0 %v822
    %976 = vmatprep.subr.mxu0 0.0
    %977 = vmatpush1.msra.mxu0 %v823
    %978 = vmatprep.subr.mxu0 0.0
    %979 = vmatpush1.msra.mxu0 %v824
    %980 = vmatprep.subr.mxu0 0.0
    %981 = vmatpush1.msra.mxu0 %v825
    %982 = vmatprep.subr.mxu0 0.0
    %983 = vmatpush1.msra.mxu0 %v826
    %984 = vmatprep.subr.mxu0 0.0
    %985 = vmatpush1.msra.mxu0 %v827
    %986 = vmatprep.subr.mxu0 0.0
    %987 = vmatpush1.msra.mxu0 %v828
    %988 = vmatprep.subr.mxu0 0.0
    %989 = vmatpush1.msra.mxu0 %v829
    %990 = vmatprep.subr.mxu0 0.0
    %991 = vmatpush1.msra.mxu0 %v830
    %992 = vmatprep.subr.mxu0 0.0
    %993 = vmatpush1.msra.mxu0 %v831
    %994 = vmatprep.subr.mxu0 0.0
    %995 = vmatpush1.msra.mxu0 %v832
    %996 = vmatprep.subr.mxu0 0.0
    %997 = vmatpush1.msra.mxu0 %v833
    %998 = vmatprep.subr.mxu0 0.0
    %999 = vmatpush1.msra.mxu0 %v834
    %1000 = vmatprep.subr.mxu0 0.0
    %1001 = vmatpush1.msra.mxu0 %v835
    %1002 = vmatprep.subr.mxu0 0.0
    %1003 = vmatpush1.msra.mxu0 %v836
    %1004 = vmatprep.mubr.f32.mxu0 %v869
    %1005 = vmatmul.mubr.f32.gmra.mrb[0].mxu0 %v862
    %v1006 = vpop.f32.mrb[0].mxu0
    %v1007 = vadd.f32 %v937, %v1006
    %v1008 = vpop.f32.mrb[0].mxu0
    %1009 = vdwg.mxu0
    %v1010 = vmul.f32 %v1007, 0.0078125
    %vm1011 = vcmask 64512
    %v1013 = vsel %vm1011, %v1010, 0
    %1015 = vmatprep.subr.mxu0 %v838
    %1016 = vmatpush1.msra.mxu0 %v837
    %1017 = vmatprep.subr.mxu0 0.0
    %1018 = vmatpush1.msra.mxu0 0.0
    %1019 = vmatprep.subr.mxu0 0.0
    %1020 = vmatpush1.msra.mxu0 0.0
    %1021 = vmatprep.subr.mxu0 0.0
    %1022 = vmatpush1.msra.mxu0 0.0
    %1023 = vmatprep.subr.mxu0 0.0
    %1024 = vmatpush1.msra.mxu0 0.0
    %1025 = vmatprep.subr.mxu0 0.0
    %1026 = vmatpush1.msra.mxu0 0.0
    %1027 = vmatprep.subr.mxu0 0.0
    %1028 = vmatpush1.msra.mxu0 0.0
    %1029 = vmatprep.subr.mxu0 0.0
    %1030 = vmatpush1.msra.mxu0 0.0
    %1031 = vmatprep.subr.mxu0 0.0
    %1032 = vmatpush1.msra.mxu0 0.0
    %1033 = vmatprep.subr.mxu0 0.0
    %1034 = vmatpush1.msra.mxu0 0.0
    %1035 = vmatprep.subr.mxu0 0.0
    %1036 = vmatpush1.msra.mxu0 0.0
    %1037 = vmatprep.subr.mxu0 0.0
    %1038 = vmatpush1.msra.mxu0 0.0
    %1039 = vmatprep.subr.mxu0 0.0
    %1040 = vmatpush1.msra.mxu0 0.0
    %1041 = vmatprep.subr.mxu0 0.0
    %1042 = vmatpush1.msra.mxu0 0.0
    %1043 = vmatprep.subr.mxu0 0.0
    %1044 = vmatpush1.msra.mxu0 0.0
    %1045 = vmatprep.subr.mxu0 0.0
    %1046 = vmatpush1.msra.mxu0 0.0
    %1047 = vmatprep.subr.mxu0 0.0
    %1048 = vmatpush1.msra.mxu0 0.0
    %1049 = vmatprep.subr.mxu0 0.0
    %1050 = vmatpush1.msra.mxu0 0.0
    %1051 = vmatprep.subr.mxu0 0.0
    %1052 = vmatpush1.msra.mxu0 0.0
    %1053 = vmatprep.subr.mxu0 0.0
    %1054 = vmatpush1.msra.mxu0 0.0
    %1055 = vmatprep.subr.mxu0 0.0
    %1056 = vmatpush1.msra.mxu0 0.0
    %1057 = vmatprep.subr.mxu0 0.0
    %1058 = vmatpush1.msra.mxu0 0.0
    %1059 = vmatprep.subr.mxu0 0.0
    %1060 = vmatpush1.msra.mxu0 0.0
    %1061 = vmatprep.subr.mxu0 0.0
    %1062 = vmatpush1.msra.mxu0 0.0
    %1063 = vmatprep.subr.mxu0 0.0
    %1064 = vmatpush1.msra.mxu0 0.0
    %1065 = vmatprep.subr.mxu0 0.0
    %1066 = vmatpush1.msra.mxu0 0.0
    %1067 = vmatprep.subr.mxu0 0.0
    %1068 = vmatpush1.msra.mxu0 0.0
    %1069 = vmatprep.subr.mxu0 0.0
    %1070 = vmatpush1.msra.mxu0 0.0
    %1071 = vmatprep.subr.mxu0 0.0
    %1072 = vmatpush1.msra.mxu0 0.0
    %1073 = vmatprep.subr.mxu0 0.0
    %1074 = vmatpush1.msra.mxu0 0.0
    %1075 = vmatprep.subr.mxu0 0.0
    %1076 = vmatpush1.msra.mxu0 0.0
    %1077 = vmatprep.subr.mxu0 0.0
    %1078 = vmatpush1.msra.mxu0 0.0
    %1079 = vmatprep.mubr.f32.mxu0 0.0
    %1080 = vmatmul.mubr.f32.gmra.mrb[0].mxu0 %v1013
    %v1081 = vpop.f32.mrb[0].mxu0
    %v1082 = vadd.f32 0.0, %v1081
    %v1083 = vpop.f32.mrb[0].mxu0
    %v1084 = vadd.f32 0.0, %v1083
    %1085 = vdwg.mxu0
    %1086 = vmatprep.subr.mxu0 %v840
    %1087 = vmatpush1.msra.mxu0 %v839
    %1088 = vmatprep.subr.mxu0 0.0
    %1089 = vmatpush1.msra.mxu0 0.0
    %1090 = vmatprep.subr.mxu0 0.0
    %1091 = vmatpush1.msra.mxu0 0.0
    %1092 = vmatprep.subr.mxu0 0.0
    %1093 = vmatpush1.msra.mxu0 0.0
    %1094 = vmatprep.subr.mxu0 0.0
    %1095 = vmatpush1.msra.mxu0 0.0
    %1096 = vmatprep.subr.mxu0 0.0
    %1097 = vmatpush1.msra.mxu0 0.0
    %1098 = vmatprep.subr.mxu0 0.0
    %1099 = vmatpush1.msra.mxu0 0.0
    %1100 = vmatprep.subr.mxu0 0.0
    %1101 = vmatpush1.msra.mxu0 0.0
    %1102 = vmatprep.subr.mxu0 0.0
    %1103 = vmatpush1.msra.mxu0 0.0
    %1104 = vmatprep.subr.mxu0 0.0
    %1105 = vmatpush1.msra.mxu0 0.0
    %1106 = vmatprep.subr.mxu0 0.0
    %1107 = vmatpush1.msra.mxu0 0.0
    %1108 = vmatprep.subr.mxu0 0.0
    %1109 = vmatpush1.msra.mxu0 0.0
    %1110 = vmatprep.subr.mxu0 0.0
    %1111 = vmatpush1.msra.mxu0 0.0
    %1112 = vmatprep.subr.mxu0 0.0
    %1113 = vmatpush1.msra.mxu0 0.0
    %1114 = vmatprep.subr.mxu0 0.0
    %1115 = vmatpush1.msra.mxu0 0.0
    %1116 = vmatprep.subr.mxu0 0.0
    %1117 = vmatpush1.msra.mxu0 0.0
    %1118 = vmatprep.subr.mxu0 0.0
    %1119 = vmatpush1.msra.mxu0 0.0
    %1120 = vmatprep.subr.mxu0 0.0
    %1121 = vmatpush1.msra.mxu0 0.0
    %1122 = vmatprep.subr.mxu0 0.0
    %1123 = vmatpush1.msra.mxu0 0.0
    %1124 = vmatprep.subr.mxu0 0.0
    %1125 = vmatpush1.msra.mxu0 0.0
    %1126 = vmatprep.subr.mxu0 0.0
    %1127 = vmatpush1.msra.mxu0 0.0
    %1128 = vmatprep.subr.mxu0 0.0
    %1129 = vmatpush1.msra.mxu0 0.0
    %1130 = vmatprep.subr.mxu0 0.0
    %1131 = vmatpush1.msra.mxu0 0.0
    %1132 = vmatprep.subr.mxu0 0.0
    %1133 = vmatpush1.msra.mxu0 0.0
    %1134 = vmatprep.subr.mxu0 0.0
    %1135 = vmatpush1.msra.mxu0 0.0
    %1136 = vmatprep.subr.mxu0 0.0
    %1137 = vmatpush1.msra.mxu0 0.0
    %1138 = vmatprep.subr.mxu0 0.0
    %1139 = vmatpush1.msra.mxu0 0.0
    %1140 = vmatprep.subr.mxu0 0.0
    %1141 = vmatpush1.msra.mxu0 0.0
    %1142 = vmatprep.subr.mxu0 0.0
    %1143 = vmatpush1.msra.mxu0 0.0
    %1144 = vmatprep.subr.mxu0 0.0
    %1145 = vmatpush1.msra.mxu0 0.0
    %1146 = vmatprep.subr.mxu0 0.0
    %1147 = vmatpush1.msra.mxu0 0.0
    %1148 = vmatprep.subr.mxu0 0.0
    %1149 = vmatpush1.msra.mxu0 0.0
    %1150 = vmatprep.mubr.f32.mxu0 0.0
    %1151 = vmatmul.mubr.f32.gmra.mrb[0].mxu0 %v1013
    %v1152 = vpop.f32.mrb[0].mxu0
    %v1153 = vadd.f32 0.0, %v1152
    %v1154 = vpop.f32.mrb[0].mxu0
    %v1155 = vadd.f32 0.0, %v1154
    %1156 = vdwg.mxu0
    %v1157 = vlaneseq
    %v1158 = vshrl.u32 %v1157, 7
    %v1159 = vsub.s32 0, %v1158
    %v1160 = vrot.slane %v1082, %v1159
    %v1161 = vlaneseq
    %v1162 = vshrl.u32 %v1161, 7
    %v1163 = vsub.s32 0, %v1162
    %v1164 = vrot.slane %v1084, %v1163
    %v1165 = vlaneseq
    %v1166 = vshrl.u32 %v1165, 7
    %v1167 = vsub.s32 0, %v1166
    %v1168 = vrot.slane %v1153, %v1167
    %v1169 = vlaneseq
    %v1170 = vshrl.u32 %v1169, 7
    %v1171 = vsub.s32 0, %v1170
    %v1172 = vrot.slane %v1155, %v1171
    %v1173 = vsub.f32 %v769, %v1160
    %v1174 = vsub.f32 %v770, %v1164
    %v1175 = vsub.f32 %v771, %v1168
    %v1176 = vsub.f32 %v772, %v1172
    %v1177 = vmul.f32 %v1173, %v1173
    %v1178 = vmul.f32 %v1174, %v1174
    %v1179 = vmul.f32 %v1175, %v1175
    %v1180 = vmul.f32 %v1176, %v1176
    %v1181 = vsel %vm841, %v1177, 0.0
    %v1182 = vrot.slane %v1181, 4
    %v1183 = vadd.f32 %v1181, %v1182
    %v1184 = vrot.slane %v1183, 2
    %v1185 = vadd.f32 %v1183, %v1184
    %v1186 = vrot.slane %v1185, 1
    %v1187 = vadd.f32 %v1185, %v1186
    %v1188 = vsel %vm841, %v1178, 0.0
    %v1189 = vrot.slane %v1188, 4
    %v1190 = vadd.f32 %v1188, %v1189
    %v1191 = vrot.slane %v1190, 2
    %v1192 = vadd.f32 %v1190, %v1191
    %v1193 = vrot.slane %v1192, 1
    %v1194 = vadd.f32 %v1192, %v1193
    %v1195 = vsel %vm841, %v1179, 0.0
    %v1196 = vrot.slane %v1195, 4
    %v1197 = vadd.f32 %v1195, %v1196
    %v1198 = vrot.slane %v1197, 2
    %v1199 = vadd.f32 %v1197, %v1198
    %v1200 = vrot.slane %v1199, 1
    %v1201 = vadd.f32 %v1199, %v1200
    %v1202 = vsel %vm841, %v1180, 0.0
    %v1203 = vrot.slane %v1202, 4
    %v1204 = vadd.f32 %v1202, %v1203
    %v1205 = vrot.slane %v1204, 2
    %v1206 = vadd.f32 %v1204, %v1205
    %v1207 = vrot.slane %v1206, 1
    %v1208 = vadd.f32 %v1206, %v1207
    %1209 = vmatprep.subr.mxu0 0.0
    %1210 = vmatpush1.msra.mxu0 %v773
    %1211 = vmatprep.subr.mxu0 0.0
    %1212 = vmatpush1.msra.mxu0 %v774
    %1213 = vmatprep.subr.mxu0 0.0
    %1214 = vmatpush1.msra.mxu0 %v775
    %1215 = vmatprep.subr.mxu0 0.0
    %1216 = vmatpush1.msra.mxu0 %v776
    %1217 = vmatprep.subr.mxu0 0.0
    %1218 = vmatpush1.msra.mxu0 %v777
    %1219 = vmatprep.subr.mxu0 0.0
    %1220 = vmatpush1.msra.mxu0 %v778
    %1221 = vmatprep.subr.mxu0 0.0
    %1222 = vmatpush1.msra.mxu0 %v779
    %1223 = vmatprep.subr.mxu0 0.0
    %1224 = vmatpush1.msra.mxu0 %v780
    %1225 = vmatprep.subr.mxu0 0.0
    %1226 = vmatpush1.msra.mxu0 %v781
    %1227 = vmatprep.subr.mxu0 0.0
    %1228 = vmatpush1.msra.mxu0 %v782
    %1229 = vmatprep.subr.mxu0 0.0
    %1230 = vmatpush1.msra.mxu0 %v783
    %1231 = vmatprep.subr.mxu0 0.0
    %1232 = vmatpush1.msra.mxu0 %v784
    %1233 = vmatprep.subr.mxu0 0.0
    %1234 = vmatpush1.msra.mxu0 %v785
    %1235 = vmatprep.subr.mxu0 0.0
    %1236 = vmatpush1.msra.mxu0 %v786
    %1237 = vmatprep.subr.mxu0 0.0
    %1238 = vmatpush1.msra.mxu0 %v787
    %1239 = vmatprep.subr.mxu0 0.0
    %1240 = vmatpush1.msra.mxu0 %v788
    %1241 = vmatprep.subr.mxu0 0.0
    %1242 = vmatpush1.msra.mxu0 %v789
    %1243 = vmatprep.subr.mxu0 0.0
    %1244 = vmatpush1.msra.mxu0 %v790
    %1245 = vmatprep.subr.mxu0 0.0
    %1246 = vmatpush1.msra.mxu0 %v791
    %1247 = vmatprep.subr.mxu0 0.0
    %1248 = vmatpush1.msra.mxu0 %v792
    %1249 = vmatprep.subr.mxu0 0.0
    %1250 = vmatpush1.msra.mxu0 %v793
    %1251 = vmatprep.subr.mxu0 0.0
    %1252 = vmatpush1.msra.mxu0 %v794
    %1253 = vmatprep.subr.mxu0 0.0
    %1254 = vmatpush1.msra.mxu0 %v795
    %1255 = vmatprep.subr.mxu0 0.0
    %1256 = vmatpush1.msra.mxu0 %v796
    %1257 = vmatprep.subr.mxu0 0.0
    %1258 = vmatpush1.msra.mxu0 %v797
    %1259 = vmatprep.subr.mxu0 0.0
    %1260 = vmatpush1.msra.mxu0 %v798
    %1261 = vmatprep.subr.mxu0 0.0
    %1262 = vmatpush1.msra.mxu0 %v799
    %1263 = vmatprep.subr.mxu0 0.0
    %1264 = vmatpush1.msra.mxu0 %v800
    %1265 = vmatprep.subr.mxu0 0.0
    %1266 = vmatpush1.msra.mxu0 %v801
    %1267 = vmatprep.subr.mxu0 0.0
    %1268 = vmatpush1.msra.mxu0 %v802
    %1269 = vmatprep.subr.mxu0 0.0
    %1270 = vmatpush1.msra.mxu0 %v803
    %1271 = vmatprep.subr.mxu0 0.0
    %1272 = vmatpush1.msra.mxu0 %v804
    %1273 = vmatprep.mubr.f32.mxu0 %v1194
    %1274 = vmatmul.mubr.f32.gmra.mrb[0].mxu0 %v1187
    %v1275 = vpop.f32.mrb[0].mxu0
    %v1276 = vadd.f32 0.0, %v1275
    %v1277 = vpop.f32.mrb[0].mxu0
    %1278 = vdwg.mxu0
    %1279 = vmatprep.subr.mxu0 0.0
    %1280 = vmatpush1.msra.mxu0 %v805
    %1281 = vmatprep.subr.mxu0 0.0
    %1282 = vmatpush1.msra.mxu0 %v806
    %1283 = vmatprep.subr.mxu0 0.0
    %1284 = vmatpush1.msra.mxu0 %v807
    %1285 = vmatprep.subr.mxu0 0.0
    %1286 = vmatpush1.msra.mxu0 %v808
    %1287 = vmatprep.subr.mxu0 0.0
    %1288 = vmatpush1.msra.mxu0 %v809
    %1289 = vmatprep.subr.mxu0 0.0
    %1290 = vmatpush1.msra.mxu0 %v810
    %1291 = vmatprep.subr.mxu0 0.0
    %1292 = vmatpush1.msra.mxu0 %v811
    %1293 = vmatprep.subr.mxu0 0.0
    %1294 = vmatpush1.msra.mxu0 %v812
    %1295 = vmatprep.subr.mxu0 0.0
    %1296 = vmatpush1.msra.mxu0 %v813
    %1297 = vmatprep.subr.mxu0 0.0
    %1298 = vmatpush1.msra.mxu0 %v814
    %1299 = vmatprep.subr.mxu0 0.0
    %1300 = vmatpush1.msra.mxu0 %v815
    %1301 = vmatprep.subr.mxu0 0.0
    %1302 = vmatpush1.msra.mxu0 %v816
    %1303 = vmatprep.subr.mxu0 0.0
    %1304 = vmatpush1.msra.mxu0 %v817
    %1305 = vmatprep.subr.mxu0 0.0
    %1306 = vmatpush1.msra.mxu0 %v818
    %1307 = vmatprep.subr.mxu0 0.0
    %1308 = vmatpush1.msra.mxu0 %v819
    %1309 = vmatprep.subr.mxu0 0.0
    %1310 = vmatpush1.msra.mxu0 %v820
    %1311 = vmatprep.subr.mxu0 0.0
    %1312 = vmatpush1.msra.mxu0 %v821
    %1313 = vmatprep.subr.mxu0 0.0
    %1314 = vmatpush1.msra.mxu0 %v822
    %1315 = vmatprep.subr.mxu0 0.0
    %1316 = vmatpush1.msra.mxu0 %v823
    %1317 = vmatprep.subr.mxu0 0.0
    %1318 = vmatpush1.msra.mxu0 %v824
    %1319 = vmatprep.subr.mxu0 0.0
    %1320 = vmatpush1.msra.mxu0 %v825
    %1321 = vmatprep.subr.mxu0 0.0
    %1322 = vmatpush1.msra.mxu0 %v826
    %1323 = vmatprep.subr.mxu0 0.0
    %1324 = vmatpush1.msra.mxu0 %v827
    %1325 = vmatprep.subr.mxu0 0.0
    %1326 = vmatpush1.msra.mxu0 %v828
    %1327 = vmatprep.subr.mxu0 0.0
    %1328 = vmatpush1.msra.mxu0 %v829
    %1329 = vmatprep.subr.mxu0 0.0
    %1330 = vmatpush1.msra.mxu0 %v830
    %1331 = vmatprep.subr.mxu0 0.0
    %1332 = vmatpush1.msra.mxu0 %v831
    %1333 = vmatprep.subr.mxu0 0.0
    %1334 = vmatpush1.msra.mxu0 %v832
    %1335 = vmatprep.subr.mxu0 0.0
    %1336 = vmatpush1.msra.mxu0 %v833
    %1337 = vmatprep.subr.mxu0 0.0
    %1338 = vmatpush1.msra.mxu0 %v834
    %1339 = vmatprep.subr.mxu0 0.0
    %1340 = vmatpush1.msra.mxu0 %v835
    %1341 = vmatprep.subr.mxu0 0.0
    %1342 = vmatpush1.msra.mxu0 %v836
    %1343 = vmatprep.mubr.f32.mxu0 %v1208
    %1344 = vmatmul.mubr.f32.gmra.mrb[0].mxu0 %v1201
    %v1345 = vpop.f32.mrb[0].mxu0
    %v1346 = vadd.f32 %v1276, %v1345
    %v1347 = vpop.f32.mrb[0].mxu0
    %1348 = vdwg.mxu0
    %v1349 = vmul.f32 %v1346, 0.0078125
    %v1350 = vld [vmem:[#allocation8] sm:$0x1]
    %v1351 = vadd.f32 %v1349, 1e-05
    %v1352 = vrsqrt.pop %v1351
    %v1353 = vmul.f32 %v1350, %v1352
    %v1355 = vsel %vm1011, %v1353, 0
    %1357 = vmatprep.subr.mxu0 %v838
    %1358 = vmatpush1.msra.mxu0 %v837
    %1359 = vmatprep.subr.mxu0 0.0
    %1360 = vmatpush1.msra.mxu0 0.0
    %1361 = vmatprep.subr.mxu0 0.0
    %1362 = vmatpush1.msra.mxu0 0.0
    %1363 = vmatprep.subr.mxu0 0.0
    %1364 = vmatpush1.msra.mxu0 0.0
    %1365 = vmatprep.subr.mxu0 0.0
    %1366 = vmatpush1.msra.mxu0 0.0
    %1367 = vmatprep.subr.mxu0 0.0
    %1368 = vmatpush1.msra.mxu0 0.0
    %1369 = vmatprep.subr.mxu0 0.0
    %1370 = vmatpush1.msra.mxu0 0.0
    %1371 = vmatprep.subr.mxu0 0.0
    %1372 = vmatpush1.msra.mxu0 0.0
    %1373 = vmatprep.subr.mxu0 0.0
    %1374 = vmatpush1.msra.mxu0 0.0
    %1375 = vmatprep.subr.mxu0 0.0
    %1376 = vmatpush1.msra.mxu0 0.0
    %1377 = vmatprep.subr.mxu0 0.0
    %1378 = vmatpush1.msra.mxu0 0.0
    %1379 = vmatprep.subr.mxu0 0.0
    %1380 = vmatpush1.msra.mxu0 0.0
    %1381 = vmatprep.subr.mxu0 0.0
    %1382 = vmatpush1.msra.mxu0 0.0
    %1383 = vmatprep.subr.mxu0 0.0
    %1384 = vmatpush1.msra.mxu0 0.0
    %1385 = vmatprep.subr.mxu0 0.0
    %1386 = vmatpush1.msra.mxu0 0.0
    %1387 = vmatprep.subr.mxu0 0.0
    %1388 = vmatpush1.msra.mxu0 0.0
    %1389 = vmatprep.subr.mxu0 0.0
    %1390 = vmatpush1.msra.mxu0 0.0
    %1391 = vmatprep.subr.mxu0 0.0
    %1392 = vmatpush1.msra.mxu0 0.0
    %1393 = vmatprep.subr.mxu0 0.0
    %1394 = vmatpush1.msra.mxu0 0.0
    %1395 = vmatprep.subr.mxu0 0.0
    %1396 = vmatpush1.msra.mxu0 0.0
    %1397 = vmatprep.subr.mxu0 0.0
    %1398 = vmatpush1.msra.mxu0 0.0
    %1399 = vmatprep.subr.mxu0 0.0
    %1400 = vmatpush1.msra.mxu0 0.0
    %1401 = vmatprep.subr.mxu0 0.0
    %1402 = vmatpush1.msra.mxu0 0.0
    %1403 = vmatprep.subr.mxu0 0.0
    %1404 = vmatpush1.msra.mxu0 0.0
    %1405 = vmatprep.subr.mxu0 0.0
    %1406 = vmatpush1.msra.mxu0 0.0
    %1407 = vmatprep.subr.mxu0 0.0
    %1408 = vmatpush1.msra.mxu0 0.0
    %1409 = vmatprep.subr.mxu0 0.0
    %1410 = vmatpush1.msra.mxu0 0.0
    %1411 = vmatprep.subr.mxu0 0.0
    %1412 = vmatpush1.msra.mxu0 0.0
    %1413 = vmatprep.subr.mxu0 0.0
    %1414 = vmatpush1.msra.mxu0 0.0
    %1415 = vmatprep.subr.mxu0 0.0
    %1416 = vmatpush1.msra.mxu0 0.0
    %1417 = vmatprep.subr.mxu0 0.0
    %1418 = vmatpush1.msra.mxu0 0.0
    %1419 = vmatprep.subr.mxu0 0.0
    %1420 = vmatpush1.msra.mxu0 0.0
    %1421 = vmatprep.mubr.f32.mxu0 0.0
    %1422 = vmatmul.mubr.f32.gmra.mrb[0].mxu0 %v1355
    %v1423 = vpop.f32.mrb[0].mxu0
    %v1424 = vadd.f32 0.0, %v1423
    %v1425 = vpop.f32.mrb[0].mxu0
    %v1426 = vadd.f32 0.0, %v1425
    %1427 = vdwg.mxu0
    %1428 = vmatprep.subr.mxu0 %v840
    %1429 = vmatpush1.msra.mxu0 %v839
    %1430 = vmatprep.subr.mxu0 0.0
    %1431 = vmatpush1.msra.mxu0 0.0
    %1432 = vmatprep.subr.mxu0 0.0
    %1433 = vmatpush1.msra.mxu0 0.0
    %1434 = vmatprep.subr.mxu0 0.0
    %1435 = vmatpush1.msra.mxu0 0.0
    %1436 = vmatprep.subr.mxu0 0.0
    %1437 = vmatpush1.msra.mxu0 0.0
    %1438 = vmatprep.subr.mxu0 0.0
    %1439 = vmatpush1.msra.mxu0 0.0
    %1440 = vmatprep.subr.mxu0 0.0
    %1441 = vmatpush1.msra.mxu0 0.0
    %1442 = vmatprep.subr.mxu0 0.0
    %1443 = vmatpush1.msra.mxu0 0.0
    %1444 = vmatprep.subr.mxu0 0.0
    %1445 = vmatpush1.msra.mxu0 0.0
    %1446 = vmatprep.subr.mxu0 0.0
    %1447 = vmatpush1.msra.mxu0 0.0
    %1448 = vmatprep.subr.mxu0 0.0
    %1449 = vmatpush1.msra.mxu0 0.0
    %1450 = vmatprep.subr.mxu0 0.0
    %1451 = vmatpush1.msra.mxu0 0.0
    %1452 = vmatprep.subr.mxu0 0.0
    %1453 = vmatpush1.msra.mxu0 0.0
    %1454 = vmatprep.subr.mxu0 0.0
    %1455 = vmatpush1.msra.mxu0 0.0
    %1456 = vmatprep.subr.mxu0 0.0
    %1457 = vmatpush1.msra.mxu0 0.0
    %1458 = vmatprep.subr.mxu0 0.0
    %1459 = vmatpush1.msra.mxu0 0.0
    %1460 = vmatprep.subr.mxu0 0.0
    %1461 = vmatpush1.msra.mxu0 0.0
    %1462 = vmatprep.subr.mxu0 0.0
    %1463 = vmatpush1.msra.mxu0 0.0
    %1464 = vmatprep.subr.mxu0 0.0
    %1465 = vmatpush1.msra.mxu0 0.0
    %1466 = vmatprep.subr.mxu0 0.0
    %1467 = vmatpush1.msra.mxu0 0.0
    %1468 = vmatprep.subr.mxu0 0.0
    %1469 = vmatpush1.msra.mxu0 0.0
    %1470 = vmatprep.subr.mxu0 0.0
    %1471 = vmatpush1.msra.mxu0 0.0
    %1472 = vmatprep.subr.mxu0 0.0
    %1473 = vmatpush1.msra.mxu0 0.0
    %1474 = vmatprep.subr.mxu0 0.0
    %1475 = vmatpush1.msra.mxu0 0.0
    %1476 = vmatprep.subr.mxu0 0.0
    %1477 = vmatpush1.msra.mxu0 0.0
    %1478 = vmatprep.subr.mxu0 0.0
    %1479 = vmatpush1.msra.mxu0 0.0
    %1480 = vmatprep.subr.mxu0 0.0
    %1481 = vmatpush1.msra.mxu0 0.0
    %1482 = vmatprep.subr.mxu0 0.0
    %1483 = vmatpush1.msra.mxu0 0.0
    %1484 = vmatprep.subr.mxu0 0.0
    %1485 = vmatpush1.msra.mxu0 0.0
    %1486 = vmatprep.subr.mxu0 0.0
    %1487 = vmatpush1.msra.mxu0 0.0
    %1488 = vmatprep.subr.mxu0 0.0
    %1489 = vmatpush1.msra.mxu0 0.0
    %1490 = vmatprep.subr.mxu0 0.0
    %1491 = vmatpush1.msra.mxu0 0.0
    %1492 = vmatprep.mubr.f32.mxu0 0.0
    %1493 = vmatmul.mubr.f32.gmra.mrb[0].mxu0 %v1355
    %v1494 = vpop.f32.mrb[0].mxu0
    %v1495 = vadd.f32 0.0, %v1494
    %v1496 = vpop.f32.mrb[0].mxu0
    %v1497 = vadd.f32 0.0, %v1496
    %1498 = vdwg.mxu0
    %v1499 = vlaneseq
    %v1500 = vshrl.u32 %v1499, 7
    %v1501 = vsub.s32 0, %v1500
    %v1502 = vrot.slane %v1424, %v1501
    %v1503 = vlaneseq
    %v1504 = vshrl.u32 %v1503, 7
    %v1505 = vsub.s32 0, %v1504
    %v1506 = vrot.slane %v1426, %v1505
    %v1507 = vlaneseq
    %v1508 = vshrl.u32 %v1507, 7
    %v1509 = vsub.s32 0, %v1508
    %v1510 = vrot.slane %v1495, %v1509
    %v1511 = vlaneseq
    %v1512 = vshrl.u32 %v1511, 7
    %v1513 = vsub.s32 0, %v1512
    %v1514 = vrot.slane %v1497, %v1513
    %v1515 = vmul.f32 %v1173, %v1502
    %v1516 = vmul.f32 %v1174, %v1506
    %v1517 = vmul.f32 %v1175, %v1510
    %v1518 = vmul.f32 %v1176, %v1514
    %v1519 = vld [vmem:[#allocation10] sm:$0x1]
    %v1521 = vsel %vm1011, %v1519, 0
    %1523 = vmatprep.subr.mxu0 %v838
    %1524 = vmatpush1.msra.mxu0 %v837
    %1525 = vmatprep.subr.mxu0 0.0
    %1526 = vmatpush1.msra.mxu0 0.0
    %1527 = vmatprep.subr.mxu0 0.0
    %1528 = vmatpush1.msra.mxu0 0.0
    %1529 = vmatprep.subr.mxu0 0.0
    %1530 = vmatpush1.msra.mxu0 0.0
    %1531 = vmatprep.subr.mxu0 0.0
    %1532 = vmatpush1.msra.mxu0 0.0
    %1533 = vmatprep.subr.mxu0 0.0
    %1534 = vmatpush1.msra.mxu0 0.0
    %1535 = vmatprep.subr.mxu0 0.0
    %1536 = vmatpush1.msra.mxu0 0.0
    %1537 = vmatprep.subr.mxu0 0.0
    %1538 = vmatpush1.msra.mxu0 0.0
    %1539 = vmatprep.subr.mxu0 0.0
    %1540 = vmatpush1.msra.mxu0 0.0
    %1541 = vmatprep.subr.mxu0 0.0
    %1542 = vmatpush1.msra.mxu0 0.0
    %1543 = vmatprep.subr.mxu0 0.0
    %1544 = vmatpush1.msra.mxu0 0.0
    %1545 = vmatprep.subr.mxu0 0.0
    %1546 = vmatpush1.msra.mxu0 0.0
    %1547 = vmatprep.subr.mxu0 0.0
    %1548 = vmatpush1.msra.mxu0 0.0
    %1549 = vmatprep.subr.mxu0 0.0
    %1550 = vmatpush1.msra.mxu0 0.0
    %1551 = vmatprep.subr.mxu0 0.0
    %1552 = vmatpush1.msra.mxu0 0.0
    %1553 = vmatprep.subr.mxu0 0.0
    %1554 = vmatpush1.msra.mxu0 0.0
    %1555 = vmatprep.subr.mxu0 0.0
    %1556 = vmatpush1.msra.mxu0 0.0
    %1557 = vmatprep.subr.mxu0 0.0
    %1558 = vmatpush1.msra.mxu0 0.0
    %1559 = vmatprep.subr.mxu0 0.0
    %1560 = vmatpush1.msra.mxu0 0.0
    %1561 = vmatprep.subr.mxu0 0.0
    %1562 = vmatpush1.msra.mxu0 0.0
    %1563 = vmatprep.subr.mxu0 0.0
    %1564 = vmatpush1.msra.mxu0 0.0
    %1565 = vmatprep.subr.mxu0 0.0
    %1566 = vmatpush1.msra.mxu0 0.0
    %1567 = vmatprep.subr.mxu0 0.0
    %1568 = vmatpush1.msra.mxu0 0.0
    %1569 = vmatprep.subr.mxu0 0.0
    %1570 = vmatpush1.msra.mxu0 0.0
    %1571 = vmatprep.subr.mxu0 0.0
    %1572 = vmatpush1.msra.mxu0 0.0
    %1573 = vmatprep.subr.mxu0 0.0
    %1574 = vmatpush1.msra.mxu0 0.0
    %1575 = vmatprep.subr.mxu0 0.0
    %1576 = vmatpush1.msra.mxu0 0.0
    %1577 = vmatprep.subr.mxu0 0.0
    %1578 = vmatpush1.msra.mxu0 0.0
    %1579 = vmatprep.subr.mxu0 0.0
    %1580 = vmatpush1.msra.mxu0 0.0
    %1581 = vmatprep.subr.mxu0 0.0
    %1582 = vmatpush1.msra.mxu0 0.0
    %1583 = vmatprep.subr.mxu0 0.0
    %1584 = vmatpush1.msra.mxu0 0.0
    %1585 = vmatprep.subr.mxu0 0.0
    %1586 = vmatpush1.msra.mxu0 0.0
    %1587 = vmatprep.mubr.f32.mxu0 0.0
    %1588 = vmatmul.mubr.f32.gmra.mrb[0].mxu0 %v1521
    %v1589 = vpop.f32.mrb[0].mxu0
    %v1590 = vadd.f32 0.0, %v1589
    %v1591 = vpop.f32.mrb[0].mxu0
    %v1592 = vadd.f32 0.0, %v1591
    %1593 = vdwg.mxu0
    %1594 = vmatprep.subr.mxu0 %v840
    %1595 = vmatpush1.msra.mxu0 %v839
    %1596 = vmatprep.subr.mxu0 0.0
    %1597 = vmatpush1.msra.mxu0 0.0
    %1598 = vmatprep.subr.mxu0 0.0
    %1599 = vmatpush1.msra.mxu0 0.0
    %1600 = vmatprep.subr.mxu0 0.0
    %1601 = vmatpush1.msra.mxu0 0.0
    %1602 = vmatprep.subr.mxu0 0.0
    %1603 = vmatpush1.msra.mxu0 0.0
    %1604 = vmatprep.subr.mxu0 0.0
    %1605 = vmatpush1.msra.mxu0 0.0
    %1606 = vmatprep.subr.mxu0 0.0
    %1607 = vmatpush1.msra.mxu0 0.0
    %1608 = vmatprep.subr.mxu0 0.0
    %1609 = vmatpush1.msra.mxu0 0.0
    %1610 = vmatprep.subr.mxu0 0.0
    %1611 = vmatpush1.msra.mxu0 0.0
    %1612 = vmatprep.subr.mxu0 0.0
    %1613 = vmatpush1.msra.mxu0 0.0
    %1614 = vmatprep.subr.mxu0 0.0
    %1615 = vmatpush1.msra.mxu0 0.0
    %1616 = vmatprep.subr.mxu0 0.0
    %1617 = vmatpush1.msra.mxu0 0.0
    %1618 = vmatprep.subr.mxu0 0.0
    %1619 = vmatpush1.msra.mxu0 0.0
    %1620 = vmatprep.subr.mxu0 0.0
    %1621 = vmatpush1.msra.mxu0 0.0
    %1622 = vmatprep.subr.mxu0 0.0
    %1623 = vmatpush1.msra.mxu0 0.0
    %1624 = vmatprep.subr.mxu0 0.0
    %1625 = vmatpush1.msra.mxu0 0.0
    %1626 = vmatprep.subr.mxu0 0.0
    %1627 = vmatpush1.msra.mxu0 0.0
    %1628 = vmatprep.subr.mxu0 0.0
    %1629 = vmatpush1.msra.mxu0 0.0
    %1630 = vmatprep.subr.mxu0 0.0
    %1631 = vmatpush1.msra.mxu0 0.0
    %1632 = vmatprep.subr.mxu0 0.0
    %1633 = vmatpush1.msra.mxu0 0.0
    %1634 = vmatprep.subr.mxu0 0.0
    %1635 = vmatpush1.msra.mxu0 0.0
    %1636 = vmatprep.subr.mxu0 0.0
    %1637 = vmatpush1.msra.mxu0 0.0
    %1638 = vmatprep.subr.mxu0 0.0
    %1639 = vmatpush1.msra.mxu0 0.0
    %1640 = vmatprep.subr.mxu0 0.0
    %1641 = vmatpush1.msra.mxu0 0.0
    %1642 = vmatprep.subr.mxu0 0.0
    %1643 = vmatpush1.msra.mxu0 0.0
    %1644 = vmatprep.subr.mxu0 0.0
    %1645 = vmatpush1.msra.mxu0 0.0
    %1646 = vmatprep.subr.mxu0 0.0
    %1647 = vmatpush1.msra.mxu0 0.0
    %1648 = vmatprep.subr.mxu0 0.0
    %1649 = vmatpush1.msra.mxu0 0.0
    %1650 = vmatprep.subr.mxu0 0.0
    %1651 = vmatpush1.msra.mxu0 0.0
    %1652 = vmatprep.subr.mxu0 0.0
    %1653 = vmatpush1.msra.mxu0 0.0
    %1654 = vmatprep.subr.mxu0 0.0
    %1655 = vmatpush1.msra.mxu0 0.0
    %1656 = vmatprep.subr.mxu0 0.0
    %1657 = vmatpush1.msra.mxu0 0.0
    %1658 = vmatprep.mubr.f32.mxu0 0.0
    %1659 = vmatmul.mubr.f32.gmra.mrb[0].mxu0 %v1521
    %v1660 = vpop.f32.mrb[0].mxu0
    %v1661 = vadd.f32 0.0, %v1660
    %v1662 = vpop.f32.mrb[0].mxu0
    %v1663 = vadd.f32 0.0, %v1662
    %1664 = vdwg.mxu0
    %v1665 = vlaneseq
    %v1666 = vshrl.u32 %v1665, 7
    %v1667 = vsub.s32 0, %v1666
    %v1668 = vrot.slane %v1590, %v1667
    %v1669 = vlaneseq
    %v1670 = vshrl.u32 %v1669, 7
    %v1671 = vsub.s32 0, %v1670
    %v1672 = vrot.slane %v1592, %v1671
    %v1673 = vlaneseq
    %v1674 = vshrl.u32 %v1673, 7
    %v1675 = vsub.s32 0, %v1674
    %v1676 = vrot.slane %v1661, %v1675
    %v1677 = vlaneseq
    %v1678 = vshrl.u32 %v1677, 7
    %v1679 = vsub.s32 0, %v1678
    %v1680 = vrot.slane %v1663, %v1679
    %v1681 = vadd.f32 %v1515, %v1668
    %v1682 = vadd.f32 %v1516, %v1672
    %v1683 = vadd.f32 %v1517, %v1676
    %v1684 = vadd.f32 %v1518, %v1680
    %v1685 = vld [vmem:[%s17] sm:$0xff]
    %v1686 = vld [vmem:[%s17 + $0x8] sm:$0xff]
    %v1687 = vld [vmem:[%s17 + $0x10] sm:$0xff]
    %v1688 = vld [vmem:[%s17 + $0x18] sm:$0xff]
    %v1689 = vld [vmem:[%s17 + $0x20] sm:$0xff]
    %v1690 = vld [vmem:[%s17 + $0x28] sm:$0xff]
    %v1691 = vld [vmem:[%s17 + $0x30] sm:$0xff]
    %v1692 = vld [vmem:[%s17 + $0x38] sm:$0xff]
    %v1693 = vld [vmem:[%s17 + $0x40] sm:$0xff]
    %v1694 = vld [vmem:[%s17 + $0x48] sm:$0xff]
    %v1695 = vld [vmem:[%s17 + $0x50] sm:$0xff]
    %v1696 = vld [vmem:[%s17 + $0x58] sm:$0xff]
    %v1697 = vld [vmem:[%s17 + $0x60] sm:$0xff]
    %v1698 = vld [vmem:[%s17 + $0x68] sm:$0xff]
    %v1699 = vld [vmem:[%s17 + $0x70] sm:$0xff]
    %v1700 = vld [vmem:[%s17 + $0x78] sm:$0xff]
    %v1701 = vld [vmem:[%s17 + $0x80] sm:$0xff]
    %v1702 = vld [vmem:[%s17 + $0x88] sm:$0xff]
    %v1703 = vld [vmem:[%s17 + $0x90] sm:$0xff]
    %v1704 = vld [vmem:[%s17 + $0x98] sm:$0xff]
    %v1705 = vld [vmem:[%s17 + $0xa0] sm:$0xff]
    %v1706 = vld [vmem:[%s17 + $0xa8] sm:$0xff]
    %v1707 = vld [vmem:[%s17 + $0xb0] sm:$0xff]
    %v1708 = vld [vmem:[%s17 + $0xb8] sm:$0xff]
    %v1709 = vld [vmem:[%s17 + $0xc0] sm:$0xff]
    %v1710 = vld [vmem:[%s17 + $0xc8] sm:$0xff]
    %v1711 = vld [vmem:[%s17 + $0xd0] sm:$0xff]
    %v1712 = vld [vmem:[%s17 + $0xd8] sm:$0xff]
    %v1713 = vld [vmem:[%s17 + $0xe0] sm:$0xff]
    %v1714 = vld [vmem:[%s17 + $0xe8] sm:$0xff]
    %v1715 = vld [vmem:[%s17 + $0xf0] sm:$0xff]
    %v1716 = vld [vmem:[%s17 + $0xf8] sm:$0xff]
    %v1717 = vld [vmem:[%s17 + $0x100] sm:$0xff]
    %v1718 = vld [vmem:[%s17 + $0x108] sm:$0xff]
    %v1719 = vld [vmem:[%s17 + $0x110] sm:$0xff]
    %v1720 = vld [vmem:[%s17 + $0x118] sm:$0xff]
    %v1721 = vld [vmem:[%s17 + $0x120] sm:$0xff]
    %v1722 = vld [vmem:[%s17 + $0x128] sm:$0xff]
    %v1723 = vld [vmem:[%s17 + $0x130] sm:$0xff]
    %v1724 = vld [vmem:[%s17 + $0x138] sm:$0xff]
    %v1725 = vld [vmem:[%s17 + $0x140] sm:$0xff]
    %v1726 = vld [vmem:[%s17 + $0x148] sm:$0xff]
    %v1727 = vld [vmem:[%s17 + $0x150] sm:$0xff]
    %v1728 = vld [vmem:[%s17 + $0x158] sm:$0xff]
    %v1729 = vld [vmem:[%s17 + $0x160] sm:$0xff]
    %v1730 = vld [vmem:[%s17 + $0x168] sm:$0xff]
    %v1731 = vld [vmem:[%s17 + $0x170] sm:$0xff]
    %v1732 = vld [vmem:[%s17 + $0x178] sm:$0xff]
    %v1733 = vld [vmem:[%s17 + $0x180] sm:$0xff]
    %v1734 = vld [vmem:[%s17 + $0x188] sm:$0xff]
    %v1735 = vld [vmem:[%s17 + $0x190] sm:$0xff]
    %v1736 = vld [vmem:[%s17 + $0x198] sm:$0xff]
    %v1737 = vld [vmem:[%s17 + $0x1a0] sm:$0xff]
    %v1738 = vld [vmem:[%s17 + $0x1a8] sm:$0xff]
    %v1739 = vld [vmem:[%s17 + $0x1b0] sm:$0xff]
    %v1740 = vld [vmem:[%s17 + $0x1b8] sm:$0xff]
    %v1741 = vld [vmem:[%s17 + $0x1c0] sm:$0xff]
    %v1742 = vld [vmem:[%s17 + $0x1c8] sm:$0xff]
    %v1743 = vld [vmem:[%s17 + $0x1d0] sm:$0xff]
    %v1744 = vld [vmem:[%s17 + $0x1d8] sm:$0xff]
    %v1745 = vld [vmem:[%s17 + $0x1e0] sm:$0xff]
    %v1746 = vld [vmem:[%s17 + $0x1e8] sm:$0xff]
    %v1747 = vld [vmem:[%s17 + $0x1f0] sm:$0xff]
    %v1748 = vld [vmem:[%s17 + $0x1f8] sm:$0xff]
    %v1749 = vpack.c.bf16 %v1681, %v1681
    %v1750 = vpack.c.bf16 %v1682, %v1682
    %v1751 = vpack.c.bf16 %v1683, %v1683
    %v1752 = vpack.c.bf16 %v1684, %v1684
    %v1753 = vld [vmem:[#allocation11] sm:$0x3]
    %v1755 = vlaneseq
    %v1756 = vshrl.u32 %v1755, 7
    %v1757 = vsub.s32 0, %v1756
    %v1758 = vrot.slane %v1753, %v1757
    %v1759 = vlaneseq
    %v1760 = vshrl.u32 %v1759, 7
    %v1761 = vsub.s32 1, %v1760
    %v1762 = vrot.slane %v1753, %v1761
    %v1829 = vunpack.c.l.b16 %v1685
    %v1830 = vunpack.c.h.b16 %v1685
    %v1831 = vunpack.c.l.b16 %v1686
    %v1832 = vunpack.c.h.b16 %v1686
    %v1833 = vunpack.c.l.b16 %v1687
    %v1834 = vunpack.c.h.b16 %v1687
    %v1835 = vunpack.c.l.b16 %v1688
    %v1836 = vunpack.c.h.b16 %v1688
    %v1837 = vunpack.c.l.b16 %v1689
    %v1838 = vunpack.c.h.b16 %v1689
    %v1839 = vunpack.c.l.b16 %v1690
    %v1840 = vunpack.c.h.b16 %v1690
    %v1841 = vunpack.c.l.b16 %v1691
    %v1842 = vunpack.c.h.b16 %v1691
    %v1843 = vunpack.c.l.b16 %v1692
    %v1844 = vunpack.c.h.b16 %v1692
    %v1845 = vunpack.c.l.b16 %v1693
    %v1846 = vunpack.c.h.b16 %v1693
    %v1847 = vunpack.c.l.b16 %v1694
    %v1848 = vunpack.c.h.b16 %v1694
    %v1849 = vunpack.c.l.b16 %v1695
    %v1850 = vunpack.c.h.b16 %v1695
    %v1851 = vunpack.c.l.b16 %v1696
    %v1852 = vunpack.c.h.b16 %v1696
    %v1853 = vunpack.c.l.b16 %v1697
    %v1854 = vunpack.c.h.b16 %v1697
    %v1855 = vunpack.c.l.b16 %v1698
    %v1856 = vunpack.c.h.b16 %v1698
    %v1857 = vunpack.c.l.b16 %v1699
    %v1858 = vunpack.c.h.b16 %v1699
    %v1859 = vunpack.c.l.b16 %v1700
    %v1860 = vunpack.c.h.b16 %v1700
    %v1861 = vunpack.c.l.b16 %v1701
    %v1862 = vunpack.c.h.b16 %v1701
    %v1863 = vunpack.c.l.b16 %v1702
    %v1864 = vunpack.c.h.b16 %v1702
    %v1865 = vunpack.c.l.b16 %v1703
    %v1866 = vunpack.c.h.b16 %v1703
    %v1867 = vunpack.c.l.b16 %v1704
    %v1868 = vunpack.c.h.b16 %v1704
    %v1869 = vunpack.c.l.b16 %v1705
    %v1870 = vunpack.c.h.b16 %v1705
    %v1871 = vunpack.c.l.b16 %v1706
    %v1872 = vunpack.c.h.b16 %v1706
    %v1873 = vunpack.c.l.b16 %v1707
    %v1874 = vunpack.c.h.b16 %v1707
    %v1875 = vunpack.c.l.b16 %v1708
    %v1876 = vunpack.c.h.b16 %v1708
    %v1877 = vunpack.c.l.b16 %v1709
    %v1878 = vunpack.c.h.b16 %v1709
    %v1879 = vunpack.c.l.b16 %v1710
    %v1880 = vunpack.c.h.b16 %v1710
    %v1881 = vunpack.c.l.b16 %v1711
    %v1882 = vunpack.c.h.b16 %v1711
    %v1883 = vunpack.c.l.b16 %v1712
    %v1884 = vunpack.c.h.b16 %v1712
    %v1885 = vunpack.c.l.b16 %v1713
    %v1886 = vunpack.c.h.b16 %v1713
    %v1887 = vunpack.c.l.b16 %v1714
    %v1888 = vunpack.c.h.b16 %v1714
    %v1889 = vunpack.c.l.b16 %v1715
    %v1890 = vunpack.c.h.b16 %v1715
    %v1891 = vunpack.c.l.b16 %v1716
    %v1892 = vunpack.c.h.b16 %v1716
    %v1893 = vunpack.c.l.b16 %v1717
    %v1894 = vunpack.c.h.b16 %v1717
    %v1895 = vunpack.c.l.b16 %v1718
    %v1896 = vunpack.c.h.b16 %v1718
    %v1897 = vunpack.c.l.b16 %v1719
    %v1898 = vunpack.c.h.b16 %v1719
    %v1899 = vunpack.c.l.b16 %v1720
    %v1900 = vunpack.c.h.b16 %v1720
    %v1901 = vunpack.c.l.b16 %v1721
    %v1902 = vunpack.c.h.b16 %v1721
    %v1903 = vunpack.c.l.b16 %v1722
    %v1904 = vunpack.c.h.b16 %v1722
    %v1905 = vunpack.c.l.b16 %v1723
    %v1906 = vunpack.c.h.b16 %v1723
    %v1907 = vunpack.c.l.b16 %v1724
    %v1908 = vunpack.c.h.b16 %v1724
    %v1909 = vunpack.c.l.b16 %v1725
    %v1910 = vunpack.c.h.b16 %v1725
    %v1911 = vunpack.c.l.b16 %v1726
    %v1912 = vunpack.c.h.b16 %v1726
    %v1913 = vunpack.c.l.b16 %v1727
    %v1914 = vunpack.c.h.b16 %v1727
    %v1915 = vunpack.c.l.b16 %v1728
    %v1916 = vunpack.c.h.b16 %v1728
    %v1917 = vunpack.c.l.b16 %v1729
    %v1918 = vunpack.c.h.b16 %v1729
    %v1919 = vunpack.c.l.b16 %v1730
    %v1920 = vunpack.c.h.b16 %v1730
    %v1921 = vunpack.c.l.b16 %v1731
    %v1922 = vunpack.c.h.b16 %v1731
    %v1923 = vunpack.c.l.b16 %v1732
    %v1924 = vunpack.c.h.b16 %v1732
    %v1925 = vunpack.c.l.b16 %v1733
    %v1926 = vunpack.c.h.b16 %v1733
    %v1927 = vunpack.c.l.b16 %v1734
    %v1928 = vunpack.c.h.b16 %v1734
    %v1929 = vunpack.c.l.b16 %v1735
    %v1930 = vunpack.c.h.b16 %v1735
    %v1931 = vunpack.c.l.b16 %v1736
    %v1932 = vunpack.c.h.b16 %v1736
    %v1933 = vunpack.c.l.b16 %v1737
    %v1934 = vunpack.c.h.b16 %v1737
    %v1935 = vunpack.c.l.b16 %v1738
    %v1936 = vunpack.c.h.b16 %v1738
    %v1937 = vunpack.c.l.b16 %v1739
    %v1938 = vunpack.c.h.b16 %v1739
    %v1939 = vunpack.c.l.b16 %v1740
    %v1940 = vunpack.c.h.b16 %v1740
    %v1941 = vunpack.c.l.b16 %v1741
    %v1942 = vunpack.c.h.b16 %v1741
    %v1943 = vunpack.c.l.b16 %v1742
    %v1944 = vunpack.c.h.b16 %v1742
    %v1945 = vunpack.c.l.b16 %v1743
    %v1946 = vunpack.c.h.b16 %v1743
    %v1947 = vunpack.c.l.b16 %v1744
    %v1948 = vunpack.c.h.b16 %v1744
    %v1949 = vunpack.c.l.b16 %v1745
    %v1950 = vunpack.c.h.b16 %v1745
    %v1951 = vunpack.c.l.b16 %v1746
    %v1952 = vunpack.c.h.b16 %v1746
    %v1953 = vunpack.c.l.b16 %v1747
    %v1954 = vunpack.c.h.b16 %v1747
    %v1955 = vunpack.c.l.b16 %v1748
    %v1956 = vunpack.c.h.b16 %v1748
    %v1957 = vpack.c.b16 %v1831, %v1829
    %v1958 = vpack.c.b16 %v1832, %v1830
    %v1959 = vpack.c.b16 %v1835, %v1833
    %v1960 = vpack.c.b16 %v1836, %v1834
    %v1961 = vpack.c.b16 %v1839, %v1837
    %v1962 = vpack.c.b16 %v1840, %v1838
    %v1963 = vpack.c.b16 %v1843, %v1841
    %v1964 = vpack.c.b16 %v1844, %v1842
    %v1965 = vpack.c.b16 %v1847, %v1845
    %v1966 = vpack.c.b16 %v1848, %v1846
    %v1967 = vpack.c.b16 %v1851, %v1849
    %v1968 = vpack.c.b16 %v1852, %v1850
    %v1969 = vpack.c.b16 %v1855, %v1853
    %v1970 = vpack.c.b16 %v1856, %v1854
    %v1971 = vpack.c.b16 %v1859, %v1857
    %v1972 = vpack.c.b16 %v1860, %v1858
    %v1973 = vpack.c.b16 %v1863, %v1861
    %v1974 = vpack.c.b16 %v1864, %v1862
    %v1975 = vpack.c.b16 %v1867, %v1865
    %v1976 = vpack.c.b16 %v1868, %v1866
    %v1977 = vpack.c.b16 %v1871, %v1869
    %v1978 = vpack.c.b16 %v1872, %v1870
    %v1979 = vpack.c.b16 %v1875, %v1873
    %v1980 = vpack.c.b16 %v1876, %v1874
    %v1981 = vpack.c.b16 %v1879, %v1877
    %v1982 = vpack.c.b16 %v1880, %v1878
    %v1983 = vpack.c.b16 %v1883, %v1881
    %v1984 = vpack.c.b16 %v1884, %v1882
    %v1985 = vpack.c.b16 %v1887, %v1885
    %v1986 = vpack.c.b16 %v1888, %v1886
    %v1987 = vpack.c.b16 %v1891, %v1889
    %v1988 = vpack.c.b16 %v1892, %v1890
    %v1989 = vpack.c.b16 %v1895, %v1893
    %v1990 = vpack.c.b16 %v1896, %v1894
    %v1991 = vpack.c.b16 %v1899, %v1897
    %v1992 = vpack.c.b16 %v1900, %v1898
    %v1993 = vpack.c.b16 %v1903, %v1901
    %v1994 = vpack.c.b16 %v1904, %v1902
    %v1995 = vpack.c.b16 %v1907, %v1905
    %v1996 = vpack.c.b16 %v1908, %v1906
    %v1997 = vpack.c.b16 %v1911, %v1909
    %v1998 = vpack.c.b16 %v1912, %v1910
    %v1999 = vpack.c.b16 %v1915, %v1913
    %v2000 = vpack.c.b16 %v1916, %v1914
    %v2001 = vpack.c.b16 %v1919, %v1917
    %v2002 = vpack.c.b16 %v1920, %v1918
    %v2003 = vpack.c.b16 %v1923, %v1921
    %v2004 = vpack.c.b16 %v1924, %v1922
    %v2005 = vpack.c.b16 %v1927, %v1925
    %v2006 = vpack.c.b16 %v1928, %v1926
    %v2007 = vpack.c.b16 %v1931, %v1929
    %v2008 = vpack.c.b16 %v1932, %v1930
    %v2009 = vpack.c.b16 %v1935, %v1933
    %v2010 = vpack.c.b16 %v1936, %v1934
    %v2011 = vpack.c.b16 %v1939, %v1937
    %v2012 = vpack.c.b16 %v1940, %v1938
    %v2013 = vpack.c.b16 %v1943, %v1941
    %v2014 = vpack.c.b16 %v1944, %v1942
    %v2015 = vpack.c.b16 %v1947, %v1945
    %v2016 = vpack.c.b16 %v1948, %v1946
    %v2017 = vpack.c.b16 %v1951, %v1949
    %v2018 = vpack.c.b16 %v1952, %v1950
    %v2019 = vpack.c.b16 %v1955, %v1953
    %v2020 = vpack.c.b16 %v1956, %v1954
    %2085 = vmatprep.subr.bf16.mxu0 %v1958
    %2086 = vmatpush1.bf16.msra.mxu0 %v1957
    %2087 = vmatprep.subr.bf16.mxu0 %v1960
    %2088 = vmatpush1.bf16.msra.mxu0 %v1959
    %2089 = vmatprep.subr.bf16.mxu0 %v1962
    %2090 = vmatpush1.bf16.msra.mxu0 %v1961
    %2091 = vmatprep.subr.bf16.mxu0 %v1964
    %2092 = vmatpush1.bf16.msra.mxu0 %v1963
    %2093 = vmatprep.subr.bf16.mxu0 %v1966
    %2094 = vmatpush1.bf16.msra.mxu0 %v1965
    %2095 = vmatprep.subr.bf16.mxu0 %v1968
    %2096 = vmatpush1.bf16.msra.mxu0 %v1967
    %2097 = vmatprep.subr.bf16.mxu0 %v1970
    %2098 = vmatpush1.bf16.msra.mxu0 %v1969
    %2099 = vmatprep.subr.bf16.mxu0 %v1972
    %2100 = vmatpush1.bf16.msra.mxu0 %v1971
    %2101 = vmatprep.subr.bf16.mxu0 %v1974
    %2102 = vmatpush1.bf16.msra.mxu0 %v1973
    %2103 = vmatprep.subr.bf16.mxu0 %v1976
    %2104 = vmatpush1.bf16.msra.mxu0 %v1975
    %2105 = vmatprep.subr.bf16.mxu0 %v1978
    %2106 = vmatpush1.bf16.msra.mxu0 %v1977
    %2107 = vmatprep.subr.bf16.mxu0 %v1980
    %2108 = vmatpush1.bf16.msra.mxu0 %v1979
    %2109 = vmatprep.subr.bf16.mxu0 %v1982
    %2110 = vmatpush1.bf16.msra.mxu0 %v1981
    %2111 = vmatprep.subr.bf16.mxu0 %v1984
    %2112 = vmatpush1.bf16.msra.mxu0 %v1983
    %2113 = vmatprep.subr.bf16.mxu0 %v1986
    %2114 = vmatpush1.bf16.msra.mxu0 %v1985
    %2115 = vmatprep.subr.bf16.mxu0 %v1988
    %2116 = vmatpush1.bf16.msra.mxu0 %v1987
    %2117 = vmatprep.mubr.bf16.mxu0 %v1750
    %2118 = vmatmul.mubr.bf16.gmra.mrb[0].mxu0 %v1749
    %v2119 = vpop.f32.mrb[0].mxu0
    %v2120 = vadd.f32 %v1758, %v2119
    %v2121 = vpop.f32.mrb[0].mxu0
    %v2122 = vadd.f32 %v1762, %v2121
    %v2123 = vpop.f32.mrb[0].mxu0
    %v2124 = vpop.f32.mrb[0].mxu0
    %2125 = vdwg.mxu0
    %2126 = vmatprep.subr.bf16.mxu0 %v1990
    %2127 = vmatpush1.bf16.msra.mxu0 %v1989
    %2128 = vmatprep.subr.bf16.mxu0 %v1992
    %2129 = vmatpush1.bf16.msra.mxu0 %v1991
    %2130 = vmatprep.subr.bf16.mxu0 %v1994
    %2131 = vmatpush1.bf16.msra.mxu0 %v1993
    %2132 = vmatprep.subr.bf16.mxu0 %v1996
    %2133 = vmatpush1.bf16.msra.mxu0 %v1995
    %2134 = vmatprep.subr.bf16.mxu0 %v1998
    %2135 = vmatpush1.bf16.msra.mxu0 %v1997
    %2136 = vmatprep.subr.bf16.mxu0 %v2000
    %2137 = vmatpush1.bf16.msra.mxu0 %v1999
    %2138 = vmatprep.subr.bf16.mxu0 %v2002
    %2139 = vmatpush1.bf16.msra.mxu0 %v2001
    %2140 = vmatprep.subr.bf16.mxu0 %v2004
    %2141 = vmatpush1.bf16.msra.mxu0 %v2003
    %2142 = vmatprep.subr.bf16.mxu0 %v2006
    %2143 = vmatpush1.bf16.msra.mxu0 %v2005
    %2144 = vmatprep.subr.bf16.mxu0 %v2008
    %2145 = vmatpush1.bf16.msra.mxu0 %v2007
    %2146 = vmatprep.subr.bf16.mxu0 %v2010
    %2147 = vmatpush1.bf16.msra.mxu0 %v2009
    %2148 = vmatprep.subr.bf16.mxu0 %v2012
    %2149 = vmatpush1.bf16.msra.mxu0 %v2011
    %2150 = vmatprep.subr.bf16.mxu0 %v2014
    %2151 = vmatpush1.bf16.msra.mxu0 %v2013
    %2152 = vmatprep.subr.bf16.mxu0 %v2016
    %2153 = vmatpush1.bf16.msra.mxu0 %v2015
    %2154 = vmatprep.subr.bf16.mxu0 %v2018
    %2155 = vmatpush1.bf16.msra.mxu0 %v2017
    %2156 = vmatprep.subr.bf16.mxu0 %v2020
    %2157 = vmatpush1.bf16.msra.mxu0 %v2019
    %2158 = vmatprep.mubr.bf16.mxu0 %v1752
    %2159 = vmatmul.mubr.bf16.gmra.mrb[0].mxu0 %v1751
    %v2160 = vpop.f32.mrb[0].mxu0
    %v2161 = vadd.f32 %v2120, %v2160
    %v2162 = vpop.f32.mrb[0].mxu0
    %v2163 = vadd.f32 %v2122, %v2162
    %v2164 = vpop.f32.mrb[0].mxu0
    %v2165 = vpop.f32.mrb[0].mxu0
    %2166 = vdwg.mxu0
    %v2167 = vmax.f32 %v2161, 0.0
    %v2168 = vmax.f32 %v2163, 0.0
    %v2169 = vld [vmem:[%s25] sm:$0xff]
    %v2170 = vld [vmem:[%s25 + $0x8] sm:$0xff]
    %v2171 = vld [vmem:[%s25 + $0x10] sm:$0xff]
    %v2172 = vld [vmem:[%s25 + $0x18] sm:$0xff]
    %v2173 = vld [vmem:[%s25 + $0x20] sm:$0xff]
    %v2174 = vld [vmem:[%s25 + $0x28] sm:$0xff]
    %v2175 = vld [vmem:[%s25 + $0x30] sm:$0xff]
    %v2176 = vld [vmem:[%s25 + $0x38] sm:$0xff]
    %v2177 = vld [vmem:[%s25 + $0x40] sm:$0xff]
    %v2178 = vld [vmem:[%s25 + $0x48] sm:$0xff]
    %v2179 = vld [vmem:[%s25 + $0x50] sm:$0xff]
    %v2180 = vld [vmem:[%s25 + $0x58] sm:$0xff]
    %v2181 = vld [vmem:[%s25 + $0x60] sm:$0xff]
    %v2182 = vld [vmem:[%s25 + $0x68] sm:$0xff]
    %v2183 = vld [vmem:[%s25 + $0x70] sm:$0xff]
    %v2184 = vld [vmem:[%s25 + $0x78] sm:$0xff]
    %v2185 = vld [vmem:[%s25 + $0x80] sm:$0xff]
    %v2186 = vld [vmem:[%s25 + $0x88] sm:$0xff]
    %v2187 = vld [vmem:[%s25 + $0x90] sm:$0xff]
    %v2188 = vld [vmem:[%s25 + $0x98] sm:$0xff]
    %v2189 = vld [vmem:[%s25 + $0xa0] sm:$0xff]
    %v2190 = vld [vmem:[%s25 + $0xa8] sm:$0xff]
    %v2191 = vld [vmem:[%s25 + $0xb0] sm:$0xff]
    %v2192 = vld [vmem:[%s25 + $0xb8] sm:$0xff]
    %v2193 = vld [vmem:[%s25 + $0xc0] sm:$0xff]
    %v2194 = vld [vmem:[%s25 + $0xc8] sm:$0xff]
    %v2195 = vld [vmem:[%s25 + $0xd0] sm:$0xff]
    %v2196 = vld [vmem:[%s25 + $0xd8] sm:$0xff]
    %v2197 = vld [vmem:[%s25 + $0xe0] sm:$0xff]
    %v2198 = vld [vmem:[%s25 + $0xe8] sm:$0xff]
    %v2199 = vld [vmem:[%s25 + $0xf0] sm:$0xff]
    %v2200 = vld [vmem:[%s25 + $0xf8] sm:$0xff]
    %v2201 = vld [vmem:[%s27] sm:$0xff]
    %v2202 = vld [vmem:[%s27 + $0x8] sm:$0xff]
    %v2203 = vld [vmem:[%s27 + $0x10] sm:$0xff]
    %v2204 = vld [vmem:[%s27 + $0x18] sm:$0xff]
    %v2205 = vsel %vm841, %v2167, 0.0
    %v2206 = vrot.slane %v2205, 4
    %v2207 = vadd.f32 %v2205, %v2206
    %v2208 = vrot.slane %v2207, 2
    %v2209 = vadd.f32 %v2207, %v2208
    %v2210 = vrot.slane %v2209, 1
    %v2211 = vadd.f32 %v2209, %v2210
    %v2212 = vsel %vm841, %v2168, 0.0
    %v2213 = vrot.slane %v2212, 4
    %v2214 = vadd.f32 %v2212, %v2213
    %v2215 = vrot.slane %v2214, 2
    %v2216 = vadd.f32 %v2214, %v2215
    %v2217 = vrot.slane %v2216, 1
    %v2218 = vadd.f32 %v2216, %v2217
    %2219 = vmatprep.subr.mxu0 0.0
    %2220 = vmatpush1.msra.mxu0 %v2169
    %2221 = vmatprep.subr.mxu0 0.0
    %2222 = vmatpush1.msra.mxu0 %v2170
    %2223 = vmatprep.subr.mxu0 0.0
    %2224 = vmatpush1.msra.mxu0 %v2171
    %2225 = vmatprep.subr.mxu0 0.0
    %2226 = vmatpush1.msra.mxu0 %v2172
    %2227 = vmatprep.subr.mxu0 0.0
    %2228 = vmatpush1.msra.mxu0 %v2173
    %2229 = vmatprep.subr.mxu0 0.0
    %2230 = vmatpush1.msra.mxu0 %v2174
    %2231 = vmatprep.subr.mxu0 0.0
    %2232 = vmatpush1.msra.mxu0 %v2175
    %2233 = vmatprep.subr.mxu0 0.0
    %2234 = vmatpush1.msra.mxu0 %v2176
    %2235 = vmatprep.subr.mxu0 0.0
    %2236 = vmatpush1.msra.mxu0 %v2177
    %2237 = vmatprep.subr.mxu0 0.0
    %2238 = vmatpush1.msra.mxu0 %v2178
    %2239 = vmatprep.subr.mxu0 0.0
    %2240 = vmatpush1.msra.mxu0 %v2179
    %2241 = vmatprep.subr.mxu0 0.0
    %2242 = vmatpush1.msra.mxu0 %v2180
    %2243 = vmatprep.subr.mxu0 0.0
    %2244 = vmatpush1.msra.mxu0 %v2181
    %2245 = vmatprep.subr.mxu0 0.0
    %2246 = vmatpush1.msra.mxu0 %v2182
    %2247 = vmatprep.subr.mxu0 0.0
    %2248 = vmatpush1.msra.mxu0 %v2183
    %2249 = vmatprep.subr.mxu0 0.0
    %2250 = vmatpush1.msra.mxu0 %v2184
    %2251 = vmatprep.subr.mxu0 0.0
    %2252 = vmatpush1.msra.mxu0 %v2185
    %2253 = vmatprep.subr.mxu0 0.0
    %2254 = vmatpush1.msra.mxu0 %v2186
    %2255 = vmatprep.subr.mxu0 0.0
    %2256 = vmatpush1.msra.mxu0 %v2187
    %2257 = vmatprep.subr.mxu0 0.0
    %2258 = vmatpush1.msra.mxu0 %v2188
    %2259 = vmatprep.subr.mxu0 0.0
    %2260 = vmatpush1.msra.mxu0 %v2189
    %2261 = vmatprep.subr.mxu0 0.0
    %2262 = vmatpush1.msra.mxu0 %v2190
    %2263 = vmatprep.subr.mxu0 0.0
    %2264 = vmatpush1.msra.mxu0 %v2191
    %2265 = vmatprep.subr.mxu0 0.0
    %2266 = vmatpush1.msra.mxu0 %v2192
    %2267 = vmatprep.subr.mxu0 0.0
    %2268 = vmatpush1.msra.mxu0 %v2193
    %2269 = vmatprep.subr.mxu0 0.0
    %2270 = vmatpush1.msra.mxu0 %v2194
    %2271 = vmatprep.subr.mxu0 0.0
    %2272 = vmatpush1.msra.mxu0 %v2195
    %2273 = vmatprep.subr.mxu0 0.0
    %2274 = vmatpush1.msra.mxu0 %v2196
    %2275 = vmatprep.subr.mxu0 0.0
    %2276 = vmatpush1.msra.mxu0 %v2197
    %2277 = vmatprep.subr.mxu0 0.0
    %2278 = vmatpush1.msra.mxu0 %v2198
    %2279 = vmatprep.subr.mxu0 0.0
    %2280 = vmatpush1.msra.mxu0 %v2199
    %2281 = vmatprep.subr.mxu0 0.0
    %2282 = vmatpush1.msra.mxu0 %v2200
    %2283 = vmatprep.mubr.f32.mxu0 %v2218
    %2284 = vmatmul.mubr.f32.gmra.mrb[0].mxu0 %v2211
    %v2285 = vpop.f32.mrb[0].mxu0
    %v2286 = vadd.f32 0.0, %v2285
    %v2287 = vpop.f32.mrb[0].mxu0
    %2288 = vdwg.mxu0
    %v2289 = vmul.f32 %v2286, 0.03125
    %vm2290 = vcmask 130048
    %v2292 = vsel %vm2290, %v2289, 0
    %2294 = vmatprep.subr.mxu0 %v2202
    %2295 = vmatpush1.msra.mxu0 %v2201
    %2296 = vmatprep.subr.mxu0 %v2204
    %2297 = vmatpush1.msra.mxu0 %v2203
    %2298 = vmatprep.subr.mxu0 0.0
    %2299 = vmatpush1.msra.mxu0 0.0
    %2300 = vmatprep.subr.mxu0 0.0
    %2301 = vmatpush1.msra.mxu0 0.0
    %2302 = vmatprep.subr.mxu0 0.0
    %2303 = vmatpush1.msra.mxu0 0.0
    %2304 = vmatprep.subr.mxu0 0.0
    %2305 = vmatpush1.msra.mxu0 0.0
    %2306 = vmatprep.subr.mxu0 0.0
    %2307 = vmatpush1.msra.mxu0 0.0
    %2308 = vmatprep.subr.mxu0 0.0
    %2309 = vmatpush1.msra.mxu0 0.0
    %2310 = vmatprep.subr.mxu0 0.0
    %2311 = vmatpush1.msra.mxu0 0.0
    %2312 = vmatprep.subr.mxu0 0.0
    %2313 = vmatpush1.msra.mxu0 0.0
    %2314 = vmatprep.subr.mxu0 0.0
    %2315 = vmatpush1.msra.mxu0 0.0
    %2316 = vmatprep.subr.mxu0 0.0
    %2317 = vmatpush1.msra.mxu0 0.0
    %2318 = vmatprep.subr.mxu0 0.0
    %2319 = vmatpush1.msra.mxu0 0.0
    %2320 = vmatprep.subr.mxu0 0.0
    %2321 = vmatpush1.msra.mxu0 0.0
    %2322 = vmatprep.subr.mxu0 0.0
    %2323 = vmatpush1.msra.mxu0 0.0
    %2324 = vmatprep.subr.mxu0 0.0
    %2325 = vmatpush1.msra.mxu0 0.0
    %2326 = vmatprep.subr.mxu0 0.0
    %2327 = vmatpush1.msra.mxu0 0.0
    %2328 = vmatprep.subr.mxu0 0.0
    %2329 = vmatpush1.msra.mxu0 0.0
    %2330 = vmatprep.subr.mxu0 0.0
    %2331 = vmatpush1.msra.mxu0 0.0
    %2332 = vmatprep.subr.mxu0 0.0
    %2333 = vmatpush1.msra.mxu0 0.0
    %2334 = vmatprep.subr.mxu0 0.0
    %2335 = vmatpush1.msra.mxu0 0.0
    %2336 = vmatprep.subr.mxu0 0.0
    %2337 = vmatpush1.msra.mxu0 0.0
    %2338 = vmatprep.subr.mxu0 0.0
    %2339 = vmatpush1.msra.mxu0 0.0
    %2340 = vmatprep.subr.mxu0 0.0
    %2341 = vmatpush1.msra.mxu0 0.0
    %2342 = vmatprep.subr.mxu0 0.0
    %2343 = vmatpush1.msra.mxu0 0.0
    %2344 = vmatprep.subr.mxu0 0.0
    %2345 = vmatpush1.msra.mxu0 0.0
    %2346 = vmatprep.subr.mxu0 0.0
    %2347 = vmatpush1.msra.mxu0 0.0
    %2348 = vmatprep.subr.mxu0 0.0
    %2349 = vmatpush1.msra.mxu0 0.0
    %2350 = vmatprep.subr.mxu0 0.0
    %2351 = vmatpush1.msra.mxu0 0.0
    %2352 = vmatprep.subr.mxu0 0.0
    %2353 = vmatpush1.msra.mxu0 0.0
    %2354 = vmatprep.subr.mxu0 0.0
    %2355 = vmatpush1.msra.mxu0 0.0
    %2356 = vmatprep.subr.mxu0 0.0
    %2357 = vmatpush1.msra.mxu0 0.0
    %2358 = vmatprep.mubr.f32.mxu0 0.0
    %2359 = vmatmul.mubr.f32.gmra.mrb[0].mxu0 %v2292
    %v2360 = vpop.f32.mrb[0].mxu0
    %v2361 = vadd.f32 0.0, %v2360
    %v2362 = vpop.f32.mrb[0].mxu0
    %v2363 = vadd.f32 0.0, %v2362
    %2364 = vdwg.mxu0
    %v2365 = vlaneseq
    %v2366 = vshrl.u32 %v2365, 7
    %v2367 = vsub.s32 0, %v2366
    %v2368 = vrot.slane %v2361, %v2367
    %v2369 = vlaneseq
    %v2370 = vshrl.u32 %v2369, 7
    %v2371 = vsub.s32 0, %v2370
    %v2372 = vrot.slane %v2363, %v2371
    %v2373 = vsub.f32 %v2167, %v2368
    %v2374 = vsub.f32 %v2168, %v2372
    %v2375 = vmul.f32 %v2373, %v2373
    %v2376 = vmul.f32 %v2374, %v2374
    %v2377 = vsel %vm841, %v2375, 0.0
    %v2378 = vrot.slane %v2377, 4
    %v2379 = vadd.f32 %v2377, %v2378
    %v2380 = vrot.slane %v2379, 2
    %v2381 = vadd.f32 %v2379, %v2380
    %v2382 = vrot.slane %v2381, 1
    %v2383 = vadd.f32 %v2381, %v2382
    %v2384 = vsel %vm841, %v2376, 0.0
    %v2385 = vrot.slane %v2384, 4
    %v2386 = vadd.f32 %v2384, %v2385
    %v2387 = vrot.slane %v2386, 2
    %v2388 = vadd.f32 %v2386, %v2387
    %v2389 = vrot.slane %v2388, 1
    %v2390 = vadd.f32 %v2388, %v2389
    %2391 = vmatprep.subr.mxu0 0.0
    %2392 = vmatpush1.msra.mxu0 %v2169
    %2393 = vmatprep.subr.mxu0 0.0
    %2394 = vmatpush1.msra.mxu0 %v2170
    %2395 = vmatprep.subr.mxu0 0.0
    %2396 = vmatpush1.msra.mxu0 %v2171
    %2397 = vmatprep.subr.mxu0 0.0
    %2398 = vmatpush1.msra.mxu0 %v2172
    %2399 = vmatprep.subr.mxu0 0.0
    %2400 = vmatpush1.msra.mxu0 %v2173
    %2401 = vmatprep.subr.mxu0 0.0
    %2402 = vmatpush1.msra.mxu0 %v2174
    %2403 = vmatprep.subr.mxu0 0.0
    %2404 = vmatpush1.msra.mxu0 %v2175
    %2405 = vmatprep.subr.mxu0 0.0
    %2406 = vmatpush1.msra.mxu0 %v2176
    %2407 = vmatprep.subr.mxu0 0.0
    %2408 = vmatpush1.msra.mxu0 %v2177
    %2409 = vmatprep.subr.mxu0 0.0
    %2410 = vmatpush1.msra.mxu0 %v2178
    %2411 = vmatprep.subr.mxu0 0.0
    %2412 = vmatpush1.msra.mxu0 %v2179
    %2413 = vmatprep.subr.mxu0 0.0
    %2414 = vmatpush1.msra.mxu0 %v2180
    %2415 = vmatprep.subr.mxu0 0.0
    %2416 = vmatpush1.msra.mxu0 %v2181
    %2417 = vmatprep.subr.mxu0 0.0
    %2418 = vmatpush1.msra.mxu0 %v2182
    %2419 = vmatprep.subr.mxu0 0.0
    %2420 = vmatpush1.msra.mxu0 %v2183
    %2421 = vmatprep.subr.mxu0 0.0
    %2422 = vmatpush1.msra.mxu0 %v2184
    %2423 = vmatprep.subr.mxu0 0.0
    %2424 = vmatpush1.msra.mxu0 %v2185
    %2425 = vmatprep.subr.mxu0 0.0
    %2426 = vmatpush1.msra.mxu0 %v2186
    %2427 = vmatprep.subr.mxu0 0.0
    %2428 = vmatpush1.msra.mxu0 %v2187
    %2429 = vmatprep.subr.mxu0 0.0
    %2430 = vmatpush1.msra.mxu0 %v2188
    %2431 = vmatprep.subr.mxu0 0.0
    %2432 = vmatpush1.msra.mxu0 %v2189
    %2433 = vmatprep.subr.mxu0 0.0
    %2434 = vmatpush1.msra.mxu0 %v2190
    %2435 = vmatprep.subr.mxu0 0.0
    %2436 = vmatpush1.msra.mxu0 %v2191
    %2437 = vmatprep.subr.mxu0 0.0
    %2438 = vmatpush1.msra.mxu0 %v2192
    %2439 = vmatprep.subr.mxu0 0.0
    %2440 = vmatpush1.msra.mxu0 %v2193
    %2441 = vmatprep.subr.mxu0 0.0
    %2442 = vmatpush1.msra.mxu0 %v2194
    %2443 = vmatprep.subr.mxu0 0.0
    %2444 = vmatpush1.msra.mxu0 %v2195
    %2445 = vmatprep.subr.mxu0 0.0
    %2446 = vmatpush1.msra.mxu0 %v2196
    %2447 = vmatprep.subr.mxu0 0.0
    %2448 = vmatpush1.msra.mxu0 %v2197
    %2449 = vmatprep.subr.mxu0 0.0
    %2450 = vmatpush1.msra.mxu0 %v2198
    %2451 = vmatprep.subr.mxu0 0.0
    %2452 = vmatpush1.msra.mxu0 %v2199
    %2453 = vmatprep.subr.mxu0 0.0
    %2454 = vmatpush1.msra.mxu0 %v2200
    %2455 = vmatprep.mubr.f32.mxu0 %v2390
    %2456 = vmatmul.mubr.f32.gmra.mrb[0].mxu0 %v2383
    %v2457 = vpop.f32.mrb[0].mxu0
    %v2458 = vadd.f32 0.0, %v2457
    %v2459 = vpop.f32.mrb[0].mxu0
    %2460 = vdwg.mxu0
    %v2461 = vmul.f32 %v2458, 0.03125
    %v2462 = vld [vmem:[#allocation13] sm:$0x1]
    %v2463 = vadd.f32 %v2461, 1e-05
    %v2464 = vrsqrt.pop %v2463
    %v2465 = vmul.f32 %v2462, %v2464
    %v2467 = vsel %vm2290, %v2465, 0
    %2469 = vmatprep.subr.mxu0 %v2202
    %2470 = vmatpush1.msra.mxu0 %v2201
    %2471 = vmatprep.subr.mxu0 %v2204
    %2472 = vmatpush1.msra.mxu0 %v2203
    %2473 = vmatprep.subr.mxu0 0.0
    %2474 = vmatpush1.msra.mxu0 0.0
    %2475 = vmatprep.subr.mxu0 0.0
    %2476 = vmatpush1.msra.mxu0 0.0
    %2477 = vmatprep.subr.mxu0 0.0
    %2478 = vmatpush1.msra.mxu0 0.0
    %2479 = vmatprep.subr.mxu0 0.0
    %2480 = vmatpush1.msra.mxu0 0.0
    %2481 = vmatprep.subr.mxu0 0.0
    %2482 = vmatpush1.msra.mxu0 0.0
    %2483 = vmatprep.subr.mxu0 0.0
    %2484 = vmatpush1.msra.mxu0 0.0
    %2485 = vmatprep.subr.mxu0 0.0
    %2486 = vmatpush1.msra.mxu0 0.0
    %2487 = vmatprep.subr.mxu0 0.0
    %2488 = vmatpush1.msra.mxu0 0.0
    %2489 = vmatprep.subr.mxu0 0.0
    %2490 = vmatpush1.msra.mxu0 0.0
    %2491 = vmatprep.subr.mxu0 0.0
    %2492 = vmatpush1.msra.mxu0 0.0
    %2493 = vmatprep.subr.mxu0 0.0
    %2494 = vmatpush1.msra.mxu0 0.0
    %2495 = vmatprep.subr.mxu0 0.0
    %2496 = vmatpush1.msra.mxu0 0.0
    %2497 = vmatprep.subr.mxu0 0.0
    %2498 = vmatpush1.msra.mxu0 0.0
    %2499 = vmatprep.subr.mxu0 0.0
    %2500 = vmatpush1.msra.mxu0 0.0
    %2501 = vmatprep.subr.mxu0 0.0
    %2502 = vmatpush1.msra.mxu0 0.0
    %2503 = vmatprep.subr.mxu0 0.0
    %2504 = vmatpush1.msra.mxu0 0.0
    %2505 = vmatprep.subr.mxu0 0.0
    %2506 = vmatpush1.msra.mxu0 0.0
    %2507 = vmatprep.subr.mxu0 0.0
    %2508 = vmatpush1.msra.mxu0 0.0
    %2509 = vmatprep.subr.mxu0 0.0
    %2510 = vmatpush1.msra.mxu0 0.0
    %2511 = vmatprep.subr.mxu0 0.0
    %2512 = vmatpush1.msra.mxu0 0.0
    %2513 = vmatprep.subr.mxu0 0.0
    %2514 = vmatpush1.msra.mxu0 0.0
    %2515 = vmatprep.subr.mxu0 0.0
    %2516 = vmatpush1.msra.mxu0 0.0
    %2517 = vmatprep.subr.mxu0 0.0
    %2518 = vmatpush1.msra.mxu0 0.0
    %2519 = vmatprep.subr.mxu0 0.0
    %2520 = vmatpush1.msra.mxu0 0.0
    %2521 = vmatprep.subr.mxu0 0.0
    %2522 = vmatpush1.msra.mxu0 0.0
    %2523 = vmatprep.subr.mxu0 0.0
    %2524 = vmatpush1.msra.mxu0 0.0
    %2525 = vmatprep.subr.mxu0 0.0
    %2526 = vmatpush1.msra.mxu0 0.0
    %2527 = vmatprep.subr.mxu0 0.0
    %2528 = vmatpush1.msra.mxu0 0.0
    %2529 = vmatprep.subr.mxu0 0.0
    %2530 = vmatpush1.msra.mxu0 0.0
    %2531 = vmatprep.subr.mxu0 0.0
    %2532 = vmatpush1.msra.mxu0 0.0
    %2533 = vmatprep.mubr.f32.mxu0 0.0
    %2534 = vmatmul.mubr.f32.gmra.mrb[0].mxu0 %v2467
    %v2535 = vpop.f32.mrb[0].mxu0
    %v2536 = vadd.f32 0.0, %v2535
    %v2537 = vpop.f32.mrb[0].mxu0
    %v2538 = vadd.f32 0.0, %v2537
    %2539 = vdwg.mxu0
    %v2540 = vlaneseq
    %v2541 = vshrl.u32 %v2540, 7
    %v2542 = vsub.s32 0, %v2541
    %v2543 = vrot.slane %v2536, %v2542
    %v2544 = vlaneseq
    %v2545 = vshrl.u32 %v2544, 7
    %v2546 = vsub.s32 0, %v2545
    %v2547 = vrot.slane %v2538, %v2546
    %v2548 = vmul.f32 %v2373, %v2543
    %v2549 = vmul.f32 %v2374, %v2547
    %v2550 = vld [vmem:[#allocation14] sm:$0x1]
    %v2552 = vsel %vm2290, %v2550, 0
    %2554 = vmatprep.subr.mxu0 %v2202
    %2555 = vmatpush1.msra.mxu0 %v2201
    %2556 = vmatprep.subr.mxu0 %v2204
    %2557 = vmatpush1.msra.mxu0 %v2203
    %2558 = vmatprep.subr.mxu0 0.0
    %2559 = vmatpush1.msra.mxu0 0.0
    %2560 = vmatprep.subr.mxu0 0.0
    %2561 = vmatpush1.msra.mxu0 0.0
    %2562 = vmatprep.subr.mxu0 0.0
    %2563 = vmatpush1.msra.mxu0 0.0
    %2564 = vmatprep.subr.mxu0 0.0
    %2565 = vmatpush1.msra.mxu0 0.0
    %2566 = vmatprep.subr.mxu0 0.0
    %2567 = vmatpush1.msra.mxu0 0.0
    %2568 = vmatprep.subr.mxu0 0.0
    %2569 = vmatpush1.msra.mxu0 0.0
    %2570 = vmatprep.subr.mxu0 0.0
    %2571 = vmatpush1.msra.mxu0 0.0
    %2572 = vmatprep.subr.mxu0 0.0
    %2573 = vmatpush1.msra.mxu0 0.0
    %2574 = vmatprep.subr.mxu0 0.0
    %2575 = vmatpush1.msra.mxu0 0.0
    %2576 = vmatprep.subr.mxu0 0.0
    %2577 = vmatpush1.msra.mxu0 0.0
    %2578 = vmatprep.subr.mxu0 0.0
    %2579 = vmatpush1.msra.mxu0 0.0
    %2580 = vmatprep.subr.mxu0 0.0
    %2581 = vmatpush1.msra.mxu0 0.0
    %2582 = vmatprep.subr.mxu0 0.0
    %2583 = vmatpush1.msra.mxu0 0.0
    %2584 = vmatprep.subr.mxu0 0.0
    %2585 = vmatpush1.msra.mxu0 0.0
    %2586 = vmatprep.subr.mxu0 0.0
    %2587 = vmatpush1.msra.mxu0 0.0
    %2588 = vmatprep.subr.mxu0 0.0
    %2589 = vmatpush1.msra.mxu0 0.0
    %2590 = vmatprep.subr.mxu0 0.0
    %2591 = vmatpush1.msra.mxu0 0.0
    %2592 = vmatprep.subr.mxu0 0.0
    %2593 = vmatpush1.msra.mxu0 0.0
    %2594 = vmatprep.subr.mxu0 0.0
    %2595 = vmatpush1.msra.mxu0 0.0
    %2596 = vmatprep.subr.mxu0 0.0
    %2597 = vmatpush1.msra.mxu0 0.0
    %2598 = vmatprep.subr.mxu0 0.0
    %2599 = vmatpush1.msra.mxu0 0.0
    %2600 = vmatprep.subr.mxu0 0.0
    %2601 = vmatpush1.msra.mxu0 0.0
    %2602 = vmatprep.subr.mxu0 0.0
    %2603 = vmatpush1.msra.mxu0 0.0
    %2604 = vmatprep.subr.mxu0 0.0
    %2605 = vmatpush1.msra.mxu0 0.0
    %2606 = vmatprep.subr.mxu0 0.0
    %2607 = vmatpush1.msra.mxu0 0.0
    %2608 = vmatprep.subr.mxu0 0.0
    %2609 = vmatpush1.msra.mxu0 0.0
    %2610 = vmatprep.subr.mxu0 0.0
    %2611 = vmatpush1.msra.mxu0 0.0
    %2612 = vmatprep.subr.mxu0 0.0
    %2613 = vmatpush1.msra.mxu0 0.0
    %2614 = vmatprep.subr.mxu0 0.0
    %2615 = vmatpush1.msra.mxu0 0.0
    %2616 = vmatprep.subr.mxu0 0.0
    %2617 = vmatpush1.msra.mxu0 0.0
    %2618 = vmatprep.mubr.f32.mxu0 0.0
    %2619 = vmatmul.mubr.f32.gmra.mrb[0].mxu0 %v2552
    %v2620 = vpop.f32.mrb[0].mxu0
    %v2621 = vadd.f32 0.0, %v2620
    %v2622 = vpop.f32.mrb[0].mxu0
    %v2623 = vadd.f32 0.0, %v2622
    %2624 = vdwg.mxu0
    %v2625 = vlaneseq
    %v2626 = vshrl.u32 %v2625, 7
    %v2627 = vsub.s32 0, %v2626
    %v2628 = vrot.slane %v2621, %v2627
    %v2629 = vlaneseq
    %v2630 = vshrl.u32 %v2629, 7
    %v2631 = vsub.s32 0, %v2630
    %v2632 = vrot.slane %v2623, %v2631
    %v2633 = vadd.f32 %v2548, %v2628
    %v2634 = vadd.f32 %v2549, %v2632
    %v2635 = vld [vmem:[%s29] sm:$0xf]
    %v2636 = vld [vmem:[%s29 + $0x4] sm:$0xf]
    %v2637 = vld [vmem:[%s29 + $0x8] sm:$0xf]
    %v2638 = vld [vmem:[%s29 + $0xc] sm:$0xf]
    %v2639 = vld [vmem:[%s29 + $0x10] sm:$0xf]
    %v2640 = vld [vmem:[%s29 + $0x14] sm:$0xf]
    %v2641 = vld [vmem:[%s29 + $0x18] sm:$0xf]
    %v2642 = vld [vmem:[%s29 + $0x1c] sm:$0xf]
    %v2643 = vld [vmem:[%s29 + $0x20] sm:$0xf]
    %v2644 = vld [vmem:[%s29 + $0x24] sm:$0xf]
    %v2645 = vld [vmem:[%s29 + $0x28] sm:$0xf]
    %v2646 = vld [vmem:[%s29 + $0x2c] sm:$0xf]
    %v2647 = vld [vmem:[%s29 + $0x30] sm:$0xf]
    %v2648 = vld [vmem:[%s29 + $0x34] sm:$0xf]
    %v2649 = vld [vmem:[%s29 + $0x38] sm:$0xf]
    %v2650 = vld [vmem:[%s29 + $0x3c] sm:$0xf]
    %v2651 = vld [vmem:[%s29 + $0x40] sm:$0xf]
    %v2652 = vld [vmem:[%s29 + $0x44] sm:$0xf]
    %v2653 = vld [vmem:[%s29 + $0x48] sm:$0xf]
    %v2654 = vld [vmem:[%s29 + $0x4c] sm:$0xf]
    %v2655 = vld [vmem:[%s29 + $0x50] sm:$0xf]
    %v2656 = vld [vmem:[%s29 + $0x54] sm:$0xf]
    %v2657 = vld [vmem:[%s29 + $0x58] sm:$0xf]
    %v2658 = vld [vmem:[%s29 + $0x5c] sm:$0xf]
    %v2659 = vld [vmem:[%s29 + $0x60] sm:$0xf]
    %v2660 = vld [vmem:[%s29 + $0x64] sm:$0xf]
    %v2661 = vld [vmem:[%s29 + $0x68] sm:$0xf]
    %v2662 = vld [vmem:[%s29 + $0x6c] sm:$0xf]
    %v2663 = vld [vmem:[%s29 + $0x70] sm:$0xf]
    %v2664 = vld [vmem:[%s29 + $0x74] sm:$0xf]
    %v2665 = vld [vmem:[%s29 + $0x78] sm:$0xf]
    %v2666 = vld [vmem:[%s29 + $0x7c] sm:$0xf]
    %v2667 = vpack.c.bf16 %v2633, %v2633
    %v2668 = vpack.c.bf16 %v2634, %v2634
    %v2669 = vld [vmem:[#allocation16] sm:$0x1]
    %v2671 = vlaneseq
    %v2672 = vshrl.u32 %v2671, 7
    %v2673 = vsub.s32 0, %v2672
    %v2674 = vrot.slane %v2669, %v2673
    %v2708 = vunpack.c.l.b16 %v2635
    %v2709 = vunpack.c.l.b16 %v2636
    %v2710 = vunpack.c.l.b16 %v2637
    %v2711 = vunpack.c.l.b16 %v2638
    %v2712 = vunpack.c.l.b16 %v2639
    %v2713 = vunpack.c.l.b16 %v2640
    %v2714 = vunpack.c.l.b16 %v2641
    %v2715 = vunpack.c.l.b16 %v2642
    %v2716 = vunpack.c.l.b16 %v2643
    %v2717 = vunpack.c.l.b16 %v2644
    %v2718 = vunpack.c.l.b16 %v2645
    %v2719 = vunpack.c.l.b16 %v2646
    %v2720 = vunpack.c.l.b16 %v2647
    %v2721 = vunpack.c.l.b16 %v2648
    %v2722 = vunpack.c.l.b16 %v2649
    %v2723 = vunpack.c.l.b16 %v2650
    %v2724 = vunpack.c.l.b16 %v2651
    %v2725 = vunpack.c.l.b16 %v2652
    %v2726 = vunpack.c.l.b16 %v2653
    %v2727 = vunpack.c.l.b16 %v2654
    %v2728 = vunpack.c.l.b16 %v2655
    %v2729 = vunpack.c.l.b16 %v2656
    %v2730 = vunpack.c.l.b16 %v2657
    %v2731 = vunpack.c.l.b16 %v2658
    %v2732 = vunpack.c.l.b16 %v2659
    %v2733 = vunpack.c.l.b16 %v2660
    %v2734 = vunpack.c.l.b16 %v2661
    %v2735 = vunpack.c.l.b16 %v2662
    %v2736 = vunpack.c.l.b16 %v2663
    %v2737 = vunpack.c.l.b16 %v2664
    %v2738 = vunpack.c.l.b16 %v2665
    %v2739 = vunpack.c.l.b16 %v2666
    %v2740 = vpack.c.b16 %v2709, %v2708
    %v2741 = vpack.c.b16 %v2711, %v2710
    %v2742 = vpack.c.b16 %v2713, %v2712
    %v2743 = vpack.c.b16 %v2715, %v2714
    %v2744 = vpack.c.b16 %v2717, %v2716
    %v2745 = vpack.c.b16 %v2719, %v2718
    %v2746 = vpack.c.b16 %v2721, %v2720
    %v2747 = vpack.c.b16 %v2723, %v2722
    %v2748 = vpack.c.b16 %v2725, %v2724
    %v2749 = vpack.c.b16 %v2727, %v2726
    %v2750 = vpack.c.b16 %v2729, %v2728
    %v2751 = vpack.c.b16 %v2731, %v2730
    %v2752 = vpack.c.b16 %v2733, %v2732
    %v2753 = vpack.c.b16 %v2735, %v2734
    %v2754 = vpack.c.b16 %v2737, %v2736
    %v2755 = vpack.c.b16 %v2739, %v2738
    %2772 = vmatprep.subr.bf16.mxu0 0
    %2773 = vmatpush1.bf16.msra.mxu0 %v2740
    %2774 = vmatprep.subr.bf16.mxu0 0
    %2775 = vmatpush1.bf16.msra.mxu0 %v2741
    %2776 = vmatprep.subr.bf16.mxu0 0
    %2777 = vmatpush1.bf16.msra.mxu0 %v2742
    %2778 = vmatprep.subr.bf16.mxu0 0
    %2779 = vmatpush1.bf16.msra.mxu0 %v2743
    %2780 = vmatprep.subr.bf16.mxu0 0
    %2781 = vmatpush1.bf16.msra.mxu0 %v2744
    %2782 = vmatprep.subr.bf16.mxu0 0
    %2783 = vmatpush1.bf16.msra.mxu0 %v2745
    %2784 = vmatprep.subr.bf16.mxu0 0
    %2785 = vmatpush1.bf16.msra.mxu0 %v2746
    %2786 = vmatprep.subr.bf16.mxu0 0
    %2787 = vmatpush1.bf16.msra.mxu0 %v2747
    %2788 = vmatprep.subr.bf16.mxu0 0
    %2789 = vmatpush1.bf16.msra.mxu0 %v2748
    %2790 = vmatprep.subr.bf16.mxu0 0
    %2791 = vmatpush1.bf16.msra.mxu0 %v2749
    %2792 = vmatprep.subr.bf16.mxu0 0
    %2793 = vmatpush1.bf16.msra.mxu0 %v2750
    %2794 = vmatprep.subr.bf16.mxu0 0
    %2795 = vmatpush1.bf16.msra.mxu0 %v2751
    %2796 = vmatprep.subr.bf16.mxu0 0
    %2797 = vmatpush1.bf16.msra.mxu0 %v2752
    %2798 = vmatprep.subr.bf16.mxu0 0
    %2799 = vmatpush1.bf16.msra.mxu0 %v2753
    %2800 = vmatprep.subr.bf16.mxu0 0
    %2801 = vmatpush1.bf16.msra.mxu0 %v2754
    %2802 = vmatprep.subr.bf16.mxu0 0
    %2803 = vmatpush1.bf16.msra.mxu0 %v2755
    %2804 = vmatprep.mubr.bf16.mxu0 %v2668
    %2805 = vmatmul.mubr.bf16.gmra.mrb[0].mxu0 %v2667
    %v2806 = vpop.f32.mrb[0].mxu0
    %v2807 = vadd.f32 %v2674, %v2806
    %v2808 = vpop.f32.mrb[0].mxu0
    %v2809 = vpop.f32.mrb[0].mxu0
    %v2810 = vpop.f32.mrb[0].mxu0
    %2811 = vdwg.mxu0
    %v2812 = vld [vmem:[%s33] sm:$0xf]
    %v2813 = vld [vmem:[%s33 + $0x4] sm:$0xf]
    %v2814 = vld [vmem:[%s33 + $0x8] sm:$0xf]
    %v2815 = vld [vmem:[%s33 + $0xc] sm:$0xf]
    %v2816 = vld [vmem:[%s33 + $0x10] sm:$0xf]
    %v2817 = vld [vmem:[%s33 + $0x14] sm:$0xf]
    %v2818 = vld [vmem:[%s33 + $0x18] sm:$0xf]
    %v2819 = vld [vmem:[%s33 + $0x1c] sm:$0xf]
    %v2820 = vld [vmem:[%s33 + $0x20] sm:$0xf]
    %v2821 = vld [vmem:[%s33 + $0x24] sm:$0xf]
    %v2822 = vld [vmem:[%s33 + $0x28] sm:$0xf]
    %v2823 = vld [vmem:[%s33 + $0x2c] sm:$0xf]
    %v2824 = vld [vmem:[%s33 + $0x30] sm:$0xf]
    %v2825 = vld [vmem:[%s33 + $0x34] sm:$0xf]
    %v2826 = vld [vmem:[%s33 + $0x38] sm:$0xf]
    %v2827 = vld [vmem:[%s33 + $0x3c] sm:$0xf]
    %v2828 = vld [vmem:[%s33 + $0x40] sm:$0xf]
    %v2829 = vld [vmem:[%s33 + $0x44] sm:$0xf]
    %v2830 = vld [vmem:[%s33 + $0x48] sm:$0xf]
    %v2831 = vld [vmem:[%s33 + $0x4c] sm:$0xf]
    %v2832 = vld [vmem:[%s33 + $0x50] sm:$0xf]
    %v2833 = vld [vmem:[%s33 + $0x54] sm:$0xf]
    %v2834 = vld [vmem:[%s33 + $0x58] sm:$0xf]
    %v2835 = vld [vmem:[%s33 + $0x5c] sm:$0xf]
    %v2836 = vld [vmem:[%s33 + $0x60] sm:$0xf]
    %v2837 = vld [vmem:[%s33 + $0x64] sm:$0xf]
    %v2838 = vld [vmem:[%s33 + $0x68] sm:$0xf]
    %v2839 = vld [vmem:[%s33 + $0x6c] sm:$0xf]
    %v2840 = vld [vmem:[%s33 + $0x70] sm:$0xf]
    %v2841 = vld [vmem:[%s33 + $0x74] sm:$0xf]
    %v2842 = vld [vmem:[%s33 + $0x78] sm:$0xf]
    %v2843 = vld [vmem:[%s33 + $0x7c] sm:$0xf]
    %v2844 = vld [vmem:[#allocation17] sm:$0x1]
    %v2846 = vlaneseq
    %v2847 = vshrl.u32 %v2846, 7
    %v2848 = vsub.s32 0, %v2847
    %v2849 = vrot.slane %v2844, %v2848
    %v2883 = vunpack.c.l.b16 %v2812
    %v2884 = vunpack.c.l.b16 %v2813
    %v2885 = vunpack.c.l.b16 %v2814
    %v2886 = vunpack.c.l.b16 %v2815
    %v2887 = vunpack.c.l.b16 %v2816
    %v2888 = vunpack.c.l.b16 %v2817
    %v2889 = vunpack.c.l.b16 %v2818
    %v2890 = vunpack.c.l.b16 %v2819
    %v2891 = vunpack.c.l.b16 %v2820
    %v2892 = vunpack.c.l.b16 %v2821
    %v2893 = vunpack.c.l.b16 %v2822
    %v2894 = vunpack.c.l.b16 %v2823
    %v2895 = vunpack.c.l.b16 %v2824
    %v2896 = vunpack.c.l.b16 %v2825
    %v2897 = vunpack.c.l.b16 %v2826
    %v2898 = vunpack.c.l.b16 %v2827
    %v2899 = vunpack.c.l.b16 %v2828
    %v2900 = vunpack.c.l.b16 %v2829
    %v2901 = vunpack.c.l.b16 %v2830
    %v2902 = vunpack.c.l.b16 %v2831
    %v2903 = vunpack.c.l.b16 %v2832
    %v2904 = vunpack.c.l.b16 %v2833
    %v2905 = vunpack.c.l.b16 %v2834
    %v2906 = vunpack.c.l.b16 %v2835
    %v2907 = vunpack.c.l.b16 %v2836
    %v2908 = vunpack.c.l.b16 %v2837
    %v2909 = vunpack.c.l.b16 %v2838
    %v2910 = vunpack.c.l.b16 %v2839
    %v2911 = vunpack.c.l.b16 %v2840
    %v2912 = vunpack.c.l.b16 %v2841
    %v2913 = vunpack.c.l.b16 %v2842
    %v2914 = vunpack.c.l.b16 %v2843
    %v2915 = vpack.c.b16 %v2884, %v2883
    %v2916 = vpack.c.b16 %v2886, %v2885
    %v2917 = vpack.c.b16 %v2888, %v2887
    %v2918 = vpack.c.b16 %v2890, %v2889
    %v2919 = vpack.c.b16 %v2892, %v2891
    %v2920 = vpack.c.b16 %v2894, %v2893
    %v2921 = vpack.c.b16 %v2896, %v2895
    %v2922 = vpack.c.b16 %v2898, %v2897
    %v2923 = vpack.c.b16 %v2900, %v2899
    %v2924 = vpack.c.b16 %v2902, %v2901
    %v2925 = vpack.c.b16 %v2904, %v2903
    %v2926 = vpack.c.b16 %v2906, %v2905
    %v2927 = vpack.c.b16 %v2908, %v2907
    %v2928 = vpack.c.b16 %v2910, %v2909
    %v2929 = vpack.c.b16 %v2912, %v2911
    %v2930 = vpack.c.b16 %v2914, %v2913
    %2947 = vmatprep.subr.bf16.mxu0 0
    %2948 = vmatpush1.bf16.msra.mxu0 %v2915
    %2949 = vmatprep.subr.bf16.mxu0 0
    %2950 = vmatpush1.bf16.msra.mxu0 %v2916
    %2951 = vmatprep.subr.bf16.mxu0 0
    %2952 = vmatpush1.bf16.msra.mxu0 %v2917
    %2953 = vmatprep.subr.bf16.mxu0 0
    %2954 = vmatpush1.bf16.msra.mxu0 %v2918
    %2955 = vmatprep.subr.bf16.mxu0 0
    %2956 = vmatpush1.bf16.msra.mxu0 %v2919
    %2957 = vmatprep.subr.bf16.mxu0 0
    %2958 = vmatpush1.bf16.msra.mxu0 %v2920
    %2959 = vmatprep.subr.bf16.mxu0 0
    %2960 = vmatpush1.bf16.msra.mxu0 %v2921
    %2961 = vmatprep.subr.bf16.mxu0 0
    %2962 = vmatpush1.bf16.msra.mxu0 %v2922
    %2963 = vmatprep.subr.bf16.mxu0 0
    %2964 = vmatpush1.bf16.msra.mxu0 %v2923
    %2965 = vmatprep.subr.bf16.mxu0 0
    %2966 = vmatpush1.bf16.msra.mxu0 %v2924
    %2967 = vmatprep.subr.bf16.mxu0 0
    %2968 = vmatpush1.bf16.msra.mxu0 %v2925
    %2969 = vmatprep.subr.bf16.mxu0 0
    %2970 = vmatpush1.bf16.msra.mxu0 %v2926
    %2971 = vmatprep.subr.bf16.mxu0 0
    %2972 = vmatpush1.bf16.msra.mxu0 %v2927
    %2973 = vmatprep.subr.bf16.mxu0 0
    %2974 = vmatpush1.bf16.msra.mxu0 %v2928
    %2975 = vmatprep.subr.bf16.mxu0 0
    %2976 = vmatpush1.bf16.msra.mxu0 %v2929
    %2977 = vmatprep.subr.bf16.mxu0 0
    %2978 = vmatpush1.bf16.msra.mxu0 %v2930
    %2979 = vmatprep.mubr.bf16.mxu0 %v2668
    %2980 = vmatmul.mubr.bf16.gmra.mrb[0].mxu0 %v2667
    %v2981 = vpop.f32.mrb[0].mxu0
    %v2982 = vadd.f32 %v2849, %v2981
    %v2983 = vpop.f32.mrb[0].mxu0
    %v2984 = vpop.f32.mrb[0].mxu0
    %v2985 = vpop.f32.mrb[0].mxu0
    %2986 = vdwg.mxu0
    %v2987 = vld [vmem:[#allocation5] sm:$0x3]
    %v2988 = vmul.f32 %v2982, 0.5
    %v2989 = vmul.f32 %v2988, 1.442695
    %v2990 = vpow.pop %v2989
    %v2991 = vmul.f32 %v2987, %v2990
    %v2992 = vadd.f32 %v2991, %v2807
    %v2993 = vld [vmem:[%s37] sm:$0xff]
    %v2994 = vpack.c.bf16 %v2992, %v2992
    %v2995 = vld [vmem:[#allocation19] sm:$0x3]
    %v2997 = vlaneseq
    %v2998 = vshrl.u32 %v2997, 7
    %v2999 = vsub.s32 0, %v2998
    %v3000 = vrot.slane %v2995, %v2999
    %v3001 = vlaneseq
    %v3002 = vshrl.u32 %v3001, 7
    %v3003 = vsub.s32 1, %v3002
    %v3004 = vrot.slane %v2995, %v3003
    %v3008 = vunpack.c.l.b16 %v2993
    %v3009 = vunpack.c.h.b16 %v2993
    %v3010 = vpack.c.b16 %v3008, %v3008
    %v3011 = vpack.c.b16 %v3009, %v3009
    %v3013 = vsel %vm1011, %v2994, 0
    %vm3015 = vcmask 1043456
    %v3017 = vsel %vm3015, %v3010, 0
    %v3020 = vsel %vm3015, %v3011, 0
    %3022 = vmatprep.subr.bf16.mxu0 %v3020
    %3023 = vmatpush1.bf16.msra.mxu0 %v3017
    %3024 = vmatprep.subr.bf16.mxu0 0
    %3025 = vmatpush1.bf16.msra.mxu0 0
    %3026 = vmatprep.subr.bf16.mxu0 0
    %3027 = vmatpush1.bf16.msra.mxu0 0
    %3028 = vmatprep.subr.bf16.mxu0 0
    %3029 = vmatpush1.bf16.msra.mxu0 0
    %3030 = vmatprep.subr.bf16.mxu0 0
    %3031 = vmatpush1.bf16.msra.mxu0 0
    %3032 = vmatprep.subr.bf16.mxu0 0
    %3033 = vmatpush1.bf16.msra.mxu0 0
    %3034 = vmatprep.subr.bf16.mxu0 0
    %3035 = vmatpush1.bf16.msra.mxu0 0
    %3036 = vmatprep.subr.bf16.mxu0 0
    %3037 = vmatpush1.bf16.msra.mxu0 0
    %3038 = vmatprep.subr.bf16.mxu0 0
    %3039 = vmatpush1.bf16.msra.mxu0 0
    %3040 = vmatprep.subr.bf16.mxu0 0
    %3041 = vmatpush1.bf16.msra.mxu0 0
    %3042 = vmatprep.subr.bf16.mxu0 0
    %3043 = vmatpush1.bf16.msra.mxu0 0
    %3044 = vmatprep.subr.bf16.mxu0 0
    %3045 = vmatpush1.bf16.msra.mxu0 0
    %3046 = vmatprep.subr.bf16.mxu0 0
    %3047 = vmatpush1.bf16.msra.mxu0 0
    %3048 = vmatprep.subr.bf16.mxu0 0
    %3049 = vmatpush1.bf16.msra.mxu0 0
    %3050 = vmatprep.subr.bf16.mxu0 0
    %3051 = vmatpush1.bf16.msra.mxu0 0
    %3052 = vmatprep.subr.bf16.mxu0 0
    %3053 = vmatpush1.bf16.msra.mxu0 0
    %3054 = vmatprep.mubr.bf16.mxu0 0
    %3055 = vmatmul.mubr.bf16.gmra.mrb[0].mxu0 %v3013
    %v3056 = vpop.f32.mrb[0].mxu0
    %v3057 = vadd.f32 %v3000, %v3056
    %v3058 = vpop.f32.mrb[0].mxu0
    %v3059 = vadd.f32 %v3004, %v3058
    %v3060 = vpop.f32.mrb[0].mxu0
    %v3061 = vpop.f32.mrb[0].mxu0
    %3062 = vdwg.mxu0
    %v3063 = vld [vmem:[%s41] sm:$0xff]
    %v3064 = vld [vmem:[%s41 + $0x8] sm:$0xff]
    %v3065 = vld [vmem:[%s41 + $0x10] sm:$0xff]
    %v3066 = vld [vmem:[%s41 + $0x18] sm:$0xff]
    %v3067 = vld [vmem:[%s41 + $0x20] sm:$0xff]
    %v3068 = vld [vmem:[%s41 + $0x28] sm:$0xff]
    %v3069 = vld [vmem:[%s41 + $0x30] sm:$0xff]
    %v3070 = vld [vmem:[%s41 + $0x38] sm:$0xff]
    %v3071 = vld [vmem:[%s41 + $0x40] sm:$0xff]
    %v3072 = vld [vmem:[%s41 + $0x48] sm:$0xff]
    %v3073 = vld [vmem:[%s41 + $0x50] sm:$0xff]
    %v3074 = vld [vmem:[%s41 + $0x58] sm:$0xff]
    %v3075 = vld [vmem:[%s41 + $0x60] sm:$0xff]
    %v3076 = vld [vmem:[%s41 + $0x68] sm:$0xff]
    %v3077 = vld [vmem:[%s41 + $0x70] sm:$0xff]
    %v3078 = vld [vmem:[%s41 + $0x78] sm:$0xff]
    %v3079 = vld [vmem:[%s41 + $0x80] sm:$0xff]
    %v3080 = vld [vmem:[%s41 + $0x88] sm:$0xff]
    %v3081 = vld [vmem:[%s41 + $0x90] sm:$0xff]
    %v3082 = vld [vmem:[%s41 + $0x98] sm:$0xff]
    %v3083 = vld [vmem:[%s41 + $0xa0] sm:$0xff]
    %v3084 = vld [vmem:[%s41 + $0xa8] sm:$0xff]
    %v3085 = vld [vmem:[%s41 + $0xb0] sm:$0xff]
    %v3086 = vld [vmem:[%s41 + $0xb8] sm:$0xff]
    %v3087 = vld [vmem:[%s41 + $0xc0] sm:$0xff]
    %v3088 = vld [vmem:[%s41 + $0xc8] sm:$0xff]
    %v3089 = vld [vmem:[%s41 + $0xd0] sm:$0xff]
    %v3090 = vld [vmem:[%s41 + $0xd8] sm:$0xff]
    %v3091 = vld [vmem:[%s41 + $0xe0] sm:$0xff]
    %v3092 = vld [vmem:[%s41 + $0xe8] sm:$0xff]
    %v3093 = vld [vmem:[%s41 + $0xf0] sm:$0xff]
    %v3094 = vld [vmem:[%s41 + $0xf8] sm:$0xff]
    %v3095 = vld [vmem:[%s41 + $0x100] sm:$0xff]
    %v3096 = vld [vmem:[%s41 + $0x108] sm:$0xff]
    %v3097 = vld [vmem:[%s41 + $0x110] sm:$0xff]
    %v3098 = vld [vmem:[%s41 + $0x118] sm:$0xff]
    %v3099 = vld [vmem:[%s41 + $0x120] sm:$0xff]
    %v3100 = vld [vmem:[%s41 + $0x128] sm:$0xff]
    %v3101 = vld [vmem:[%s41 + $0x130] sm:$0xff]
    %v3102 = vld [vmem:[%s41 + $0x138] sm:$0xff]
    %v3103 = vld [vmem:[%s41 + $0x140] sm:$0xff]
    %v3104 = vld [vmem:[%s41 + $0x148] sm:$0xff]
    %v3105 = vld [vmem:[%s41 + $0x150] sm:$0xff]
    %v3106 = vld [vmem:[%s41 + $0x158] sm:$0xff]
    %v3107 = vld [vmem:[%s41 + $0x160] sm:$0xff]
    %v3108 = vld [vmem:[%s41 + $0x168] sm:$0xff]
    %v3109 = vld [vmem:[%s41 + $0x170] sm:$0xff]
    %v3110 = vld [vmem:[%s41 + $0x178] sm:$0xff]
    %v3111 = vld [vmem:[%s41 + $0x180] sm:$0xff]
    %v3112 = vld [vmem:[%s41 + $0x188] sm:$0xff]
    %v3113 = vld [vmem:[%s41 + $0x190] sm:$0xff]
    %v3114 = vld [vmem:[%s41 + $0x198] sm:$0xff]
    %v3115 = vld [vmem:[%s41 + $0x1a0] sm:$0xff]
    %v3116 = vld [vmem:[%s41 + $0x1a8] sm:$0xff]
    %v3117 = vld [vmem:[%s41 + $0x1b0] sm:$0xff]
    %v3118 = vld [vmem:[%s41 + $0x1b8] sm:$0xff]
    %v3119 = vld [vmem:[%s41 + $0x1c0] sm:$0xff]
    %v3120 = vld [vmem:[%s41 + $0x1c8] sm:$0xff]
    %v3121 = vld [vmem:[%s41 + $0x1d0] sm:$0xff]
    %v3122 = vld [vmem:[%s41 + $0x1d8] sm:$0xff]
    %v3123 = vld [vmem:[%s41 + $0x1e0] sm:$0xff]
    %v3124 = vld [vmem:[%s41 + $0x1e8] sm:$0xff]
    %v3125 = vld [vmem:[%s41 + $0x1f0] sm:$0xff]
    %v3126 = vld [vmem:[%s41 + $0x1f8] sm:$0xff]
    %v3127 = vpack.c.bf16 %v3057, %v3057
    %v3128 = vpack.c.bf16 %v3059, %v3059
    %v3129 = vld [vmem:[%s43] sm:$0xf]
    %v3131 = vlaneseq
    %v3132 = vshrl.u32 %v3131, 7
    %v3133 = vsub.s32 0, %v3132
    %v3134 = vrot.slane %v3129, %v3133
    %v3135 = vlaneseq
    %v3136 = vshrl.u32 %v3135, 7
    %v3137 = vsub.s32 1, %v3136
    %v3138 = vrot.slane %v3129, %v3137
    %v3139 = vlaneseq
    %v3140 = vshrl.u32 %v3139, 7
    %v3141 = vsub.s32 2, %v3140
    %v3142 = vrot.slane %v3129, %v3141
    %v3143 = vlaneseq
    %v3144 = vshrl.u32 %v3143, 7
    %v3145 = vsub.s32 3, %v3144
    %v3146 = vrot.slane %v3129, %v3145
    %v3215 = vunpack.c.l.b16 %v3063
    %v3216 = vunpack.c.h.b16 %v3063
    %v3217 = vunpack.c.l.b16 %v3064
    %v3218 = vunpack.c.h.b16 %v3064
    %v3219 = vunpack.c.l.b16 %v3065
    %v3220 = vunpack.c.h.b16 %v3065
    %v3221 = vunpack.c.l.b16 %v3066
    %v3222 = vunpack.c.h.b16 %v3066
    %v3223 = vunpack.c.l.b16 %v3067
    %v3224 = vunpack.c.h.b16 %v3067
    %v3225 = vunpack.c.l.b16 %v3068
    %v3226 = vunpack.c.h.b16 %v3068
    %v3227 = vunpack.c.l.b16 %v3069
    %v3228 = vunpack.c.h.b16 %v3069
    %v3229 = vunpack.c.l.b16 %v3070
    %v3230 = vunpack.c.h.b16 %v3070
    %v3231 = vunpack.c.l.b16 %v3071
    %v3232 = vunpack.c.h.b16 %v3071
    %v3233 = vunpack.c.l.b16 %v3072
    %v3234 = vunpack.c.h.b16 %v3072
    %v3235 = vunpack.c.l.b16 %v3073
    %v3236 = vunpack.c.h.b16 %v3073
    %v3237 = vunpack.c.l.b16 %v3074
    %v3238 = vunpack.c.h.b16 %v3074
    %v3239 = vunpack.c.l.b16 %v3075
    %v3240 = vunpack.c.h.b16 %v3075
    %v3241 = vunpack.c.l.b16 %v3076
    %v3242 = vunpack.c.h.b16 %v3076
    %v3243 = vunpack.c.l.b16 %v3077
    %v3244 = vunpack.c.h.b16 %v3077
    %v3245 = vunpack.c.l.b16 %v3078
    %v3246 = vunpack.c.h.b16 %v3078
    %v3247 = vunpack.c.l.b16 %v3079
    %v3248 = vunpack.c.h.b16 %v3079
    %v3249 = vunpack.c.l.b16 %v3080
    %v3250 = vunpack.c.h.b16 %v3080
    %v3251 = vunpack.c.l.b16 %v3081
    %v3252 = vunpack.c.h.b16 %v3081
    %v3253 = vunpack.c.l.b16 %v3082
    %v3254 = vunpack.c.h.b16 %v3082
    %v3255 = vunpack.c.l.b16 %v3083
    %v3256 = vunpack.c.h.b16 %v3083
    %v3257 = vunpack.c.l.b16 %v3084
    %v3258 = vunpack.c.h.b16 %v3084
    %v3259 = vunpack.c.l.b16 %v3085
    %v3260 = vunpack.c.h.b16 %v3085
    %v3261 = vunpack.c.l.b16 %v3086
    %v3262 = vunpack.c.h.b16 %v3086
    %v3263 = vunpack.c.l.b16 %v3087
    %v3264 = vunpack.c.h.b16 %v3087
    %v3265 = vunpack.c.l.b16 %v3088
    %v3266 = vunpack.c.h.b16 %v3088
    %v3267 = vunpack.c.l.b16 %v3089
    %v3268 = vunpack.c.h.b16 %v3089
    %v3269 = vunpack.c.l.b16 %v3090
    %v3270 = vunpack.c.h.b16 %v3090
    %v3271 = vunpack.c.l.b16 %v3091
    %v3272 = vunpack.c.h.b16 %v3091
    %v3273 = vunpack.c.l.b16 %v3092
    %v3274 = vunpack.c.h.b16 %v3092
    %v3275 = vunpack.c.l.b16 %v3093
    %v3276 = vunpack.c.h.b16 %v3093
    %v3277 = vunpack.c.l.b16 %v3094
    %v3278 = vunpack.c.h.b16 %v3094
    %v3279 = vunpack.c.l.b16 %v3095
    %v3280 = vunpack.c.h.b16 %v3095
    %v3281 = vunpack.c.l.b16 %v3096
    %v3282 = vunpack.c.h.b16 %v3096
    %v3283 = vunpack.c.l.b16 %v3097
    %v3284 = vunpack.c.h.b16 %v3097
    %v3285 = vunpack.c.l.b16 %v3098
    %v3286 = vunpack.c.h.b16 %v3098
    %v3287 = vunpack.c.l.b16 %v3099
    %v3288 = vunpack.c.h.b16 %v3099
    %v3289 = vunpack.c.l.b16 %v3100
    %v3290 = vunpack.c.h.b16 %v3100
    %v3291 = vunpack.c.l.b16 %v3101
    %v3292 = vunpack.c.h.b16 %v3101
    %v3293 = vunpack.c.l.b16 %v3102
    %v3294 = vunpack.c.h.b16 %v3102
    %v3295 = vunpack.c.l.b16 %v3103
    %v3296 = vunpack.c.h.b16 %v3103
    %v3297 = vunpack.c.l.b16 %v3104
    %v3298 = vunpack.c.h.b16 %v3104
    %v3299 = vunpack.c.l.b16 %v3105
    %v3300 = vunpack.c.h.b16 %v3105
    %v3301 = vunpack.c.l.b16 %v3106
    %v3302 = vunpack.c.h.b16 %v3106
    %v3303 = vunpack.c.l.b16 %v3107
    %v3304 = vunpack.c.h.b16 %v3107
    %v3305 = vunpack.c.l.b16 %v3108
    %v3306 = vunpack.c.h.b16 %v3108
    %v3307 = vunpack.c.l.b16 %v3109
    %v3308 = vunpack.c.h.b16 %v3109
    %v3309 = vunpack.c.l.b16 %v3110
    %v3310 = vunpack.c.h.b16 %v3110
    %v3311 = vunpack.c.l.b16 %v3111
    %v3312 = vunpack.c.h.b16 %v3111
    %v3313 = vunpack.c.l.b16 %v3112
    %v3314 = vunpack.c.h.b16 %v3112
    %v3315 = vunpack.c.l.b16 %v3113
    %v3316 = vunpack.c.h.b16 %v3113
    %v3317 = vunpack.c.l.b16 %v3114
    %v3318 = vunpack.c.h.b16 %v3114
    %v3319 = vunpack.c.l.b16 %v3115
    %v3320 = vunpack.c.h.b16 %v3115
    %v3321 = vunpack.c.l.b16 %v3116
    %v3322 = vunpack.c.h.b16 %v3116
    %v3323 = vunpack.c.l.b16 %v3117
    %v3324 = vunpack.c.h.b16 %v3117
    %v3325 = vunpack.c.l.b16 %v3118
    %v3326 = vunpack.c.h.b16 %v3118
    %v3327 = vunpack.c.l.b16 %v3119
    %v3328 = vunpack.c.h.b16 %v3119
    %v3329 = vunpack.c.l.b16 %v3120
    %v3330 = vunpack.c.h.b16 %v3120
    %v3331 = vunpack.c.l.b16 %v3121
    %v3332 = vunpack.c.h.b16 %v3121
    %v3333 = vunpack.c.l.b16 %v3122
    %v3334 = vunpack.c.h.b16 %v3122
    %v3335 = vunpack.c.l.b16 %v3123
    %v3336 = vunpack.c.h.b16 %v3123
    %v3337 = vunpack.c.l.b16 %v3124
    %v3338 = vunpack.c.h.b16 %v3124
    %v3339 = vunpack.c.l.b16 %v3125
    %v3340 = vunpack.c.h.b16 %v3125
    %v3341 = vunpack.c.l.b16 %v3126
    %v3342 = vunpack.c.h.b16 %v3126
    %v3343 = vpack.c.b16 %v3219, %v3215
    %v3344 = vpack.c.b16 %v3220, %v3216
    %v3345 = vpack.c.b16 %v3221, %v3217
    %v3346 = vpack.c.b16 %v3222, %v3218
    %v3347 = vpack.c.b16 %v3227, %v3223
    %v3348 = vpack.c.b16 %v3228, %v3224
    %v3349 = vpack.c.b16 %v3229, %v3225
    %v3350 = vpack.c.b16 %v3230, %v3226
    %v3351 = vpack.c.b16 %v3235, %v3231
    %v3352 = vpack.c.b16 %v3236, %v3232
    %v3353 = vpack.c.b16 %v3237, %v3233
    %v3354 = vpack.c.b16 %v3238, %v3234
    %v3355 = vpack.c.b16 %v3243, %v3239
    %v3356 = vpack.c.b16 %v3244, %v3240
    %v3357 = vpack.c.b16 %v3245, %v3241
    %v3358 = vpack.c.b16 %v3246, %v3242
    %v3359 = vpack.c.b16 %v3251, %v3247
    %v3360 = vpack.c.b16 %v3252, %v3248
    %v3361 = vpack.c.b16 %v3253, %v3249
    %v3362 = vpack.c.b16 %v3254, %v3250
    %v3363 = vpack.c.b16 %v3259, %v3255
    %v3364 = vpack.c.b16 %v3260, %v3256
    %v3365 = vpack.c.b16 %v3261, %v3257
    %v3366 = vpack.c.b16 %v3262, %v3258
    %v3367 = vpack.c.b16 %v3267, %v3263
    %v3368 = vpack.c.b16 %v3268, %v3264
    %v3369 = vpack.c.b16 %v3269, %v3265
    %v3370 = vpack.c.b16 %v3270, %v3266
    %v3371 = vpack.c.b16 %v3275, %v3271
    %v3372 = vpack.c.b16 %v3276, %v3272
    %v3373 = vpack.c.b16 %v3277, %v3273
    %v3374 = vpack.c.b16 %v3278, %v3274
    %v3375 = vpack.c.b16 %v3283, %v3279
    %v3376 = vpack.c.b16 %v3284, %v3280
    %v3377 = vpack.c.b16 %v3285, %v3281
    %v3378 = vpack.c.b16 %v3286, %v3282
    %v3379 = vpack.c.b16 %v3291, %v3287
    %v3380 = vpack.c.b16 %v3292, %v3288
    %v3381 = vpack.c.b16 %v3293, %v3289
    %v3382 = vpack.c.b16 %v3294, %v3290
    %v3383 = vpack.c.b16 %v3299, %v3295
    %v3384 = vpack.c.b16 %v3300, %v3296
    %v3385 = vpack.c.b16 %v3301, %v3297
    %v3386 = vpack.c.b16 %v3302, %v3298
    %v3387 = vpack.c.b16 %v3307, %v3303
    %v3388 = vpack.c.b16 %v3308, %v3304
    %v3389 = vpack.c.b16 %v3309, %v3305
    %v3390 = vpack.c.b16 %v3310, %v3306
    %v3391 = vpack.c.b16 %v3315, %v3311
    %v3392 = vpack.c.b16 %v3316, %v3312
    %v3393 = vpack.c.b16 %v3317, %v3313
    %v3394 = vpack.c.b16 %v3318, %v3314
    %v3395 = vpack.c.b16 %v3323, %v3319
    %v3396 = vpack.c.b16 %v3324, %v3320
    %v3397 = vpack.c.b16 %v3325, %v3321
    %v3398 = vpack.c.b16 %v3326, %v3322
    %v3399 = vpack.c.b16 %v3331, %v3327
    %v3400 = vpack.c.b16 %v3332, %v3328
    %v3401 = vpack.c.b16 %v3333, %v3329
    %v3402 = vpack.c.b16 %v3334, %v3330
    %v3403 = vpack.c.b16 %v3339, %v3335
    %v3404 = vpack.c.b16 %v3340, %v3336
    %v3405 = vpack.c.b16 %v3341, %v3337
    %v3406 = vpack.c.b16 %v3342, %v3338
    %3471 = vmatprep.subr.bf16.mxu0 %v3344
    %3472 = vmatpush1.bf16.msra.mxu0 %v3343
    %3473 = vmatprep.subr.bf16.mxu0 %v3348
    %3474 = vmatpush1.bf16.msra.mxu0 %v3347
    %3475 = vmatprep.subr.bf16.mxu0 %v3352
    %3476 = vmatpush1.bf16.msra.mxu0 %v3351
    %3477 = vmatprep.subr.bf16.mxu0 %v3356
    %3478 = vmatpush1.bf16.msra.mxu0 %v3355
    %3479 = vmatprep.subr.bf16.mxu0 %v3360
    %3480 = vmatpush1.bf16.msra.mxu0 %v3359
    %3481 = vmatprep.subr.bf16.mxu0 %v3364
    %3482 = vmatpush1.bf16.msra.mxu0 %v3363
    %3483 = vmatprep.subr.bf16.mxu0 %v3368
    %3484 = vmatpush1.bf16.msra.mxu0 %v3367
    %3485 = vmatprep.subr.bf16.mxu0 %v3372
    %3486 = vmatpush1.bf16.msra.mxu0 %v3371
    %3487 = vmatprep.subr.bf16.mxu0 %v3376
    %3488 = vmatpush1.bf16.msra.mxu0 %v3375
    %3489 = vmatprep.subr.bf16.mxu0 %v3380
    %3490 = vmatpush1.bf16.msra.mxu0 %v3379
    %3491 = vmatprep.subr.bf16.mxu0 %v3384
    %3492 = vmatpush1.bf16.msra.mxu0 %v3383
    %3493 = vmatprep.subr.bf16.mxu0 %v3388
    %3494 = vmatpush1.bf16.msra.mxu0 %v3387
    %3495 = vmatprep.subr.bf16.mxu0 %v3392
    %3496 = vmatpush1.bf16.msra.mxu0 %v3391
    %3497 = vmatprep.subr.bf16.mxu0 %v3396
    %3498 = vmatpush1.bf16.msra.mxu0 %v3395
    %3499 = vmatprep.subr.bf16.mxu0 %v3400
    %3500 = vmatpush1.bf16.msra.mxu0 %v3399
    %3501 = vmatprep.subr.bf16.mxu0 %v3404
    %3502 = vmatpush1.bf16.msra.mxu0 %v3403
    %3503 = vmatprep.mubr.bf16.mxu0 %v3128
    %3504 = vmatmul.mubr.bf16.gmra.mrb[0].mxu0 %v3127
    %v3505 = vpop.f32.mrb[0].mxu0
    %v3506 = vadd.f32 %v3134, %v3505
    %v3507 = vpop.f32.mrb[0].mxu0
    %v3508 = vadd.f32 %v3138, %v3507
    %v3509 = vpop.f32.mrb[0].mxu0
    %v3510 = vpop.f32.mrb[0].mxu0
    %3511 = vdwg.mxu0
    %3512 = vmatprep.subr.bf16.mxu0 %v3346
    %3513 = vmatpush1.bf16.msra.mxu0 %v3345
    %3514 = vmatprep.subr.bf16.mxu0 %v3350
    %3515 = vmatpush1.bf16.msra.mxu0 %v3349
    %3516 = vmatprep.subr.bf16.mxu0 %v3354
    %3517 = vmatpush1.bf16.msra.mxu0 %v3353
    %3518 = vmatprep.subr.bf16.mxu0 %v3358
    %3519 = vmatpush1.bf16.msra.mxu0 %v3357
    %3520 = vmatprep.subr.bf16.mxu0 %v3362
    %3521 = vmatpush1.bf16.msra.mxu0 %v3361
    %3522 = vmatprep.subr.bf16.mxu0 %v3366
    %3523 = vmatpush1.bf16.msra.mxu0 %v3365
    %3524 = vmatprep.subr.bf16.mxu0 %v3370
    %3525 = vmatpush1.bf16.msra.mxu0 %v3369
    %3526 = vmatprep.subr.bf16.mxu0 %v3374
    %3527 = vmatpush1.bf16.msra.mxu0 %v3373
    %3528 = vmatprep.subr.bf16.mxu0 %v3378
    %3529 = vmatpush1.bf16.msra.mxu0 %v3377
    %3530 = vmatprep.subr.bf16.mxu0 %v3382
    %3531 = vmatpush1.bf16.msra.mxu0 %v3381
    %3532 = vmatprep.subr.bf16.mxu0 %v3386
    %3533 = vmatpush1.bf16.msra.mxu0 %v3385
    %3534 = vmatprep.subr.bf16.mxu0 %v3390
    %3535 = vmatpush1.bf16.msra.mxu0 %v3389
    %3536 = vmatprep.subr.bf16.mxu0 %v3394
    %3537 = vmatpush1.bf16.msra.mxu0 %v3393
    %3538 = vmatprep.subr.bf16.mxu0 %v3398
    %3539 = vmatpush1.bf16.msra.mxu0 %v3397
    %3540 = vmatprep.subr.bf16.mxu0 %v3402
    %3541 = vmatpush1.bf16.msra.mxu0 %v3401
    %3542 = vmatprep.subr.bf16.mxu0 %v3406
    %3543 = vmatpush1.bf16.msra.mxu0 %v3405
    %3544 = vmatprep.mubr.bf16.mxu0 %v3128
    %3545 = vmatmul.mubr.bf16.gmra.mrb[0].mxu0 %v3127
    %v3546 = vpop.f32.mrb[0].mxu0
    %v3547 = vadd.f32 %v3142, %v3546
    %v3548 = vpop.f32.mrb[0].mxu0
    %v3549 = vadd.f32 %v3146, %v3548
    %v3550 = vpop.f32.mrb[0].mxu0
    %v3551 = vpop.f32.mrb[0].mxu0
    %3552 = vdwg.mxu0
    %v3553 = vmax.f32 %v3506, 0.0
    %v3554 = vmax.f32 %v3508, 0.0
    %v3555 = vmax.f32 %v3547, 0.0
    %v3556 = vmax.f32 %v3549, 0.0
    %v3557 = vld [vmem:[%s49] sm:$0xff]
    %v3558 = vld [vmem:[%s49 + $0x8] sm:$0xff]
    %v3559 = vld [vmem:[%s49 + $0x10] sm:$0xff]
    %v3560 = vld [vmem:[%s49 + $0x18] sm:$0xff]
    %v3561 = vld [vmem:[%s49 + $0x20] sm:$0xff]
    %v3562 = vld [vmem:[%s49 + $0x28] sm:$0xff]
    %v3563 = vld [vmem:[%s49 + $0x30] sm:$0xff]
    %v3564 = vld [vmem:[%s49 + $0x38] sm:$0xff]
    %v3565 = vld [vmem:[%s49 + $0x40] sm:$0xff]
    %v3566 = vld [vmem:[%s49 + $0x48] sm:$0xff]
    %v3567 = vld [vmem:[%s49 + $0x50] sm:$0xff]
    %v3568 = vld [vmem:[%s49 + $0x58] sm:$0xff]
    %v3569 = vld [vmem:[%s49 + $0x60] sm:$0xff]
    %v3570 = vld [vmem:[%s49 + $0x68] sm:$0xff]
    %v3571 = vld [vmem:[%s49 + $0x70] sm:$0xff]
    %v3572 = vld [vmem:[%s49 + $0x78] sm:$0xff]
    %v3573 = vld [vmem:[%s49 + $0x80] sm:$0xff]
    %v3574 = vld [vmem:[%s49 + $0x88] sm:$0xff]
    %v3575 = vld [vmem:[%s49 + $0x90] sm:$0xff]
    %v3576 = vld [vmem:[%s49 + $0x98] sm:$0xff]
    %v3577 = vld [vmem:[%s49 + $0xa0] sm:$0xff]
    %v3578 = vld [vmem:[%s49 + $0xa8] sm:$0xff]
    %v3579 = vld [vmem:[%s49 + $0xb0] sm:$0xff]
    %v3580 = vld [vmem:[%s49 + $0xb8] sm:$0xff]
    %v3581 = vld [vmem:[%s49 + $0xc0] sm:$0xff]
    %v3582 = vld [vmem:[%s49 + $0xc8] sm:$0xff]
    %v3583 = vld [vmem:[%s49 + $0xd0] sm:$0xff]
    %v3584 = vld [vmem:[%s49 + $0xd8] sm:$0xff]
    %v3585 = vld [vmem:[%s49 + $0xe0] sm:$0xff]
    %v3586 = vld [vmem:[%s49 + $0xe8] sm:$0xff]
    %v3587 = vld [vmem:[%s49 + $0xf0] sm:$0xff]
    %v3588 = vld [vmem:[%s49 + $0xf8] sm:$0xff]
    %v3589 = vld [vmem:[%s49 + $0x100] sm:$0xff]
    %v3590 = vld [vmem:[%s49 + $0x108] sm:$0xff]
    %v3591 = vld [vmem:[%s49 + $0x110] sm:$0xff]
    %v3592 = vld [vmem:[%s49 + $0x118] sm:$0xff]
    %v3593 = vld [vmem:[%s49 + $0x120] sm:$0xff]
    %v3594 = vld [vmem:[%s49 + $0x128] sm:$0xff]
    %v3595 = vld [vmem:[%s49 + $0x130] sm:$0xff]
    %v3596 = vld [vmem:[%s49 + $0x138] sm:$0xff]
    %v3597 = vld [vmem:[%s49 + $0x140] sm:$0xff]
    %v3598 = vld [vmem:[%s49 + $0x148] sm:$0xff]
    %v3599 = vld [vmem:[%s49 + $0x150] sm:$0xff]
    %v3600 = vld [vmem:[%s49 + $0x158] sm:$0xff]
    %v3601 = vld [vmem:[%s49 + $0x160] sm:$0xff]
    %v3602 = vld [vmem:[%s49 + $0x168] sm:$0xff]
    %v3603 = vld [vmem:[%s49 + $0x170] sm:$0xff]
    %v3604 = vld [vmem:[%s49 + $0x178] sm:$0xff]
    %v3605 = vld [vmem:[%s49 + $0x180] sm:$0xff]
    %v3606 = vld [vmem:[%s49 + $0x188] sm:$0xff]
    %v3607 = vld [vmem:[%s49 + $0x190] sm:$0xff]
    %v3608 = vld [vmem:[%s49 + $0x198] sm:$0xff]
    %v3609 = vld [vmem:[%s49 + $0x1a0] sm:$0xff]
    %v3610 = vld [vmem:[%s49 + $0x1a8] sm:$0xff]
    %v3611 = vld [vmem:[%s49 + $0x1b0] sm:$0xff]
    %v3612 = vld [vmem:[%s49 + $0x1b8] sm:$0xff]
    %v3613 = vld [vmem:[%s49 + $0x1c0] sm:$0xff]
    %v3614 = vld [vmem:[%s49 + $0x1c8] sm:$0xff]
    %v3615 = vld [vmem:[%s49 + $0x1d0] sm:$0xff]
    %v3616 = vld [vmem:[%s49 + $0x1d8] sm:$0xff]
    %v3617 = vld [vmem:[%s49 + $0x1e0] sm:$0xff]
    %v3618 = vld [vmem:[%s49 + $0x1e8] sm:$0xff]
    %v3619 = vld [vmem:[%s49 + $0x1f0] sm:$0xff]
    %v3620 = vld [vmem:[%s49 + $0x1f8] sm:$0xff]
    %v3621 = vld [vmem:[%s51] sm:$0xff]
    %v3622 = vld [vmem:[%s51 + $0x8] sm:$0xff]
    %v3623 = vld [vmem:[%s51 + $0x10] sm:$0xff]
    %v3624 = vld [vmem:[%s51 + $0x18] sm:$0xff]
    %v3625 = vsel %vm841, %v3553, 0.0
    %v3626 = vrot.slane %v3625, 4
    %v3627 = vadd.f32 %v3625, %v3626
    %v3628 = vrot.slane %v3627, 2
    %v3629 = vadd.f32 %v3627, %v3628
    %v3630 = vrot.slane %v3629, 1
    %v3631 = vadd.f32 %v3629, %v3630
    %v3632 = vsel %vm841, %v3554, 0.0
    %v3633 = vrot.slane %v3632, 4
    %v3634 = vadd.f32 %v3632, %v3633
    %v3635 = vrot.slane %v3634, 2
    %v3636 = vadd.f32 %v3634, %v3635
    %v3637 = vrot.slane %v3636, 1
    %v3638 = vadd.f32 %v3636, %v3637
    %v3639 = vsel %vm841, %v3555, 0.0
    %v3640 = vrot.slane %v3639, 4
    %v3641 = vadd.f32 %v3639, %v3640
    %v3642 = vrot.slane %v3641, 2
    %v3643 = vadd.f32 %v3641, %v3642
    %v3644 = vrot.slane %v3643, 1
    %v3645 = vadd.f32 %v3643, %v3644
    %v3646 = vsel %vm841, %v3556, 0.0
    %v3647 = vrot.slane %v3646, 4
    %v3648 = vadd.f32 %v3646, %v3647
    %v3649 = vrot.slane %v3648, 2
    %v3650 = vadd.f32 %v3648, %v3649
    %v3651 = vrot.slane %v3650, 1
    %v3652 = vadd.f32 %v3650, %v3651
    %3653 = vmatprep.subr.mxu0 0.0
    %3654 = vmatpush1.msra.mxu0 %v3557
    %3655 = vmatprep.subr.mxu0 0.0
    %3656 = vmatpush1.msra.mxu0 %v3558
    %3657 = vmatprep.subr.mxu0 0.0
    %3658 = vmatpush1.msra.mxu0 %v3559
    %3659 = vmatprep.subr.mxu0 0.0
    %3660 = vmatpush1.msra.mxu0 %v3560
    %3661 = vmatprep.subr.mxu0 0.0
    %3662 = vmatpush1.msra.mxu0 %v3561
    %3663 = vmatprep.subr.mxu0 0.0
    %3664 = vmatpush1.msra.mxu0 %v3562
    %3665 = vmatprep.subr.mxu0 0.0
    %3666 = vmatpush1.msra.mxu0 %v3563
    %3667 = vmatprep.subr.mxu0 0.0
    %3668 = vmatpush1.msra.mxu0 %v3564
    %3669 = vmatprep.subr.mxu0 0.0
    %3670 = vmatpush1.msra.mxu0 %v3565
    %3671 = vmatprep.subr.mxu0 0.0
    %3672 = vmatpush1.msra.mxu0 %v3566
    %3673 = vmatprep.subr.mxu0 0.0
    %3674 = vmatpush1.msra.mxu0 %v3567
    %3675 = vmatprep.subr.mxu0 0.0
    %3676 = vmatpush1.msra.mxu0 %v3568
    %3677 = vmatprep.subr.mxu0 0.0
    %3678 = vmatpush1.msra.mxu0 %v3569
    %3679 = vmatprep.subr.mxu0 0.0
    %3680 = vmatpush1.msra.mxu0 %v3570
    %3681 = vmatprep.subr.mxu0 0.0
    %3682 = vmatpush1.msra.mxu0 %v3571
    %3683 = vmatprep.subr.mxu0 0.0
    %3684 = vmatpush1.msra.mxu0 %v3572
    %3685 = vmatprep.subr.mxu0 0.0
    %3686 = vmatpush1.msra.mxu0 %v3573
    %3687 = vmatprep.subr.mxu0 0.0
    %3688 = vmatpush1.msra.mxu0 %v3574
    %3689 = vmatprep.subr.mxu0 0.0
    %3690 = vmatpush1.msra.mxu0 %v3575
    %3691 = vmatprep.subr.mxu0 0.0
    %3692 = vmatpush1.msra.mxu0 %v3576
    %3693 = vmatprep.subr.mxu0 0.0
    %3694 = vmatpush1.msra.mxu0 %v3577
    %3695 = vmatprep.subr.mxu0 0.0
    %3696 = vmatpush1.msra.mxu0 %v3578
    %3697 = vmatprep.subr.mxu0 0.0
    %3698 = vmatpush1.msra.mxu0 %v3579
    %3699 = vmatprep.subr.mxu0 0.0
    %3700 = vmatpush1.msra.mxu0 %v3580
    %3701 = vmatprep.subr.mxu0 0.0
    %3702 = vmatpush1.msra.mxu0 %v3581
    %3703 = vmatprep.subr.mxu0 0.0
    %3704 = vmatpush1.msra.mxu0 %v3582
    %3705 = vmatprep.subr.mxu0 0.0
    %3706 = vmatpush1.msra.mxu0 %v3583
    %3707 = vmatprep.subr.mxu0 0.0
    %3708 = vmatpush1.msra.mxu0 %v3584
    %3709 = vmatprep.subr.mxu0 0.0
    %3710 = vmatpush1.msra.mxu0 %v3585
    %3711 = vmatprep.subr.mxu0 0.0
    %3712 = vmatpush1.msra.mxu0 %v3586
    %3713 = vmatprep.subr.mxu0 0.0
    %3714 = vmatpush1.msra.mxu0 %v3587
    %3715 = vmatprep.subr.mxu0 0.0
    %3716 = vmatpush1.msra.mxu0 %v3588
    %3717 = vmatprep.mubr.f32.mxu0 %v3638
    %3718 = vmatmul.mubr.f32.gmra.mrb[0].mxu0 %v3631
    %v3719 = vpop.f32.mrb[0].mxu0
    %v3720 = vadd.f32 0.0, %v3719
    %v3721 = vpop.f32.mrb[0].mxu0
    %3722 = vdwg.mxu0
    %3723 = vmatprep.subr.mxu0 0.0
    %3724 = vmatpush1.msra.mxu0 %v3589
    %3725 = vmatprep.subr.mxu0 0.0
    %3726 = vmatpush1.msra.mxu0 %v3590
    %3727 = vmatprep.subr.mxu0 0.0
    %3728 = vmatpush1.msra.mxu0 %v3591
    %3729 = vmatprep.subr.mxu0 0.0
    %3730 = vmatpush1.msra.mxu0 %v3592
    %3731 = vmatprep.subr.mxu0 0.0
    %3732 = vmatpush1.msra.mxu0 %v3593
    %3733 = vmatprep.subr.mxu0 0.0
    %3734 = vmatpush1.msra.mxu0 %v3594
    %3735 = vmatprep.subr.mxu0 0.0
    %3736 = vmatpush1.msra.mxu0 %v3595
    %3737 = vmatprep.subr.mxu0 0.0
    %3738 = vmatpush1.msra.mxu0 %v3596
    %3739 = vmatprep.subr.mxu0 0.0
    %3740 = vmatpush1.msra.mxu0 %v3597
    %3741 = vmatprep.subr.mxu0 0.0
    %3742 = vmatpush1.msra.mxu0 %v3598
    %3743 = vmatprep.subr.mxu0 0.0
    %3744 = vmatpush1.msra.mxu0 %v3599
    %3745 = vmatprep.subr.mxu0 0.0
    %3746 = vmatpush1.msra.mxu0 %v3600
    %3747 = vmatprep.subr.mxu0 0.0
    %3748 = vmatpush1.msra.mxu0 %v3601
    %3749 = vmatprep.subr.mxu0 0.0
    %3750 = vmatpush1.msra.mxu0 %v3602
    %3751 = vmatprep.subr.mxu0 0.0
    %3752 = vmatpush1.msra.mxu0 %v3603
    %3753 = vmatprep.subr.mxu0 0.0
    %3754 = vmatpush1.msra.mxu0 %v3604
    %3755 = vmatprep.subr.mxu0 0.0
    %3756 = vmatpush1.msra.mxu0 %v3605
    %3757 = vmatprep.subr.mxu0 0.0
    %3758 = vmatpush1.msra.mxu0 %v3606
    %3759 = vmatprep.subr.mxu0 0.0
    %3760 = vmatpush1.msra.mxu0 %v3607
    %3761 = vmatprep.subr.mxu0 0.0
    %3762 = vmatpush1.msra.mxu0 %v3608
    %3763 = vmatprep.subr.mxu0 0.0
    %3764 = vmatpush1.msra.mxu0 %v3609
    %3765 = vmatprep.subr.mxu0 0.0
    %3766 = vmatpush1.msra.mxu0 %v3610
    %3767 = vmatprep.subr.mxu0 0.0
    %3768 = vmatpush1.msra.mxu0 %v3611
    %3769 = vmatprep.subr.mxu0 0.0
    %3770 = vmatpush1.msra.mxu0 %v3612
    %3771 = vmatprep.subr.mxu0 0.0
    %3772 = vmatpush1.msra.mxu0 %v3613
    %3773 = vmatprep.subr.mxu0 0.0
    %3774 = vmatpush1.msra.mxu0 %v3614
    %3775 = vmatprep.subr.mxu0 0.0
    %3776 = vmatpush1.msra.mxu0 %v3615
    %3777 = vmatprep.subr.mxu0 0.0
    %3778 = vmatpush1.msra.mxu0 %v3616
    %3779 = vmatprep.subr.mxu0 0.0
    %3780 = vmatpush1.msra.mxu0 %v3617
    %3781 = vmatprep.subr.mxu0 0.0
    %3782 = vmatpush1.msra.mxu0 %v3618
    %3783 = vmatprep.subr.mxu0 0.0
    %3784 = vmatpush1.msra.mxu0 %v3619
    %3785 = vmatprep.subr.mxu0 0.0
    %3786 = vmatpush1.msra.mxu0 %v3620
    %3787 = vmatprep.mubr.f32.mxu0 %v3652
    %3788 = vmatmul.mubr.f32.gmra.mrb[0].mxu0 %v3645
    %v3789 = vpop.f32.mrb[0].mxu0
    %v3790 = vadd.f32 %v3720, %v3789
    %v3791 = vpop.f32.mrb[0].mxu0
    %3792 = vdwg.mxu0
    %v3793 = vmul.f32 %v3790, 0.0078125
    %v3795 = vsel %vm1011, %v3793, 0
    %3797 = vmatprep.subr.mxu0 %v3622
    %3798 = vmatpush1.msra.mxu0 %v3621
    %3799 = vmatprep.subr.mxu0 0.0
    %3800 = vmatpush1.msra.mxu0 0.0
    %3801 = vmatprep.subr.mxu0 0.0
    %3802 = vmatpush1.msra.mxu0 0.0
    %3803 = vmatprep.subr.mxu0 0.0
    %3804 = vmatpush1.msra.mxu0 0.0
    %3805 = vmatprep.subr.mxu0 0.0
    %3806 = vmatpush1.msra.mxu0 0.0
    %3807 = vmatprep.subr.mxu0 0.0
    %3808 = vmatpush1.msra.mxu0 0.0
    %3809 = vmatprep.subr.mxu0 0.0
    %3810 = vmatpush1.msra.mxu0 0.0
    %3811 = vmatprep.subr.mxu0 0.0
    %3812 = vmatpush1.msra.mxu0 0.0
    %3813 = vmatprep.subr.mxu0 0.0
    %3814 = vmatpush1.msra.mxu0 0.0
    %3815 = vmatprep.subr.mxu0 0.0
    %3816 = vmatpush1.msra.mxu0 0.0
    %3817 = vmatprep.subr.mxu0 0.0
    %3818 = vmatpush1.msra.mxu0 0.0
    %3819 = vmatprep.subr.mxu0 0.0
    %3820 = vmatpush1.msra.mxu0 0.0
    %3821 = vmatprep.subr.mxu0 0.0
    %3822 = vmatpush1.msra.mxu0 0.0
    %3823 = vmatprep.subr.mxu0 0.0
    %3824 = vmatpush1.msra.mxu0 0.0
    %3825 = vmatprep.subr.mxu0 0.0
    %3826 = vmatpush1.msra.mxu0 0.0
    %3827 = vmatprep.subr.mxu0 0.0
    %3828 = vmatpush1.msra.mxu0 0.0
    %3829 = vmatprep.subr.mxu0 0.0
    %3830 = vmatpush1.msra.mxu0 0.0
    %3831 = vmatprep.subr.mxu0 0.0
    %3832 = vmatpush1.msra.mxu0 0.0
    %3833 = vmatprep.subr.mxu0 0.0
    %3834 = vmatpush1.msra.mxu0 0.0
    %3835 = vmatprep.subr.mxu0 0.0
    %3836 = vmatpush1.msra.mxu0 0.0
    %3837 = vmatprep.subr.mxu0 0.0
    %3838 = vmatpush1.msra.mxu0 0.0
    %3839 = vmatprep.subr.mxu0 0.0
    %3840 = vmatpush1.msra.mxu0 0.0
    %3841 = vmatprep.subr.mxu0 0.0
    %3842 = vmatpush1.msra.mxu0 0.0
    %3843 = vmatprep.subr.mxu0 0.0
    %3844 = vmatpush1.msra.mxu0 0.0
    %3845 = vmatprep.subr.mxu0 0.0
    %3846 = vmatpush1.msra.mxu0 0.0
    %3847 = vmatprep.subr.mxu0 0.0
    %3848 = vmatpush1.msra.mxu0 0.0
    %3849 = vmatprep.subr.mxu0 0.0
    %3850 = vmatpush1.msra.mxu0 0.0
    %3851 = vmatprep.subr.mxu0 0.0
    %3852 = vmatpush1.msra.mxu0 0.0
    %3853 = vmatprep.subr.mxu0 0.0
    %3854 = vmatpush1.msra.mxu0 0.0
    %3855 = vmatprep.subr.mxu0 0.0
    %3856 = vmatpush1.msra.mxu0 0.0
    %3857 = vmatprep.subr.mxu0 0.0
    %3858 = vmatpush1.msra.mxu0 0.0
    %3859 = vmatprep.subr.mxu0 0.0
    %3860 = vmatpush1.msra.mxu0 0.0
    %3861 = vmatprep.mubr.f32.mxu0 0.0
    %3862 = vmatmul.mubr.f32.gmra.mrb[0].mxu0 %v3795
    %v3863 = vpop.f32.mrb[0].mxu0
    %v3864 = vadd.f32 0.0, %v3863
    %v3865 = vpop.f32.mrb[0].mxu0
    %v3866 = vadd.f32 0.0, %v3865
    %3867 = vdwg.mxu0
    %3868 = vmatprep.subr.mxu0 %v3624
    %3869 = vmatpush1.msra.mxu0 %v3623
    %3870 = vmatprep.subr.mxu0 0.0
    %3871 = vmatpush1.msra.mxu0 0.0
    %3872 = vmatprep.subr.mxu0 0.0
    %3873 = vmatpush1.msra.mxu0 0.0
    %3874 = vmatprep.subr.mxu0 0.0
    %3875 = vmatpush1.msra.mxu0 0.0
    %3876 = vmatprep.subr.mxu0 0.0
    %3877 = vmatpush1.msra.mxu0 0.0
    %3878 = vmatprep.subr.mxu0 0.0
    %3879 = vmatpush1.msra.mxu0 0.0
    %3880 = vmatprep.subr.mxu0 0.0
    %3881 = vmatpush1.msra.mxu0 0.0
    %3882 = vmatprep.subr.mxu0 0.0
    %3883 = vmatpush1.msra.mxu0 0.0
    %3884 = vmatprep.subr.mxu0 0.0
    %3885 = vmatpush1.msra.mxu0 0.0
    %3886 = vmatprep.subr.mxu0 0.0
    %3887 = vmatpush1.msra.mxu0 0.0
    %3888 = vmatprep.subr.mxu0 0.0
    %3889 = vmatpush1.msra.mxu0 0.0
    %3890 = vmatprep.subr.mxu0 0.0
    %3891 = vmatpush1.msra.mxu0 0.0
    %3892 = vmatprep.subr.mxu0 0.0
    %3893 = vmatpush1.msra.mxu0 0.0
    %3894 = vmatprep.subr.mxu0 0.0
    %3895 = vmatpush1.msra.mxu0 0.0
    %3896 = vmatprep.subr.mxu0 0.0
    %3897 = vmatpush1.msra.mxu0 0.0
    %3898 = vmatprep.subr.mxu0 0.0
    %3899 = vmatpush1.msra.mxu0 0.0
    %3900 = vmatprep.subr.mxu0 0.0
    %3901 = vmatpush1.msra.mxu0 0.0
    %3902 = vmatprep.subr.mxu0 0.0
    %3903 = vmatpush1.msra.mxu0 0.0
    %3904 = vmatprep.subr.mxu0 0.0
    %3905 = vmatpush1.msra.mxu0 0.0
    %3906 = vmatprep.subr.mxu0 0.0
    %3907 = vmatpush1.msra.mxu0 0.0
    %3908 = vmatprep.subr.mxu0 0.0
    %3909 = vmatpush1.msra.mxu0 0.0
    %3910 = vmatprep.subr.mxu0 0.0
    %3911 = vmatpush1.msra.mxu0 0.0
    %3912 = vmatprep.subr.mxu0 0.0
    %3913 = vmatpush1.msra.mxu0 0.0
    %3914 = vmatprep.subr.mxu0 0.0
    %3915 = vmatpush1.msra.mxu0 0.0
    %3916 = vmatprep.subr.mxu0 0.0
    %3917 = vmatpush1.msra.mxu0 0.0
    %3918 = vmatprep.subr.mxu0 0.0
    %3919 = vmatpush1.msra.mxu0 0.0
    %3920 = vmatprep.subr.mxu0 0.0
    %3921 = vmatpush1.msra.mxu0 0.0
    %3922 = vmatprep.subr.mxu0 0.0
    %3923 = vmatpush1.msra.mxu0 0.0
    %3924 = vmatprep.subr.mxu0 0.0
    %3925 = vmatpush1.msra.mxu0 0.0
    %3926 = vmatprep.subr.mxu0 0.0
    %3927 = vmatpush1.msra.mxu0 0.0
    %3928 = vmatprep.subr.mxu0 0.0
    %3929 = vmatpush1.msra.mxu0 0.0
    %3930 = vmatprep.subr.mxu0 0.0
    %3931 = vmatpush1.msra.mxu0 0.0
    %3932 = vmatprep.mubr.f32.mxu0 0.0
    %3933 = vmatmul.mubr.f32.gmra.mrb[0].mxu0 %v3795
    %v3934 = vpop.f32.mrb[0].mxu0
    %v3935 = vadd.f32 0.0, %v3934
    %v3936 = vpop.f32.mrb[0].mxu0
    %v3937 = vadd.f32 0.0, %v3936
    %3938 = vdwg.mxu0
    %v3939 = vlaneseq
    %v3940 = vshrl.u32 %v3939, 7
    %v3941 = vsub.s32 0, %v3940
    %v3942 = vrot.slane %v3864, %v3941
    %v3943 = vlaneseq
    %v3944 = vshrl.u32 %v3943, 7
    %v3945 = vsub.s32 0, %v3944
    %v3946 = vrot.slane %v3866, %v3945
    %v3947 = vlaneseq
    %v3948 = vshrl.u32 %v3947, 7
    %v3949 = vsub.s32 0, %v3948
    %v3950 = vrot.slane %v3935, %v3949
    %v3951 = vlaneseq
    %v3952 = vshrl.u32 %v3951, 7
    %v3953 = vsub.s32 0, %v3952
    %v3954 = vrot.slane %v3937, %v3953
    %v3955 = vsub.f32 %v3553, %v3942
    %v3956 = vsub.f32 %v3554, %v3946
    %v3957 = vsub.f32 %v3555, %v3950
    %v3958 = vsub.f32 %v3556, %v3954
    %v3959 = vmul.f32 %v3955, %v3955
    %v3960 = vmul.f32 %v3956, %v3956
    %v3961 = vmul.f32 %v3957, %v3957
    %v3962 = vmul.f32 %v3958, %v3958
    %v3963 = vsel %vm841, %v3959, 0.0
    %v3964 = vrot.slane %v3963, 4
    %v3965 = vadd.f32 %v3963, %v3964
    %v3966 = vrot.slane %v3965, 2
    %v3967 = vadd.f32 %v3965, %v3966
    %v3968 = vrot.slane %v3967, 1
    %v3969 = vadd.f32 %v3967, %v3968
    %v3970 = vsel %vm841, %v3960, 0.0
    %v3971 = vrot.slane %v3970, 4
    %v3972 = vadd.f32 %v3970, %v3971
    %v3973 = vrot.slane %v3972, 2
    %v3974 = vadd.f32 %v3972, %v3973
    %v3975 = vrot.slane %v3974, 1
    %v3976 = vadd.f32 %v3974, %v3975
    %v3977 = vsel %vm841, %v3961, 0.0
    %v3978 = vrot.slane %v3977, 4
    %v3979 = vadd.f32 %v3977, %v3978
    %v3980 = vrot.slane %v3979, 2
    %v3981 = vadd.f32 %v3979, %v3980
    %v3982 = vrot.slane %v3981, 1
    %v3983 = vadd.f32 %v3981, %v3982
    %v3984 = vsel %vm841, %v3962, 0.0
    %v3985 = vrot.slane %v3984, 4
    %v3986 = vadd.f32 %v3984, %v3985
    %v3987 = vrot.slane %v3986, 2
    %v3988 = vadd.f32 %v3986, %v3987
    %v3989 = vrot.slane %v3988, 1
    %v3990 = vadd.f32 %v3988, %v3989
    %3991 = vmatprep.subr.mxu0 0.0
    %3992 = vmatpush1.msra.mxu0 %v3557
    %3993 = vmatprep.subr.mxu0 0.0
    %3994 = vmatpush1.msra.mxu0 %v3558
    %3995 = vmatprep.subr.mxu0 0.0
    %3996 = vmatpush1.msra.mxu0 %v3559
    %3997 = vmatprep.subr.mxu0 0.0
    %3998 = vmatpush1.msra.mxu0 %v3560
    %3999 = vmatprep.subr.mxu0 0.0
    %4000 = vmatpush1.msra.mxu0 %v3561
    %4001 = vmatprep.subr.mxu0 0.0
    %4002 = vmatpush1.msra.mxu0 %v3562
    %4003 = vmatprep.subr.mxu0 0.0
    %4004 = vmatpush1.msra.mxu0 %v3563
    %4005 = vmatprep.subr.mxu0 0.0
    %4006 = vmatpush1.msra.mxu0 %v3564
    %4007 = vmatprep.subr.mxu0 0.0
    %4008 = vmatpush1.msra.mxu0 %v3565
    %4009 = vmatprep.subr.mxu0 0.0
    %4010 = vmatpush1.msra.mxu0 %v3566
    %4011 = vmatprep.subr.mxu0 0.0
    %4012 = vmatpush1.msra.mxu0 %v3567
    %4013 = vmatprep.subr.mxu0 0.0
    %4014 = vmatpush1.msra.mxu0 %v3568
    %4015 = vmatprep.subr.mxu0 0.0
    %4016 = vmatpush1.msra.mxu0 %v3569
    %4017 = vmatprep.subr.mxu0 0.0
    %4018 = vmatpush1.msra.mxu0 %v3570
    %4019 = vmatprep.subr.mxu0 0.0
    %4020 = vmatpush1.msra.mxu0 %v3571
    %4021 = vmatprep.subr.mxu0 0.0
    %4022 = vmatpush1.msra.mxu0 %v3572
    %4023 = vmatprep.subr.mxu0 0.0
    %4024 = vmatpush1.msra.mxu0 %v3573
    %4025 = vmatprep.subr.mxu0 0.0
    %4026 = vmatpush1.msra.mxu0 %v3574
    %4027 = vmatprep.subr.mxu0 0.0
    %4028 = vmatpush1.msra.mxu0 %v3575
    %4029 = vmatprep.subr.mxu0 0.0
    %4030 = vmatpush1.msra.mxu0 %v3576
    %4031 = vmatprep.subr.mxu0 0.0
    %4032 = vmatpush1.msra.mxu0 %v3577
    %4033 = vmatprep.subr.mxu0 0.0
    %4034 = vmatpush1.msra.mxu0 %v3578
    %4035 = vmatprep.subr.mxu0 0.0
    %4036 = vmatpush1.msra.mxu0 %v3579
    %4037 = vmatprep.subr.mxu0 0.0
    %4038 = vmatpush1.msra.mxu0 %v3580
    %4039 = vmatprep.subr.mxu0 0.0
    %4040 = vmatpush1.msra.mxu0 %v3581
    %4041 = vmatprep.subr.mxu0 0.0
    %4042 = vmatpush1.msra.mxu0 %v3582
    %4043 = vmatprep.subr.mxu0 0.0
    %4044 = vmatpush1.msra.mxu0 %v3583
    %4045 = vmatprep.subr.mxu0 0.0
    %4046 = vmatpush1.msra.mxu0 %v3584
    %4047 = vmatprep.subr.mxu0 0.0
    %4048 = vmatpush1.msra.mxu0 %v3585
    %4049 = vmatprep.subr.mxu0 0.0
    %4050 = vmatpush1.msra.mxu0 %v3586
    %4051 = vmatprep.subr.mxu0 0.0
    %4052 = vmatpush1.msra.mxu0 %v3587
    %4053 = vmatprep.subr.mxu0 0.0
    %4054 = vmatpush1.msra.mxu0 %v3588
    %4055 = vmatprep.mubr.f32.mxu0 %v3976
    %4056 = vmatmul.mubr.f32.gmra.mrb[0].mxu0 %v3969
    %v4057 = vpop.f32.mrb[0].mxu0
    %v4058 = vadd.f32 0.0, %v4057
    %v4059 = vpop.f32.mrb[0].mxu0
    %4060 = vdwg.mxu0
    %4061 = vmatprep.subr.mxu0 0.0
    %4062 = vmatpush1.msra.mxu0 %v3589
    %4063 = vmatprep.subr.mxu0 0.0
    %4064 = vmatpush1.msra.mxu0 %v3590
    %4065 = vmatprep.subr.mxu0 0.0
    %4066 = vmatpush1.msra.mxu0 %v3591
    %4067 = vmatprep.subr.mxu0 0.0
    %4068 = vmatpush1.msra.mxu0 %v3592
    %4069 = vmatprep.subr.mxu0 0.0
    %4070 = vmatpush1.msra.mxu0 %v3593
    %4071 = vmatprep.subr.mxu0 0.0
    %4072 = vmatpush1.msra.mxu0 %v3594
    %4073 = vmatprep.subr.mxu0 0.0
    %4074 = vmatpush1.msra.mxu0 %v3595
    %4075 = vmatprep.subr.mxu0 0.0
    %4076 = vmatpush1.msra.mxu0 %v3596
    %4077 = vmatprep.subr.mxu0 0.0
    %4078 = vmatpush1.msra.mxu0 %v3597
    %4079 = vmatprep.subr.mxu0 0.0
    %4080 = vmatpush1.msra.mxu0 %v3598
    %4081 = vmatprep.subr.mxu0 0.0
    %4082 = vmatpush1.msra.mxu0 %v3599
    %4083 = vmatprep.subr.mxu0 0.0
    %4084 = vmatpush1.msra.mxu0 %v3600
    %4085 = vmatprep.subr.mxu0 0.0
    %4086 = vmatpush1.msra.mxu0 %v3601
    %4087 = vmatprep.subr.mxu0 0.0
    %4088 = vmatpush1.msra.mxu0 %v3602
    %4089 = vmatprep.subr.mxu0 0.0
    %4090 = vmatpush1.msra.mxu0 %v3603
    %4091 = vmatprep.subr.mxu0 0.0
    %4092 = vmatpush1.msra.mxu0 %v3604
    %4093 = vmatprep.subr.mxu0 0.0
    %4094 = vmatpush1.msra.mxu0 %v3605
    %4095 = vmatprep.subr.mxu0 0.0
    %4096 = vmatpush1.msra.mxu0 %v3606
    %4097 = vmatprep.subr.mxu0 0.0
    %4098 = vmatpush1.msra.mxu0 %v3607
    %4099 = vmatprep.subr.mxu0 0.0
    %4100 = vmatpush1.msra.mxu0 %v3608
    %4101 = vmatprep.subr.mxu0 0.0
    %4102 = vmatpush1.msra.mxu0 %v3609
    %4103 = vmatprep.subr.mxu0 0.0
    %4104 = vmatpush1.msra.mxu0 %v3610
    %4105 = vmatprep.subr.mxu0 0.0
    %4106 = vmatpush1.msra.mxu0 %v3611
    %4107 = vmatprep.subr.mxu0 0.0
    %4108 = vmatpush1.msra.mxu0 %v3612
    %4109 = vmatprep.subr.mxu0 0.0
    %4110 = vmatpush1.msra.mxu0 %v3613
    %4111 = vmatprep.subr.mxu0 0.0
    %4112 = vmatpush1.msra.mxu0 %v3614
    %4113 = vmatprep.subr.mxu0 0.0
    %4114 = vmatpush1.msra.mxu0 %v3615
    %4115 = vmatprep.subr.mxu0 0.0
    %4116 = vmatpush1.msra.mxu0 %v3616
    %4117 = vmatprep.subr.mxu0 0.0
    %4118 = vmatpush1.msra.mxu0 %v3617
    %4119 = vmatprep.subr.mxu0 0.0
    %4120 = vmatpush1.msra.mxu0 %v3618
    %4121 = vmatprep.subr.mxu0 0.0
    %4122 = vmatpush1.msra.mxu0 %v3619
    %4123 = vmatprep.subr.mxu0 0.0
    %4124 = vmatpush1.msra.mxu0 %v3620
    %4125 = vmatprep.mubr.f32.mxu0 %v3990
    %4126 = vmatmul.mubr.f32.gmra.mrb[0].mxu0 %v3983
    %v4127 = vpop.f32.mrb[0].mxu0
    %v4128 = vadd.f32 %v4058, %v4127
    %v4129 = vpop.f32.mrb[0].mxu0
    %4130 = vdwg.mxu0
    %v4131 = vmul.f32 %v4128, 0.0078125
    %v4132 = vld [vmem:[%s45] sm:$0x1]
    %v4133 = vadd.f32 %v4131, 1e-05
    %v4134 = vrsqrt.pop %v4133
    %v4135 = vmul.f32 %v4132, %v4134
    %v4137 = vsel %vm1011, %v4135, 0
    %4139 = vmatprep.subr.mxu0 %v3622
    %4140 = vmatpush1.msra.mxu0 %v3621
    %4141 = vmatprep.subr.mxu0 0.0
    %4142 = vmatpush1.msra.mxu0 0.0
    %4143 = vmatprep.subr.mxu0 0.0
    %4144 = vmatpush1.msra.mxu0 0.0
    %4145 = vmatprep.subr.mxu0 0.0
    %4146 = vmatpush1.msra.mxu0 0.0
    %4147 = vmatprep.subr.mxu0 0.0
    %4148 = vmatpush1.msra.mxu0 0.0
    %4149 = vmatprep.subr.mxu0 0.0
    %4150 = vmatpush1.msra.mxu0 0.0
    %4151 = vmatprep.subr.mxu0 0.0
    %4152 = vmatpush1.msra.mxu0 0.0
    %4153 = vmatprep.subr.mxu0 0.0
    %4154 = vmatpush1.msra.mxu0 0.0
    %4155 = vmatprep.subr.mxu0 0.0
    %4156 = vmatpush1.msra.mxu0 0.0
    %4157 = vmatprep.subr.mxu0 0.0
    %4158 = vmatpush1.msra.mxu0 0.0
    %4159 = vmatprep.subr.mxu0 0.0
    %4160 = vmatpush1.msra.mxu0 0.0
    %4161 = vmatprep.subr.mxu0 0.0
    %4162 = vmatpush1.msra.mxu0 0.0
    %4163 = vmatprep.subr.mxu0 0.0
    %4164 = vmatpush1.msra.mxu0 0.0
    %4165 = vmatprep.subr.mxu0 0.0
    %4166 = vmatpush1.msra.mxu0 0.0
    %4167 = vmatprep.subr.mxu0 0.0
    %4168 = vmatpush1.msra.mxu0 0.0
    %4169 = vmatprep.subr.mxu0 0.0
    %4170 = vmatpush1.msra.mxu0 0.0
    %4171 = vmatprep.subr.mxu0 0.0
    %4172 = vmatpush1.msra.mxu0 0.0
    %4173 = vmatprep.subr.mxu0 0.0
    %4174 = vmatpush1.msra.mxu0 0.0
    %4175 = vmatprep.subr.mxu0 0.0
    %4176 = vmatpush1.msra.mxu0 0.0
    %4177 = vmatprep.subr.mxu0 0.0
    %4178 = vmatpush1.msra.mxu0 0.0
    %4179 = vmatprep.subr.mxu0 0.0
    %4180 = vmatpush1.msra.mxu0 0.0
    %4181 = vmatprep.subr.mxu0 0.0
    %4182 = vmatpush1.msra.mxu0 0.0
    %4183 = vmatprep.subr.mxu0 0.0
    %4184 = vmatpush1.msra.mxu0 0.0
    %4185 = vmatprep.subr.mxu0 0.0
    %4186 = vmatpush1.msra.mxu0 0.0
    %4187 = vmatprep.subr.mxu0 0.0
    %4188 = vmatpush1.msra.mxu0 0.0
    %4189 = vmatprep.subr.mxu0 0.0
    %4190 = vmatpush1.msra.mxu0 0.0
    %4191 = vmatprep.subr.mxu0 0.0
    %4192 = vmatpush1.msra.mxu0 0.0
    %4193 = vmatprep.subr.mxu0 0.0
    %4194 = vmatpush1.msra.mxu0 0.0
    %4195 = vmatprep.subr.mxu0 0.0
    %4196 = vmatpush1.msra.mxu0 0.0
    %4197 = vmatprep.subr.mxu0 0.0
    %4198 = vmatpush1.msra.mxu0 0.0
    %4199 = vmatprep.subr.mxu0 0.0
    %4200 = vmatpush1.msra.mxu0 0.0
    %4201 = vmatprep.subr.mxu0 0.0
    %4202 = vmatpush1.msra.mxu0 0.0
    %4203 = vmatprep.mubr.f32.mxu0 0.0
    %4204 = vmatmul.mubr.f32.gmra.mrb[0].mxu0 %v4137
    %v4205 = vpop.f32.mrb[0].mxu0
    %v4206 = vadd.f32 0.0, %v4205
    %v4207 = vpop.f32.mrb[0].mxu0
    %v4208 = vadd.f32 0.0, %v4207
    %4209 = vdwg.mxu0
    %4210 = vmatprep.subr.mxu0 %v3624
    %4211 = vmatpush1.msra.mxu0 %v3623
    %4212 = vmatprep.subr.mxu0 0.0
    %4213 = vmatpush1.msra.mxu0 0.0
    %4214 = vmatprep.subr.mxu0 0.0
    %4215 = vmatpush1.msra.mxu0 0.0
    %4216 = vmatprep.subr.mxu0 0.0
    %4217 = vmatpush1.msra.mxu0 0.0
    %4218 = vmatprep.subr.mxu0 0.0
    %4219 = vmatpush1.msra.mxu0 0.0
    %4220 = vmatprep.subr.mxu0 0.0
    %4221 = vmatpush1.msra.mxu0 0.0
    %4222 = vmatprep.subr.mxu0 0.0
    %4223 = vmatpush1.msra.mxu0 0.0
    %4224 = vmatprep.subr.mxu0 0.0
    %4225 = vmatpush1.msra.mxu0 0.0
    %4226 = vmatprep.subr.mxu0 0.0
    %4227 = vmatpush1.msra.mxu0 0.0
    %4228 = vmatprep.subr.mxu0 0.0
    %4229 = vmatpush1.msra.mxu0 0.0
    %4230 = vmatprep.subr.mxu0 0.0
    %4231 = vmatpush1.msra.mxu0 0.0
    %4232 = vmatprep.subr.mxu0 0.0
    %4233 = vmatpush1.msra.mxu0 0.0
    %4234 = vmatprep.subr.mxu0 0.0
    %4235 = vmatpush1.msra.mxu0 0.0
    %4236 = vmatprep.subr.mxu0 0.0
    %4237 = vmatpush1.msra.mxu0 0.0
    %4238 = vmatprep.subr.mxu0 0.0
    %4239 = vmatpush1.msra.mxu0 0.0
    %4240 = vmatprep.subr.mxu0 0.0
    %4241 = vmatpush1.msra.mxu0 0.0
    %4242 = vmatprep.subr.mxu0 0.0
    %4243 = vmatpush1.msra.mxu0 0.0
    %4244 = vmatprep.subr.mxu0 0.0
    %4245 = vmatpush1.msra.mxu0 0.0
    %4246 = vmatprep.subr.mxu0 0.0
    %4247 = vmatpush1.msra.mxu0 0.0
    %4248 = vmatprep.subr.mxu0 0.0
    %4249 = vmatpush1.msra.mxu0 0.0
    %4250 = vmatprep.subr.mxu0 0.0
    %4251 = vmatpush1.msra.mxu0 0.0
    %4252 = vmatprep.subr.mxu0 0.0
    %4253 = vmatpush1.msra.mxu0 0.0
    %4254 = vmatprep.subr.mxu0 0.0
    %4255 = vmatpush1.msra.mxu0 0.0
    %4256 = vmatprep.subr.mxu0 0.0
    %4257 = vmatpush1.msra.mxu0 0.0
    %4258 = vmatprep.subr.mxu0 0.0
    %4259 = vmatpush1.msra.mxu0 0.0
    %4260 = vmatprep.subr.mxu0 0.0
    %4261 = vmatpush1.msra.mxu0 0.0
    %4262 = vmatprep.subr.mxu0 0.0
    %4263 = vmatpush1.msra.mxu0 0.0
    %4264 = vmatprep.subr.mxu0 0.0
    %4265 = vmatpush1.msra.mxu0 0.0
    %4266 = vmatprep.subr.mxu0 0.0
    %4267 = vmatpush1.msra.mxu0 0.0
    %4268 = vmatprep.subr.mxu0 0.0
    %4269 = vmatpush1.msra.mxu0 0.0
    %4270 = vmatprep.subr.mxu0 0.0
    %4271 = vmatpush1.msra.mxu0 0.0
    %4272 = vmatprep.subr.mxu0 0.0
    %4273 = vmatpush1.msra.mxu0 0.0
    %4274 = vmatprep.mubr.f32.mxu0 0.0
    %4275 = vmatmul.mubr.f32.gmra.mrb[0].mxu0 %v4137
    %v4276 = vpop.f32.mrb[0].mxu0
    %v4277 = vadd.f32 0.0, %v4276
    %v4278 = vpop.f32.mrb[0].mxu0
    %v4279 = vadd.f32 0.0, %v4278
    %4280 = vdwg.mxu0
    %v4281 = vlaneseq
    %v4282 = vshrl.u32 %v4281, 7
    %v4283 = vsub.s32 0, %v4282
    %v4284 = vrot.slane %v4206, %v4283
    %v4285 = vlaneseq
    %v4286 = vshrl.u32 %v4285, 7
    %v4287 = vsub.s32 0, %v4286
    %v4288 = vrot.slane %v4208, %v4287
    %v4289 = vlaneseq
    %v4290 = vshrl.u32 %v4289, 7
    %v4291 = vsub.s32 0, %v4290
    %v4292 = vrot.slane %v4277, %v4291
    %v4293 = vlaneseq
    %v4294 = vshrl.u32 %v4293, 7
    %v4295 = vsub.s32 0, %v4294
    %v4296 = vrot.slane %v4279, %v4295
    %v4297 = vmul.f32 %v3955, %v4284
    %v4298 = vmul.f32 %v3956, %v4288
    %v4299 = vmul.f32 %v3957, %v4292
    %v4300 = vmul.f32 %v3958, %v4296
    %v4301 = vld [vmem:[%s47] sm:$0x1]
    %v4303 = vsel %vm1011, %v4301, 0
    %4305 = vmatprep.subr.mxu0 %v3622
    %4306 = vmatpush1.msra.mxu0 %v3621
    %4307 = vmatprep.subr.mxu0 0.0
    %4308 = vmatpush1.msra.mxu0 0.0
    %4309 = vmatprep.subr.mxu0 0.0
    %4310 = vmatpush1.msra.mxu0 0.0
    %4311 = vmatprep.subr.mxu0 0.0
    %4312 = vmatpush1.msra.mxu0 0.0
    %4313 = vmatprep.subr.mxu0 0.0
    %4314 = vmatpush1.msra.mxu0 0.0
    %4315 = vmatprep.subr.mxu0 0.0
    %4316 = vmatpush1.msra.mxu0 0.0
    %4317 = vmatprep.subr.mxu0 0.0
    %4318 = vmatpush1.msra.mxu0 0.0
    %4319 = vmatprep.subr.mxu0 0.0
    %4320 = vmatpush1.msra.mxu0 0.0
    %4321 = vmatprep.subr.mxu0 0.0
    %4322 = vmatpush1.msra.mxu0 0.0
    %4323 = vmatprep.subr.mxu0 0.0
    %4324 = vmatpush1.msra.mxu0 0.0
    %4325 = vmatprep.subr.mxu0 0.0
    %4326 = vmatpush1.msra.mxu0 0.0
    %4327 = vmatprep.subr.mxu0 0.0
    %4328 = vmatpush1.msra.mxu0 0.0
    %4329 = vmatprep.subr.mxu0 0.0
    %4330 = vmatpush1.msra.mxu0 0.0
    %4331 = vmatprep.subr.mxu0 0.0
    %4332 = vmatpush1.msra.mxu0 0.0
    %4333 = vmatprep.subr.mxu0 0.0
    %4334 = vmatpush1.msra.mxu0 0.0
    %4335 = vmatprep.subr.mxu0 0.0
    %4336 = vmatpush1.msra.mxu0 0.0
    %4337 = vmatprep.subr.mxu0 0.0
    %4338 = vmatpush1.msra.mxu0 0.0
    %4339 = vmatprep.subr.mxu0 0.0
    %4340 = vmatpush1.msra.mxu0 0.0
    %4341 = vmatprep.subr.mxu0 0.0
    %4342 = vmatpush1.msra.mxu0 0.0
    %4343 = vmatprep.subr.mxu0 0.0
    %4344 = vmatpush1.msra.mxu0 0.0
    %4345 = vmatprep.subr.mxu0 0.0
    %4346 = vmatpush1.msra.mxu0 0.0
    %4347 = vmatprep.subr.mxu0 0.0
    %4348 = vmatpush1.msra.mxu0 0.0
    %4349 = vmatprep.subr.mxu0 0.0
    %4350 = vmatpush1.msra.mxu0 0.0
    %4351 = vmatprep.subr.mxu0 0.0
    %4352 = vmatpush1.msra.mxu0 0.0
    %4353 = vmatprep.subr.mxu0 0.0
    %4354 = vmatpush1.msra.mxu0 0.0
    %4355 = vmatprep.subr.mxu0 0.0
    %4356 = vmatpush1.msra.mxu0 0.0
    %4357 = vmatprep.subr.mxu0 0.0
    %4358 = vmatpush1.msra.mxu0 0.0
    %4359 = vmatprep.subr.mxu0 0.0
    %4360 = vmatpush1.msra.mxu0 0.0
    %4361 = vmatprep.subr.mxu0 0.0
    %4362 = vmatpush1.msra.mxu0 0.0
    %4363 = vmatprep.subr.mxu0 0.0
    %4364 = vmatpush1.msra.mxu0 0.0
    %4365 = vmatprep.subr.mxu0 0.0
    %4366 = vmatpush1.msra.mxu0 0.0
    %4367 = vmatprep.subr.mxu0 0.0
    %4368 = vmatpush1.msra.mxu0 0.0
    %4369 = vmatprep.mubr.f32.mxu0 0.0
    %4370 = vmatmul.mubr.f32.gmra.mrb[0].mxu0 %v4303
    %v4371 = vpop.f32.mrb[0].mxu0
    %v4372 = vadd.f32 0.0, %v4371
    %v4373 = vpop.f32.mrb[0].mxu0
    %v4374 = vadd.f32 0.0, %v4373
    %4375 = vdwg.mxu0
    %4376 = vmatprep.subr.mxu0 %v3624
    %4377 = vmatpush1.msra.mxu0 %v3623
    %4378 = vmatprep.subr.mxu0 0.0
    %4379 = vmatpush1.msra.mxu0 0.0
    %4380 = vmatprep.subr.mxu0 0.0
    %4381 = vmatpush1.msra.mxu0 0.0
    %4382 = vmatprep.subr.mxu0 0.0
    %4383 = vmatpush1.msra.mxu0 0.0
    %4384 = vmatprep.subr.mxu0 0.0
    %4385 = vmatpush1.msra.mxu0 0.0
    %4386 = vmatprep.subr.mxu0 0.0
    %4387 = vmatpush1.msra.mxu0 0.0
    %4388 = vmatprep.subr.mxu0 0.0
    %4389 = vmatpush1.msra.mxu0 0.0
    %4390 = vmatprep.subr.mxu0 0.0
    %4391 = vmatpush1.msra.mxu0 0.0
    %4392 = vmatprep.subr.mxu0 0.0
    %4393 = vmatpush1.msra.mxu0 0.0
    %4394 = vmatprep.subr.mxu0 0.0
    %4395 = vmatpush1.msra.mxu0 0.0
    %4396 = vmatprep.subr.mxu0 0.0
    %4397 = vmatpush1.msra.mxu0 0.0
    %4398 = vmatprep.subr.mxu0 0.0
    %4399 = vmatpush1.msra.mxu0 0.0
    %4400 = vmatprep.subr.mxu0 0.0
    %4401 = vmatpush1.msra.mxu0 0.0
    %4402 = vmatprep.subr.mxu0 0.0
    %4403 = vmatpush1.msra.mxu0 0.0
    %4404 = vmatprep.subr.mxu0 0.0
    %4405 = vmatpush1.msra.mxu0 0.0
    %4406 = vmatprep.subr.mxu0 0.0
    %4407 = vmatpush1.msra.mxu0 0.0
    %4408 = vmatprep.subr.mxu0 0.0
    %4409 = vmatpush1.msra.mxu0 0.0
    %4410 = vmatprep.subr.mxu0 0.0
    %4411 = vmatpush1.msra.mxu0 0.0
    %4412 = vmatprep.subr.mxu0 0.0
    %4413 = vmatpush1.msra.mxu0 0.0
    %4414 = vmatprep.subr.mxu0 0.0
    %4415 = vmatpush1.msra.mxu0 0.0
    %4416 = vmatprep.subr.mxu0 0.0
    %4417 = vmatpush1.msra.mxu0 0.0
    %4418 = vmatprep.subr.mxu0 0.0
    %4419 = vmatpush1.msra.mxu0 0.0
    %4420 = vmatprep.subr.mxu0 0.0
    %4421 = vmatpush1.msra.mxu0 0.0
    %4422 = vmatprep.subr.mxu0 0.0
    %4423 = vmatpush1.msra.mxu0 0.0
    %4424 = vmatprep.subr.mxu0 0.0
    %4425 = vmatpush1.msra.mxu0 0.0
    %4426 = vmatprep.subr.mxu0 0.0
    %4427 = vmatpush1.msra.mxu0 0.0
    %4428 = vmatprep.subr.mxu0 0.0
    %4429 = vmatpush1.msra.mxu0 0.0
    %4430 = vmatprep.subr.mxu0 0.0
    %4431 = vmatpush1.msra.mxu0 0.0
    %4432 = vmatprep.subr.mxu0 0.0
    %4433 = vmatpush1.msra.mxu0 0.0
    %4434 = vmatprep.subr.mxu0 0.0
    %4435 = vmatpush1.msra.mxu0 0.0
    %4436 = vmatprep.subr.mxu0 0.0
    %4437 = vmatpush1.msra.mxu0 0.0
    %4438 = vmatprep.subr.mxu0 0.0
    %4439 = vmatpush1.msra.mxu0 0.0
    %4440 = vmatprep.mubr.f32.mxu0 0.0
    %4441 = vmatmul.mubr.f32.gmra.mrb[0].mxu0 %v4303
    %v4442 = vpop.f32.mrb[0].mxu0
    %v4443 = vadd.f32 0.0, %v4442
    %v4444 = vpop.f32.mrb[0].mxu0
    %v4445 = vadd.f32 0.0, %v4444
    %4446 = vdwg.mxu0
    %v4447 = vlaneseq
    %v4448 = vshrl.u32 %v4447, 7
    %v4449 = vsub.s32 0, %v4448
    %v4450 = vrot.slane %v4372, %v4449
    %v4451 = vlaneseq
    %v4452 = vshrl.u32 %v4451, 7
    %v4453 = vsub.s32 0, %v4452
    %v4454 = vrot.slane %v4374, %v4453
    %v4455 = vlaneseq
    %v4456 = vshrl.u32 %v4455, 7
    %v4457 = vsub.s32 0, %v4456
    %v4458 = vrot.slane %v4443, %v4457
    %v4459 = vlaneseq
    %v4460 = vshrl.u32 %v4459, 7
    %v4461 = vsub.s32 0, %v4460
    %v4462 = vrot.slane %v4445, %v4461
    %v4463 = vadd.f32 %v4297, %v4450
    %v4464 = vadd.f32 %v4298, %v4454
    %v4465 = vadd.f32 %v4299, %v4458
    %v4466 = vadd.f32 %v4300, %v4462
    %v4467 = vld [vmem:[#allocation20] sm:$0xff]
    %v4468 = vld [vmem:[#allocation20 + $0x8] sm:$0xff]
    %v4469 = vld [vmem:[#allocation20 + $0x10] sm:$0xff]
    %v4470 = vld [vmem:[#allocation20 + $0x18] sm:$0xff]
    %v4471 = vld [vmem:[#allocation20 + $0x20] sm:$0xff]
    %v4472 = vld [vmem:[#allocation20 + $0x28] sm:$0xff]
    %v4473 = vld [vmem:[#allocation20 + $0x30] sm:$0xff]
    %v4474 = vld [vmem:[#allocation20 + $0x38] sm:$0xff]
    %v4475 = vld [vmem:[#allocation20 + $0x40] sm:$0xff]
    %v4476 = vld [vmem:[#allocation20 + $0x48] sm:$0xff]
    %v4477 = vld [vmem:[#allocation20 + $0x50] sm:$0xff]
    %v4478 = vld [vmem:[#allocation20 + $0x58] sm:$0xff]
    %v4479 = vld [vmem:[#allocation20 + $0x60] sm:$0xff]
    %v4480 = vld [vmem:[#allocation20 + $0x68] sm:$0xff]
    %v4481 = vld [vmem:[#allocation20 + $0x70] sm:$0xff]
    %v4482 = vld [vmem:[#allocation20 + $0x78] sm:$0xff]
    %v4483 = vld [vmem:[#allocation20 + $0x80] sm:$0xff]
    %v4484 = vld [vmem:[#allocation20 + $0x88] sm:$0xff]
    %v4485 = vld [vmem:[#allocation20 + $0x90] sm:$0xff]
    %v4486 = vld [vmem:[#allocation20 + $0x98] sm:$0xff]
    %v4487 = vld [vmem:[#allocation20 + $0xa0] sm:$0xff]
    %v4488 = vld [vmem:[#allocation20 + $0xa8] sm:$0xff]
    %v4489 = vld [vmem:[#allocation20 + $0xb0] sm:$0xff]
    %v4490 = vld [vmem:[#allocation20 + $0xb8] sm:$0xff]
    %v4491 = vld [vmem:[#allocation20 + $0xc0] sm:$0xff]
    %v4492 = vld [vmem:[#allocation20 + $0xc8] sm:$0xff]
    %v4493 = vld [vmem:[#allocation20 + $0xd0] sm:$0xff]
    %v4494 = vld [vmem:[#allocation20 + $0xd8] sm:$0xff]
    %v4495 = vld [vmem:[#allocation20 + $0xe0] sm:$0xff]
    %v4496 = vld [vmem:[#allocation20 + $0xe8] sm:$0xff]
    %v4497 = vld [vmem:[#allocation20 + $0xf0] sm:$0xff]
    %v4498 = vld [vmem:[#allocation20 + $0xf8] sm:$0xff]
    %v4499 = vld [vmem:[#allocation20 + $0x100] sm:$0xff]
    %v4500 = vld [vmem:[#allocation20 + $0x108] sm:$0xff]
    %v4501 = vld [vmem:[#allocation20 + $0x110] sm:$0xff]
    %v4502 = vld [vmem:[#allocation20 + $0x118] sm:$0xff]
    %v4503 = vld [vmem:[#allocation20 + $0x120] sm:$0xff]
    %v4504 = vld [vmem:[#allocation20 + $0x128] sm:$0xff]
    %v4505 = vld [vmem:[#allocation20 + $0x130] sm:$0xff]
    %v4506 = vld [vmem:[#allocation20 + $0x138] sm:$0xff]
    %v4507 = vld [vmem:[#allocation20 + $0x140] sm:$0xff]
    %v4508 = vld [vmem:[#allocation20 + $0x148] sm:$0xff]
    %v4509 = vld [vmem:[#allocation20 + $0x150] sm:$0xff]
    %v4510 = vld [vmem:[#allocation20 + $0x158] sm:$0xff]
    %v4511 = vld [vmem:[#allocation20 + $0x160] sm:$0xff]
    %v4512 = vld [vmem:[#allocation20 + $0x168] sm:$0xff]
    %v4513 = vld [vmem:[#allocation20 + $0x170] sm:$0xff]
    %v4514 = vld [vmem:[#allocation20 + $0x178] sm:$0xff]
    %v4515 = vld [vmem:[#allocation20 + $0x180] sm:$0xff]
    %v4516 = vld [vmem:[#allocation20 + $0x188] sm:$0xff]
    %v4517 = vld [vmem:[#allocation20 + $0x190] sm:$0xff]
    %v4518 = vld [vmem:[#allocation20 + $0x198] sm:$0xff]
    %v4519 = vld [vmem:[#allocation20 + $0x1a0] sm:$0xff]
    %v4520 = vld [vmem:[#allocation20 + $0x1a8] sm:$0xff]
    %v4521 = vld [vmem:[#allocation20 + $0x1b0] sm:$0xff]
    %v4522 = vld [vmem:[#allocation20 + $0x1b8] sm:$0xff]
    %v4523 = vld [vmem:[#allocation20 + $0x1c0] sm:$0xff]
    %v4524 = vld [vmem:[#allocation20 + $0x1c8] sm:$0xff]
    %v4525 = vld [vmem:[#allocation20 + $0x1d0] sm:$0xff]
    %v4526 = vld [vmem:[#allocation20 + $0x1d8] sm:$0xff]
    %v4527 = vld [vmem:[#allocation20 + $0x1e0] sm:$0xff]
    %v4528 = vld [vmem:[#allocation20 + $0x1e8] sm:$0xff]
    %v4529 = vld [vmem:[#allocation20 + $0x1f0] sm:$0xff]
    %v4530 = vld [vmem:[#allocation20 + $0x1f8] sm:$0xff]
    %v4531 = vpack.c.bf16 %v4463, %v4463
    %v4532 = vpack.c.bf16 %v4464, %v4464
    %v4533 = vpack.c.bf16 %v4465, %v4465
    %v4534 = vpack.c.bf16 %v4466, %v4466
    %v4535 = vld [vmem:[%s55] sm:$0x3]
    %v4537 = vlaneseq
    %v4538 = vshrl.u32 %v4537, 7
    %v4539 = vsub.s32 0, %v4538
    %v4540 = vrot.slane %v4535, %v4539
    %v4541 = vlaneseq
    %v4542 = vshrl.u32 %v4541, 7
    %v4543 = vsub.s32 1, %v4542
    %v4544 = vrot.slane %v4535, %v4543
    %v4611 = vunpack.c.l.b16 %v4467
    %v4612 = vunpack.c.h.b16 %v4467
    %v4613 = vunpack.c.l.b16 %v4468
    %v4614 = vunpack.c.h.b16 %v4468
    %v4615 = vunpack.c.l.b16 %v4469
    %v4616 = vunpack.c.h.b16 %v4469
    %v4617 = vunpack.c.l.b16 %v4470
    %v4618 = vunpack.c.h.b16 %v4470
    %v4619 = vunpack.c.l.b16 %v4471
    %v4620 = vunpack.c.h.b16 %v4471
    %v4621 = vunpack.c.l.b16 %v4472
    %v4622 = vunpack.c.h.b16 %v4472
    %v4623 = vunpack.c.l.b16 %v4473
    %v4624 = vunpack.c.h.b16 %v4473
    %v4625 = vunpack.c.l.b16 %v4474
    %v4626 = vunpack.c.h.b16 %v4474
    %v4627 = vunpack.c.l.b16 %v4475
    %v4628 = vunpack.c.h.b16 %v4475
    %v4629 = vunpack.c.l.b16 %v4476
    %v4630 = vunpack.c.h.b16 %v4476
    %v4631 = vunpack.c.l.b16 %v4477
    %v4632 = vunpack.c.h.b16 %v4477
    %v4633 = vunpack.c.l.b16 %v4478
    %v4634 = vunpack.c.h.b16 %v4478
    %v4635 = vunpack.c.l.b16 %v4479
    %v4636 = vunpack.c.h.b16 %v4479
    %v4637 = vunpack.c.l.b16 %v4480
    %v4638 = vunpack.c.h.b16 %v4480
    %v4639 = vunpack.c.l.b16 %v4481
    %v4640 = vunpack.c.h.b16 %v4481
    %v4641 = vunpack.c.l.b16 %v4482
    %v4642 = vunpack.c.h.b16 %v4482
    %v4643 = vunpack.c.l.b16 %v4483
    %v4644 = vunpack.c.h.b16 %v4483
    %v4645 = vunpack.c.l.b16 %v4484
    %v4646 = vunpack.c.h.b16 %v4484
    %v4647 = vunpack.c.l.b16 %v4485
    %v4648 = vunpack.c.h.b16 %v4485
    %v4649 = vunpack.c.l.b16 %v4486
    %v4650 = vunpack.c.h.b16 %v4486
    %v4651 = vunpack.c.l.b16 %v4487
    %v4652 = vunpack.c.h.b16 %v4487
    %v4653 = vunpack.c.l.b16 %v4488
    %v4654 = vunpack.c.h.b16 %v4488
    %v4655 = vunpack.c.l.b16 %v4489
    %v4656 = vunpack.c.h.b16 %v4489
    %v4657 = vunpack.c.l.b16 %v4490
    %v4658 = vunpack.c.h.b16 %v4490
    %v4659 = vunpack.c.l.b16 %v4491
    %v4660 = vunpack.c.h.b16 %v4491
    %v4661 = vunpack.c.l.b16 %v4492
    %v4662 = vunpack.c.h.b16 %v4492
    %v4663 = vunpack.c.l.b16 %v4493
    %v4664 = vunpack.c.h.b16 %v4493
    %v4665 = vunpack.c.l.b16 %v4494
    %v4666 = vunpack.c.h.b16 %v4494
    %v4667 = vunpack.c.l.b16 %v4495
    %v4668 = vunpack.c.h.b16 %v4495
    %v4669 = vunpack.c.l.b16 %v4496
    %v4670 = vunpack.c.h.b16 %v4496
    %v4671 = vunpack.c.l.b16 %v4497
    %v4672 = vunpack.c.h.b16 %v4497
    %v4673 = vunpack.c.l.b16 %v4498
    %v4674 = vunpack.c.h.b16 %v4498
    %v4675 = vunpack.c.l.b16 %v4499
    %v4676 = vunpack.c.h.b16 %v4499
    %v4677 = vunpack.c.l.b16 %v4500
    %v4678 = vunpack.c.h.b16 %v4500
    %v4679 = vunpack.c.l.b16 %v4501
    %v4680 = vunpack.c.h.b16 %v4501
    %v4681 = vunpack.c.l.b16 %v4502
    %v4682 = vunpack.c.h.b16 %v4502
    %v4683 = vunpack.c.l.b16 %v4503
    %v4684 = vunpack.c.h.b16 %v4503
    %v4685 = vunpack.c.l.b16 %v4504
    %v4686 = vunpack.c.h.b16 %v4504
    %v4687 = vunpack.c.l.b16 %v4505
    %v4688 = vunpack.c.h.b16 %v4505
    %v4689 = vunpack.c.l.b16 %v4506
    %v4690 = vunpack.c.h.b16 %v4506
    %v4691 = vunpack.c.l.b16 %v4507
    %v4692 = vunpack.c.h.b16 %v4507
    %v4693 = vunpack.c.l.b16 %v4508
    %v4694 = vunpack.c.h.b16 %v4508
    %v4695 = vunpack.c.l.b16 %v4509
    %v4696 = vunpack.c.h.b16 %v4509
    %v4697 = vunpack.c.l.b16 %v4510
    %v4698 = vunpack.c.h.b16 %v4510
    %v4699 = vunpack.c.l.b16 %v4511
    %v4700 = vunpack.c.h.b16 %v4511
    %v4701 = vunpack.c.l.b16 %v4512
    %v4702 = vunpack.c.h.b16 %v4512
    %v4703 = vunpack.c.l.b16 %v4513
    %v4704 = vunpack.c.h.b16 %v4513
    %v4705 = vunpack.c.l.b16 %v4514
    %v4706 = vunpack.c.h.b16 %v4514
    %v4707 = vunpack.c.l.b16 %v4515
    %v4708 = vunpack.c.h.b16 %v4515
    %v4709 = vunpack.c.l.b16 %v4516
    %v4710 = vunpack.c.h.b16 %v4516
    %v4711 = vunpack.c.l.b16 %v4517
    %v4712 = vunpack.c.h.b16 %v4517
    %v4713 = vunpack.c.l.b16 %v4518
    %v4714 = vunpack.c.h.b16 %v4518
    %v4715 = vunpack.c.l.b16 %v4519
    %v4716 = vunpack.c.h.b16 %v4519
    %v4717 = vunpack.c.l.b16 %v4520
    %v4718 = vunpack.c.h.b16 %v4520
    %v4719 = vunpack.c.l.b16 %v4521
    %v4720 = vunpack.c.h.b16 %v4521
    %v4721 = vunpack.c.l.b16 %v4522
    %v4722 = vunpack.c.h.b16 %v4522
    %v4723 = vunpack.c.l.b16 %v4523
    %v4724 = vunpack.c.h.b16 %v4523
    %v4725 = vunpack.c.l.b16 %v4524
    %v4726 = vunpack.c.h.b16 %v4524
    %v4727 = vunpack.c.l.b16 %v4525
    %v4728 = vunpack.c.h.b16 %v4525
    %v4729 = vunpack.c.l.b16 %v4526
    %v4730 = vunpack.c.h.b16 %v4526
    %v4731 = vunpack.c.l.b16 %v4527
    %v4732 = vunpack.c.h.b16 %v4527
    %v4733 = vunpack.c.l.b16 %v4528
    %v4734 = vunpack.c.h.b16 %v4528
    %v4735 = vunpack.c.l.b16 %v4529
    %v4736 = vunpack.c.h.b16 %v4529
    %v4737 = vunpack.c.l.b16 %v4530
    %v4738 = vunpack.c.h.b16 %v4530
    %v4739 = vpack.c.b16 %v4613, %v4611
    %v4740 = vpack.c.b16 %v4614, %v4612
    %v4741 = vpack.c.b16 %v4617, %v4615
    %v4742 = vpack.c.b16 %v4618, %v4616
    %v4743 = vpack.c.b16 %v4621, %v4619
    %v4744 = vpack.c.b16 %v4622, %v4620
    %v4745 = vpack.c.b16 %v4625, %v4623
    %v4746 = vpack.c.b16 %v4626, %v4624
    %v4747 = vpack.c.b16 %v4629, %v4627
    %v4748 = vpack.c.b16 %v4630, %v4628
    %v4749 = vpack.c.b16 %v4633, %v4631
    %v4750 = vpack.c.b16 %v4634, %v4632
    %v4751 = vpack.c.b16 %v4637, %v4635
    %v4752 = vpack.c.b16 %v4638, %v4636
    %v4753 = vpack.c.b16 %v4641, %v4639
    %v4754 = vpack.c.b16 %v4642, %v4640
    %v4755 = vpack.c.b16 %v4645, %v4643
    %v4756 = vpack.c.b16 %v4646, %v4644
    %v4757 = vpack.c.b16 %v4649, %v4647
    %v4758 = vpack.c.b16 %v4650, %v4648
    %v4759 = vpack.c.b16 %v4653, %v4651
    %v4760 = vpack.c.b16 %v4654, %v4652
    %v4761 = vpack.c.b16 %v4657, %v4655
    %v4762 = vpack.c.b16 %v4658, %v4656
    %v4763 = vpack.c.b16 %v4661, %v4659
    %v4764 = vpack.c.b16 %v4662, %v4660
    %v4765 = vpack.c.b16 %v4665, %v4663
    %v4766 = vpack.c.b16 %v4666, %v4664
    %v4767 = vpack.c.b16 %v4669, %v4667
    %v4768 = vpack.c.b16 %v4670, %v4668
    %v4769 = vpack.c.b16 %v4673, %v4671
    %v4770 = vpack.c.b16 %v4674, %v4672
    %v4771 = vpack.c.b16 %v4677, %v4675
    %v4772 = vpack.c.b16 %v4678, %v4676
    %v4773 = vpack.c.b16 %v4681, %v4679
    %v4774 = vpack.c.b16 %v4682, %v4680
    %v4775 = vpack.c.b16 %v4685, %v4683
    %v4776 = vpack.c.b16 %v4686, %v4684
    %v4777 = vpack.c.b16 %v4689, %v4687
    %v4778 = vpack.c.b16 %v4690, %v4688
    %v4779 = vpack.c.b16 %v4693, %v4691
    %v4780 = vpack.c.b16 %v4694, %v4692
    %v4781 = vpack.c.b16 %v4697, %v4695
    %v4782 = vpack.c.b16 %v4698, %v4696
    %v4783 = vpack.c.b16 %v4701, %v4699
    %v4784 = vpack.c.b16 %v4702, %v4700
    %v4785 = vpack.c.b16 %v4705, %v4703
    %v4786 = vpack.c.b16 %v4706, %v4704
    %v4787 = vpack.c.b16 %v4709, %v4707
    %v4788 = vpack.c.b16 %v4710, %v4708
    %v4789 = vpack.c.b16 %v4713, %v4711
    %v4790 = vpack.c.b16 %v4714, %v4712
    %v4791 = vpack.c.b16 %v4717, %v4715
    %v4792 = vpack.c.b16 %v4718, %v4716
    %v4793 = vpack.c.b16 %v4721, %v4719
    %v4794 = vpack.c.b16 %v4722, %v4720
    %v4795 = vpack.c.b16 %v4725, %v4723
    %v4796 = vpack.c.b16 %v4726, %v4724
    %v4797 = vpack.c.b16 %v4729, %v4727
    %v4798 = vpack.c.b16 %v4730, %v4728
    %v4799 = vpack.c.b16 %v4733, %v4731
    %v4800 = vpack.c.b16 %v4734, %v4732
    %v4801 = vpack.c.b16 %v4737, %v4735
    %v4802 = vpack.c.b16 %v4738, %v4736
    %4867 = vmatprep.subr.bf16.mxu0 %v4740
    %4868 = vmatpush1.bf16.msra.mxu0 %v4739
    %4869 = vmatprep.subr.bf16.mxu0 %v4742
    %4870 = vmatpush1.bf16.msra.mxu0 %v4741
    %4871 = vmatprep.subr.bf16.mxu0 %v4744
    %4872 = vmatpush1.bf16.msra.mxu0 %v4743
    %4873 = vmatprep.subr.bf16.mxu0 %v4746
    %4874 = vmatpush1.bf16.msra.mxu0 %v4745
    %4875 = vmatprep.subr.bf16.mxu0 %v4748
    %4876 = vmatpush1.bf16.msra.mxu0 %v4747
    %4877 = vmatprep.subr.bf16.mxu0 %v4750
    %4878 = vmatpush1.bf16.msra.mxu0 %v4749
    %4879 = vmatprep.subr.bf16.mxu0 %v4752
    %4880 = vmatpush1.bf16.msra.mxu0 %v4751
    %4881 = vmatprep.subr.bf16.mxu0 %v4754
    %4882 = vmatpush1.bf16.msra.mxu0 %v4753
    %4883 = vmatprep.subr.bf16.mxu0 %v4756
    %4884 = vmatpush1.bf16.msra.mxu0 %v4755
    %4885 = vmatprep.subr.bf16.mxu0 %v4758
    %4886 = vmatpush1.bf16.msra.mxu0 %v4757
    %4887 = vmatprep.subr.bf16.mxu0 %v4760
    %4888 = vmatpush1.bf16.msra.mxu0 %v4759
    %4889 = vmatprep.subr.bf16.mxu0 %v4762
    %4890 = vmatpush1.bf16.msra.mxu0 %v4761
    %4891 = vmatprep.subr.bf16.mxu0 %v4764
    %4892 = vmatpush1.bf16.msra.mxu0 %v4763
    %4893 = vmatprep.subr.bf16.mxu0 %v4766
    %4894 = vmatpush1.bf16.msra.mxu0 %v4765
    %4895 = vmatprep.subr.bf16.mxu0 %v4768
    %4896 = vmatpush1.bf16.msra.mxu0 %v4767
    %4897 = vmatprep.subr.bf16.mxu0 %v4770
    %4898 = vmatpush1.bf16.msra.mxu0 %v4769
    %4899 = vmatprep.mubr.bf16.mxu0 %v4532
    %4900 = vmatmul.mubr.bf16.gmra.mrb[0].mxu0 %v4531
    %v4901 = vpop.f32.mrb[0].mxu0
    %v4902 = vadd.f32 %v4540, %v4901
    %v4903 = vpop.f32.mrb[0].mxu0
    %v4904 = vadd.f32 %v4544, %v4903
    %v4905 = vpop.f32.mrb[0].mxu0
    %v4906 = vpop.f32.mrb[0].mxu0
    %4907 = vdwg.mxu0
    %4908 = vmatprep.subr.bf16.mxu0 %v4772
    %4909 = vmatpush1.bf16.msra.mxu0 %v4771
    %4910 = vmatprep.subr.bf16.mxu0 %v4774
    %4911 = vmatpush1.bf16.msra.mxu0 %v4773
    %4912 = vmatprep.subr.bf16.mxu0 %v4776
    %4913 = vmatpush1.bf16.msra.mxu0 %v4775
    %4914 = vmatprep.subr.bf16.mxu0 %v4778
    %4915 = vmatpush1.bf16.msra.mxu0 %v4777
    %4916 = vmatprep.subr.bf16.mxu0 %v4780
    %4917 = vmatpush1.bf16.msra.mxu0 %v4779
    %4918 = vmatprep.subr.bf16.mxu0 %v4782
    %4919 = vmatpush1.bf16.msra.mxu0 %v4781
    %4920 = vmatprep.subr.bf16.mxu0 %v4784
    %4921 = vmatpush1.bf16.msra.mxu0 %v4783
    %4922 = vmatprep.subr.bf16.mxu0 %v4786
    %4923 = vmatpush1.bf16.msra.mxu0 %v4785
    %4924 = vmatprep.subr.bf16.mxu0 %v4788
    %4925 = vmatpush1.bf16.msra.mxu0 %v4787
    %4926 = vmatprep.subr.bf16.mxu0 %v4790
    %4927 = vmatpush1.bf16.msra.mxu0 %v4789
    %4928 = vmatprep.subr.bf16.mxu0 %v4792
    %4929 = vmatpush1.bf16.msra.mxu0 %v4791
    %4930 = vmatprep.subr.bf16.mxu0 %v4794
    %4931 = vmatpush1.bf16.msra.mxu0 %v4793
    %4932 = vmatprep.subr.bf16.mxu0 %v4796
    %4933 = vmatpush1.bf16.msra.mxu0 %v4795
    %4934 = vmatprep.subr.bf16.mxu0 %v4798
    %4935 = vmatpush1.bf16.msra.mxu0 %v4797
    %4936 = vmatprep.subr.bf16.mxu0 %v4800
    %4937 = vmatpush1.bf16.msra.mxu0 %v4799
    %4938 = vmatprep.subr.bf16.mxu0 %v4802
    %4939 = vmatpush1.bf16.msra.mxu0 %v4801
    %4940 = vmatprep.mubr.bf16.mxu0 %v4534
    %4941 = vmatmul.mubr.bf16.gmra.mrb[0].mxu0 %v4533
    %v4942 = vpop.f32.mrb[0].mxu0
    %v4943 = vadd.f32 %v4902, %v4942
    %v4944 = vpop.f32.mrb[0].mxu0
    %v4945 = vadd.f32 %v4904, %v4944
    %v4946 = vpop.f32.mrb[0].mxu0
    %v4947 = vpop.f32.mrb[0].mxu0
    %4948 = vdwg.mxu0
    %v4951 = vcombine.low %v4943, %v4945
    %v4953 = vunpack.c.l.s4 1983009808
    %v4954 = vunpack.c.0.s8 %v4953
    %v4955 = vlaneseq
    %v4956 = vshrl.u32 %v4955, 7
    %v4957 = vsub.s32 %v4954, %v4956
    %v4958 = vrot.slane %v4951, %v4957
    %4960 = vst [vmem:[#allocation22] sm:$0xf] %v4958
    %vm4961 = vcmask 58368
    %4962 = vst.msk [vmem:[#allocation23] sm:$0x3] %vm4961, %v2807
    %4963 = vst.msk [vmem:[#allocation25] sm:$0x3] %vm4961, %v2982
    // Predicated region
    $region162: #{tpu_custom_call.1} parent=1 // pred_check
      _
    $region163: #{tpu_custom_call.1} parent=1 // pred_check_branch
      %4965 = sbr.rel (0) target = $region165
    $region164: #{tpu_custom_call.1} parent=1 // pred_region
      %s4967 = ssub.s32 64, 64
      %4968 = vsyncadd [#allocation4], %s4967
      %s4970 = sshll.u32 [#allocation22], 4
      %s4971 = int_to_ptr.vmem [resolvable:$true] %s4970
      %4973 = dma.vmem_to_hbm [thread:$0]  %s4971, 64, %s57, [#allocation4]
    $region165: #{tpu_custom_call.1} parent=1 // pred_fallthru
      _
    // Predicated region
    $region166: #{tpu_custom_call.1} parent=1 // pred_check
      _
    $region167: #{tpu_custom_call.1} parent=1 // pred_check_branch
      %4975 = sbr.rel (0) target = $region169
    $region168: #{tpu_custom_call.1} parent=1 // pred_region
      %s4977 = ssub.s32 32, 32
      %4978 = vsyncadd [#allocation24], %s4977
      %s4980 = sshll.u32 [#allocation23], 4
      %s4981 = int_to_ptr.vmem [resolvable:$true] %s4980
      %4983 = dma.vmem_to_hbm [thread:$0]  %s4981, 32, %s59, [#allocation24]
    $region169: #{tpu_custom_call.1} parent=1 // pred_fallthru
      _
    // Predicated region
    $region170: #{tpu_custom_call.1} parent=1 // pred_check
      _
    $region171: #{tpu_custom_call.1} parent=1 // pred_check_branch
      %4985 = sbr.rel (0) target = $region173
    $region172: #{tpu_custom_call.1} parent=1 // pred_region
      %s4987 = ssub.s32 32, 32
      %4988 = vsyncadd [#allocation24], %s4987
      %s4990 = sshll.u32 [#allocation25], 4
      %s4991 = int_to_ptr.vmem [resolvable:$true] %s4990
      %4993 = dma.vmem_to_hbm [thread:$0]  %s4991, 32, %s61, [#allocation24]
    $region173: #{tpu_custom_call.1} parent=1 // pred_fallthru
      _
    // Predicated region
    $region174: #{tpu_custom_call.1} parent=1 // pred_check
      _
    $region175: #{tpu_custom_call.1} parent=1 // pred_check_branch
      %4995 = sbr.rel (0) target = $region177
    $region176: #{tpu_custom_call.1} parent=1 // pred_region
      %4996 = dma.done [#allocation4], 64
    $region177: #{tpu_custom_call.1} parent=1 // pred_fallthru
      _
    // Predicated region
    $region178: #{tpu_custom_call.1} parent=1 // pred_check
      _
    $region179: #{tpu_custom_call.1} parent=1 // pred_check_branch
      %4998 = sbr.rel (0) target = $region181
    $region180: #{tpu_custom_call.1} parent=1 // pred_region
      %4999 = dma.done [#allocation24], 32
    $region181: #{tpu_custom_call.1} parent=1 // pred_fallthru
      _
    // Predicated region
    $region182: #{tpu_custom_call.1} parent=1 // pred_check
      _
    $region183: #{tpu_custom_call.1} parent=1 // pred_check_branch
      %5001 = sbr.rel (0) target = $region185
    $region184: #{tpu_custom_call.1} parent=1 // pred_region
      %5002 = dma.done [#allocation24], 32
    $region185: #{tpu_custom_call.1} parent=1 // pred_fallthru
      _
    %5003 = vsyncpa [#allocation3], 1
    %5004 = vsyncpa [#allocation6], 1
    %5005 = vsyncpa [#allocation9], 1
    %5006 = vsyncpa [#allocation12], 1
    %5007 = vsyncpa [#allocation15], 1
    %5008 = vsyncpa [#allocation18], 1
    %5009 = vsyncpa [#allocation21], 1
    %5010 = vsyncpa [#allocation4], 1
    %5011 = vsyncpa [#allocation24], 1

</llo_original>
